<compile_context>
chip_gen: v7x
topology: tpu7x:2x2x1
jax: 0.10.0
libtpu: 0.0.40
codegen_flags: <defaults>
</compile_context>

<pallas_src>
import jax
import jax.numpy as jnp
from jax.experimental import pallas as pl
from jax.experimental.pallas import tpu as pltpu


def _round_up(x, m):
    return (x + m - 1) // m * m


def _physical_vmem_bytes():
    """Generation-aware physical VMEM; conservative fallback (v7x floor)."""
    try:
        return int(pltpu.get_tpu_info().vmem_capacity_bytes)
    except Exception:
        return 64 * 1024 * 1024


def _make_conv_bn_relu_kernel(B_blk, C, KH, KW, Ws, L, out_cols):
    """One grid step = B_blk images.

    x_ref     : (B_blk, C, L + KW - 1)  rows flattened with stride Ws (lane axis),
                                        KW-1 zero tail columns
    w_ref     : (KH, OC_p, KW*C)        per-kh weight matrices, columns ordered (kw, c)
    scale_ref : (OC_p, 1)  f32          BN scale  = gamma / sqrt(var + eps)
    shift_ref : (OC_p, 1)  f32          BN shift  = beta - mean * scale
    o_ref     : (B_blk, OC_p, out_cols) out_cols = OH*Ws (lane-dense)
    xkw_ref   : (KW*C, L)               kw-shifted copies, stacked on sublanes
    acc_ref   : (OC_p, out_cols) f32    accumulator
    """

    def kernel(x_ref, w_ref, scale_ref, shift_ref, o_ref, xkw_ref, acc_ref):
        for b in range(B_blk):                       # static unroll over the image block
            x = x_ref[b]                             # (C, L + KW - 1), read once
            # Hoisted kw lane-shifts: only KW-1 cross-lane passes per image
            # (kw = 0 is an aligned copy).  Shifted-in tail zeros only ever land
            # in cropped output columns.
            for kw in range(KW):
                xkw_ref[kw * C:(kw + 1) * C, :] = x[:, kw:kw + L]
            # KH matmuls, contraction K = KW*C; RHS slices start at kh*Ws which
            # is 128-aligned, so these are pure aligned loads.
            for kh in range(KH):
                rhs = xkw_ref[:, kh * Ws:kh * Ws + out_cols]      # (KW*C, OH*Ws)
                part = jnp.dot(w_ref[kh], rhs,
                               preferred_element_type=jnp.float32)
                if kh == 0:
                    acc_ref[...] = part
                else:
                    acc_ref[...] += part             # v7x: MRB in-place accumulate
            # f32 BatchNorm epilogue + ReLU, then cast and lane-dense store.
            y = acc_ref[...] * scale_ref[...] + shift_ref[...]
            o_ref[b] = jnp.maximum(y, 0.0).astype(o_ref.dtype)

    return kernel


def conv_module_forward(x, weight, gamma, beta, running_mean, running_var,
                        eps=1e-5, compute_dtype=jnp.float32, out_dtype=None,
                        block_budget_bytes=None):
    """x: (N, C, H, W) NCHW (like PyTorch).  weight: (OC, C, KH, KW).

    compute_dtype=bfloat16 halves input DMA bytes on v5e/v6e/v7x (accumulation
    stays f32, BN stays in the f32 epilogue); out_dtype=bfloat16 halves output
    writeback when the consumer takes bf16.
    """
    N, C, H, W = x.shape
    OC, C_w, KH, KW = weight.shape
    assert C_w == C
    OH, OW = H - KH + 1, W - KW + 1          # stride 1, padding 0 (nn.Conv2d defaults)
    out_dtype = x.dtype if out_dtype is None else out_dtype

    Ws = _round_up(W, 128)                   # row stride: kh*Ws lane offsets 128-aligned
    L = H * Ws                               # flattened image length (lane axis)
    Lp = L + KW - 1                          # + zero tail so kw slices stay in bounds
    out_cols = OH * Ws                       # full-width rows; cols >= OW cropped after
    OC_p = _round_up(OC, 8)                  # OC lives on sublanes

    in_bytes = jnp.dtype(compute_dtype).itemsize
    out_bytes = jnp.dtype(out_dtype).itemsize

    # ---- BatchNorm (inference) as an f32 epilogue (not folded into weights) ----
    scale = gamma / jnp.sqrt(running_var + eps)                  # (OC,)
    shift = beta - running_mean * scale                          # (OC,)
    scale_col = jnp.pad(scale.reshape(OC, 1), ((0, OC_p - OC), (0, 0))).astype(jnp.float32)
    shift_col = jnp.pad(shift.reshape(OC, 1), ((0, OC_p - OC), (0, 0))).astype(jnp.float32)

    # ---- weights: (OC, C, KH, KW) -> (KH, OC_p, KW*C), columns ordered (kw, c) ----
    w_kh = jnp.transpose(weight, (2, 0, 3, 1)).reshape(KH, OC, KW * C)
    w_kh = jnp.pad(w_kh, ((0, 0), (0, OC_p - OC), (0, 0))).astype(compute_dtype)

    # ---- activations: each row zero-padded to stride Ws, rows flattened onto lanes ----
    x_flat = jnp.pad(x, ((0, 0), (0, 0), (0, 0), (0, Ws - W))).reshape(N, C, L)
    x_flat = jnp.pad(x_flat, ((0, 0), (0, 0), (0, KW - 1))).astype(compute_dtype)

    # ---- images per grid step: amortize per-step overhead, stay in VMEM budget ----
    per_img = 2 * (C * Lp * in_bytes) + 2 * (OC_p * out_cols * out_bytes)  # double-buffered
    if block_budget_bytes is None:
        block_budget_bytes = max(4 * 1024 * 1024, _physical_vmem_bytes() // 8)
    B_blk = 1
    for b in range(1, N + 1):
        if N % b == 0 and b <= 8 and b * per_img <= block_budget_bytes:
            B_blk = b

    w_bytes = KH * OC_p * KW * C * in_bytes
    scratch_bytes = KW * C * L * in_bytes + OC_p * out_cols * 4
    needed = B_blk * per_img + 2 * w_bytes + scratch_bytes + (1 << 20)
    vmem_limit = int(min(_physical_vmem_bytes() * 9 // 10,
                         max(needed, 32 * 1024 * 1024)))

    kernel = _make_conv_bn_relu_kernel(B_blk, C, KH, KW, Ws, L, out_cols)

    out = pl.pallas_call(
        kernel,
        out_shape=jax.ShapeDtypeStruct((N, OC_p, out_cols), out_dtype),
        grid=(N // B_blk,),
        in_specs=[
            pl.BlockSpec((B_blk, C, Lp), lambda n: (n, 0, 0)),          # image block
            pl.BlockSpec((KH, OC_p, KW * C), lambda n: (0, 0, 0)),      # resident weights
            pl.BlockSpec((OC_p, 1), lambda n: (0, 0)),                  # resident BN scale
            pl.BlockSpec((OC_p, 1), lambda n: (0, 0)),                  # resident BN shift
        ],
        out_specs=pl.BlockSpec((B_blk, OC_p, out_cols), lambda n: (n, 0, 0)),
        scratch_shapes=[
            pltpu.VMEM((KW * C, L), compute_dtype),                     # kw-stacked image
            pltpu.VMEM((OC_p, out_cols), jnp.float32),                  # f32 accumulator
        ],
        compiler_params=pltpu.CompilerParams(
            dimension_semantics=("parallel",),
            vmem_limit_bytes=vmem_limit,
        ),
    )(x_flat, w_kh, scale_col, shift_col)

    # (N, OC_p, OH*Ws) -> NCHW: free reshape + one slice.  :OC is a no-op when
    # OC % 8 == 0; a fused consumer could read the padded layout directly and
    # skip this extra HBM pass entirely.
    return out.reshape(N, OC_p, OH, Ws)[:, :OC, :, :OW]


def reference_forward(x, weight, gamma, beta, running_mean, running_var, eps=1e-5):
    y = jax.lax.conv_general_dilated(
        x, weight, window_strides=(1, 1), padding="VALID",
        dimension_numbers=("NCHW", "OIHW", "NCHW"))
    scale = (gamma / jnp.sqrt(running_var + eps)).reshape(1, -1, 1, 1)
    shift = (beta - running_mean * gamma / jnp.sqrt(running_var + eps)).reshape(1, -1, 1, 1)
    return jnp.maximum(y * scale + shift, 0.0)


if __name__ == "__main__":
    key = jax.random.PRNGKey(0)
    k_x, k_w, k_g, k_b, k_m, k_v = jax.random.split(key, 6)

    # small shapes consistent with the module
    N, C_in, H, W = 2, 4, 16, 16
    C_out, KH, KW = 8, 3, 3

    x = jax.random.normal(k_x, (N, C_in, H, W), dtype=jnp.float32)
    weight = jax.random.normal(k_w, (C_out, C_in, KH, KW), dtype=jnp.float32) * 0.1
    gamma = jax.random.normal(k_g, (C_out,), dtype=jnp.float32) * 0.1 + 1.0
    beta = jax.random.normal(k_b, (C_out,), dtype=jnp.float32) * 0.1
    running_mean = jax.random.normal(k_m, (C_out,), dtype=jnp.float32) * 0.1
    running_var = jax.random.uniform(k_v, (C_out,), dtype=jnp.float32, minval=0.5, maxval=1.5)

    out = conv_module_forward(x, weight, gamma, beta, running_mean, running_var)
    out = jax.block_until_ready(out)

    ref = reference_forward(x, weight, gamma, beta, running_mean, running_var)
    assert out.shape == (N, C_out, H - KH + 1, W - KW + 1), out.shape
    assert jnp.allclose(out, ref, rtol=1e-4, atol=1e-4), "mismatch vs reference"

    print("KERNEL_OK")
</pallas_src>

<mosaic_0001>
module attributes {stable_mosaic.version = 11 : i64} {
  func.func @kernel(%arg0: i32, %arg1: memref<2x4x2050xf32, #tpu.memory_space<vmem>>, %arg2: memref<3x8x12xf32, #tpu.memory_space<vmem>>, %arg3: memref<8x1xf32, #tpu.memory_space<vmem>>, %arg4: memref<8x1xf32, #tpu.memory_space<vmem>>, %arg5: memref<2x8x1792xf32, #tpu.memory_space<vmem>>, %arg6: memref<12x2048xf32, #tpu.memory_space<vmem>>, %arg7: memref<8x1792xf32, #tpu.memory_space<vmem>>) attributes {dimension_semantics = [#tpu.dimension_semantics<parallel>], iteration_bounds = array<i64: 1>, scalar_prefetch = 0 : i64, scratch_operands = 2 : i64, tpu.core_type = #tpu.core_type<tc>, window_params = [{transform_indices = @transform_0, window_bounds = array<i64: 2, 4, 2050>}, {pipeline_mode = #tpu.pipeline_mode<synchronous>, transform_indices = @transform_1, window_bounds = array<i64: 3, 8, 12>}, {pipeline_mode = #tpu.pipeline_mode<synchronous>, transform_indices = @transform_2, window_bounds = array<i64: 8, 1>}, {pipeline_mode = #tpu.pipeline_mode<synchronous>, transform_indices = @transform_3, window_bounds = array<i64: 8, 1>}, {transform_indices = @transform_4, window_bounds = array<i64: 2, 8, 1792>}]} {
    %c0 = arith.constant 0 : index
    %c0_0 = arith.constant 0 : index
    %c0_1 = arith.constant 0 : index
    %0 = vector.load %arg1[%c0, %c0_0, %c0_1] : memref<2x4x2050xf32, #tpu.memory_space<vmem>>, vector<1x4x2050xf32>
    %1 = vector.shape_cast %0 : vector<1x4x2050xf32> to vector<4x2050xf32>
    %2 = vector.extract_strided_slice %1 {offsets = [0, 0], sizes = [4, 2048], strides = [1, 1]} : vector<4x2050xf32> to vector<4x2048xf32>
    %c0_2 = arith.constant 0 : index
    %c0_3 = arith.constant 0 : index
    %3 = vector.load %arg6[%c0_2, %c0_3] : memref<12x2048xf32, #tpu.memory_space<vmem>>, vector<4x2048xf32>
    tpu.vector_store %arg6[%c0_2, %c0_3], %2 {strides = array<i32>} : memref<12x2048xf32, #tpu.memory_space<vmem>>, vector<4x2048xf32>,
    %4 = vector.extract_strided_slice %1 {offsets = [0, 1], sizes = [4, 2048], strides = [1, 1]} : vector<4x2050xf32> to vector<4x2048xf32>
    %c4 = arith.constant 4 : index
    %c0_4 = arith.constant 0 : index
    %5 = vector.load %arg6[%c4, %c0_4] : memref<12x2048xf32, #tpu.memory_space<vmem>>, vector<4x2048xf32>
    tpu.vector_store %arg6[%c4, %c0_4], %4 {strides = array<i32>} : memref<12x2048xf32, #tpu.memory_space<vmem>>, vector<4x2048xf32>,
    %6 = vector.extract_strided_slice %1 {offsets = [0, 2], sizes = [4, 2048], strides = [1, 1]} : vector<4x2050xf32> to vector<4x2048xf32>
    %c8 = arith.constant 8 : index
    %c0_5 = arith.constant 0 : index
    %7 = vector.load %arg6[%c8, %c0_5] : memref<12x2048xf32, #tpu.memory_space<vmem>>, vector<4x2048xf32>
    tpu.vector_store %arg6[%c8, %c0_5], %6 {strides = array<i32>} : memref<12x2048xf32, #tpu.memory_space<vmem>>, vector<4x2048xf32>,
    %c0_6 = arith.constant 0 : index
    %c0_7 = arith.constant 0 : index
    %8 = vector.load %arg6[%c0_6, %c0_7] : memref<12x2048xf32, #tpu.memory_space<vmem>>, vector<12x1792xf32>
    %c0_8 = arith.constant 0 : index
    %c0_9 = arith.constant 0 : index
    %c0_10 = arith.constant 0 : index
    %9 = vector.load %arg2[%c0_8, %c0_9, %c0_10] : memref<3x8x12xf32, #tpu.memory_space<vmem>>, vector<1x8x12xf32>
    %10 = vector.shape_cast %9 : vector<1x8x12xf32> to vector<8x12xf32>
    %cst = arith.constant dense<0.000000e+00> : vector<8x1792xf32>
    %11 = tpu.matmul %10, %8, %cst {dimension_numbers = #tpu.dot_dimension_numbers<[1], [0], [0], [1], [0, 0, 1, 1], [], []>} : vector<8x12xf32>, vector<12x1792xf32>, vector<8x1792xf32> -> vector<8x1792xf32>
    %c0_11 = arith.constant 0 : index
    %c0_12 = arith.constant 0 : index
    %12 = vector.load %arg7[%c0_11, %c0_12] : memref<8x1792xf32, #tpu.memory_space<vmem>>, vector<8x1792xf32>
    tpu.vector_store %arg7[%c0_11, %c0_12], %11 {strides = array<i32>} : memref<8x1792xf32, #tpu.memory_space<vmem>>, vector<8x1792xf32>,
    %c0_13 = arith.constant 0 : index
    %c128 = arith.constant 128 : index
    %13 = vector.load %arg6[%c0_13, %c128] : memref<12x2048xf32, #tpu.memory_space<vmem>>, vector<12x1792xf32>
    %c1 = arith.constant 1 : index
    %c0_14 = arith.constant 0 : index
    %c0_15 = arith.constant 0 : index
    %14 = vector.load %arg2[%c1, %c0_14, %c0_15] : memref<3x8x12xf32, #tpu.memory_space<vmem>>, vector<1x8x12xf32>
    %15 = vector.shape_cast %14 : vector<1x8x12xf32> to vector<8x12xf32>
    %cst_16 = arith.constant dense<0.000000e+00> : vector<8x1792xf32>
    %16 = tpu.matmul %15, %13, %cst_16 {dimension_numbers = #tpu.dot_dimension_numbers<[1], [0], [0], [1], [0, 0, 1, 1], [], []>} : vector<8x12xf32>, vector<12x1792xf32>, vector<8x1792xf32> -> vector<8x1792xf32>
    %c0_17 = arith.constant 0 : index
    %c0_18 = arith.constant 0 : index
    %17 = vector.load %arg7[%c0_17, %c0_18] : memref<8x1792xf32, #tpu.memory_space<vmem>>, vector<8x1792xf32>
    %18 = arith.addf %17, %16 : vector<8x1792xf32>
    %c0_19 = arith.constant 0 : index
    %c0_20 = arith.constant 0 : index
    %19 = vector.load %arg7[%c0_19, %c0_20] : memref<8x1792xf32, #tpu.memory_space<vmem>>, vector<8x1792xf32>
    tpu.vector_store %arg7[%c0_19, %c0_20], %18 {strides = array<i32>} : memref<8x1792xf32, #tpu.memory_space<vmem>>, vector<8x1792xf32>,
    %c0_21 = arith.constant 0 : index
    %c256 = arith.constant 256 : index
    %20 = vector.load %arg6[%c0_21, %c256] : memref<12x2048xf32, #tpu.memory_space<vmem>>, vector<12x1792xf32>
    %c2 = arith.constant 2 : index
    %c0_22 = arith.constant 0 : index
    %c0_23 = arith.constant 0 : index
    %21 = vector.load %arg2[%c2, %c0_22, %c0_23] : memref<3x8x12xf32, #tpu.memory_space<vmem>>, vector<1x8x12xf32>
    %22 = vector.shape_cast %21 : vector<1x8x12xf32> to vector<8x12xf32>
    %cst_24 = arith.constant dense<0.000000e+00> : vector<8x1792xf32>
    %23 = tpu.matmul %22, %20, %cst_24 {dimension_numbers = #tpu.dot_dimension_numbers<[1], [0], [0], [1], [0, 0, 1, 1], [], []>} : vector<8x12xf32>, vector<12x1792xf32>, vector<8x1792xf32> -> vector<8x1792xf32>
    %c0_25 = arith.constant 0 : index
    %c0_26 = arith.constant 0 : index
    %24 = vector.load %arg7[%c0_25, %c0_26] : memref<8x1792xf32, #tpu.memory_space<vmem>>, vector<8x1792xf32>
    %25 = arith.addf %24, %23 : vector<8x1792xf32>
    %c0_27 = arith.constant 0 : index
    %c0_28 = arith.constant 0 : index
    %26 = vector.load %arg7[%c0_27, %c0_28] : memref<8x1792xf32, #tpu.memory_space<vmem>>, vector<8x1792xf32>
    tpu.vector_store %arg7[%c0_27, %c0_28], %25 {strides = array<i32>} : memref<8x1792xf32, #tpu.memory_space<vmem>>, vector<8x1792xf32>,
    %c0_29 = arith.constant 0 : index
    %c0_30 = arith.constant 0 : index
    %27 = vector.load %arg7[%c0_29, %c0_30] : memref<8x1792xf32, #tpu.memory_space<vmem>>, vector<8x1792xf32>
    %c0_31 = arith.constant 0 : index
    %c0_32 = arith.constant 0 : index
    %28 = vector.load %arg3[%c0_31, %c0_32] : memref<8x1xf32, #tpu.memory_space<vmem>>, vector<8x1xf32>
    %29 = vector.broadcast %28 : vector<8x1xf32> to vector<8x1792xf32>
    %30 = arith.mulf %27, %29 : vector<8x1792xf32>
    %c0_33 = arith.constant 0 : index
    %c0_34 = arith.constant 0 : index
    %31 = vector.load %arg4[%c0_33, %c0_34] : memref<8x1xf32, #tpu.memory_space<vmem>>, vector<8x1xf32>
    %32 = vector.broadcast %31 : vector<8x1xf32> to vector<8x1792xf32>
    %33 = arith.addf %30, %32 : vector<8x1792xf32>
    %cst_35 = arith.constant 0.000000e+00 : f32
    %34 = vector.broadcast %cst_35 : f32 to vector<8x1792xf32>
    %35 = arith.maximumf %33, %34 : vector<8x1792xf32>
    %c0_36 = arith.constant 0 : index
    %c0_37 = arith.constant 0 : index
    %c0_38 = arith.constant 0 : index
    %36 = vector.load %arg5[%c0_36, %c0_37, %c0_38] : memref<2x8x1792xf32, #tpu.memory_space<vmem>>, vector<1x8x1792xf32>
    %37 = vector.shape_cast %36 : vector<1x8x1792xf32> to vector<8x1792xf32>
    %38 = vector.shape_cast %35 : vector<8x1792xf32> to vector<1x8x1792xf32>
    tpu.vector_store %arg5[%c0_36, %c0_37, %c0_38], %38 {strides = array<i32>} : memref<2x8x1792xf32, #tpu.memory_space<vmem>>, vector<1x8x1792xf32>,
    %c1_39 = arith.constant 1 : index
    %c0_40 = arith.constant 0 : index
    %c0_41 = arith.constant 0 : index
    %39 = vector.load %arg1[%c1_39, %c0_40, %c0_41] : memref<2x4x2050xf32, #tpu.memory_space<vmem>>, vector<1x4x2050xf32>
    %40 = vector.shape_cast %39 : vector<1x4x2050xf32> to vector<4x2050xf32>
    %41 = vector.extract_strided_slice %40 {offsets = [0, 0], sizes = [4, 2048], strides = [1, 1]} : vector<4x2050xf32> to vector<4x2048xf32>
    %c0_42 = arith.constant 0 : index
    %c0_43 = arith.constant 0 : index
    %42 = vector.load %arg6[%c0_42, %c0_43] : memref<12x2048xf32, #tpu.memory_space<vmem>>, vector<4x2048xf32>
    tpu.vector_store %arg6[%c0_42, %c0_43], %41 {strides = array<i32>} : memref<12x2048xf32, #tpu.memory_space<vmem>>, vector<4x2048xf32>,
    %43 = vector.extract_strided_slice %40 {offsets = [0, 1], sizes = [4, 2048], strides = [1, 1]} : vector<4x2050xf32> to vector<4x2048xf32>
    %c4_44 = arith.constant 4 : index
    %c0_45 = arith.constant 0 : index
    %44 = vector.load %arg6[%c4_44, %c0_45] : memref<12x2048xf32, #tpu.memory_space<vmem>>, vector<4x2048xf32>
    tpu.vector_store %arg6[%c4_44, %c0_45], %43 {strides = array<i32>} : memref<12x2048xf32, #tpu.memory_space<vmem>>, vector<4x2048xf32>,
    %45 = vector.extract_strided_slice %40 {offsets = [0, 2], sizes = [4, 2048], strides = [1, 1]} : vector<4x2050xf32> to vector<4x2048xf32>
    %c8_46 = arith.constant 8 : index
    %c0_47 = arith.constant 0 : index
    %46 = vector.load %arg6[%c8_46, %c0_47] : memref<12x2048xf32, #tpu.memory_space<vmem>>, vector<4x2048xf32>
    tpu.vector_store %arg6[%c8_46, %c0_47], %45 {strides = array<i32>} : memref<12x2048xf32, #tpu.memory_space<vmem>>, vector<4x2048xf32>,
    %c0_48 = arith.constant 0 : index
    %c0_49 = arith.constant 0 : index
    %47 = vector.load %arg6[%c0_48, %c0_49] : memref<12x2048xf32, #tpu.memory_space<vmem>>, vector<12x1792xf32>
    %c0_50 = arith.constant 0 : index
    %c0_51 = arith.constant 0 : index
    %c0_52 = arith.constant 0 : index
    %48 = vector.load %arg2[%c0_50, %c0_51, %c0_52] : memref<3x8x12xf32, #tpu.memory_space<vmem>>, vector<1x8x12xf32>
    %49 = vector.shape_cast %48 : vector<1x8x12xf32> to vector<8x12xf32>
    %cst_53 = arith.constant dense<0.000000e+00> : vector<8x1792xf32>
    %50 = tpu.matmul %49, %47, %cst_53 {dimension_numbers = #tpu.dot_dimension_numbers<[1], [0], [0], [1], [0, 0, 1, 1], [], []>} : vector<8x12xf32>, vector<12x1792xf32>, vector<8x1792xf32> -> vector<8x1792xf32>
    %c0_54 = arith.constant 0 : index
    %c0_55 = arith.constant 0 : index
    %51 = vector.load %arg7[%c0_54, %c0_55] : memref<8x1792xf32, #tpu.memory_space<vmem>>, vector<8x1792xf32>
    tpu.vector_store %arg7[%c0_54, %c0_55], %50 {strides = array<i32>} : memref<8x1792xf32, #tpu.memory_space<vmem>>, vector<8x1792xf32>,
    %c0_56 = arith.constant 0 : index
    %c128_57 = arith.constant 128 : index
    %52 = vector.load %arg6[%c0_56, %c128_57] : memref<12x2048xf32, #tpu.memory_space<vmem>>, vector<12x1792xf32>
    %c1_58 = arith.constant 1 : index
    %c0_59 = arith.constant 0 : index
    %c0_60 = arith.constant 0 : index
    %53 = vector.load %arg2[%c1_58, %c0_59, %c0_60] : memref<3x8x12xf32, #tpu.memory_space<vmem>>, vector<1x8x12xf32>
    %54 = vector.shape_cast %53 : vector<1x8x12xf32> to vector<8x12xf32>
    %cst_61 = arith.constant dense<0.000000e+00> : vector<8x1792xf32>
    %55 = tpu.matmul %54, %52, %cst_61 {dimension_numbers = #tpu.dot_dimension_numbers<[1], [0], [0], [1], [0, 0, 1, 1], [], []>} : vector<8x12xf32>, vector<12x1792xf32>, vector<8x1792xf32> -> vector<8x1792xf32>
    %c0_62 = arith.constant 0 : index
    %c0_63 = arith.constant 0 : index
    %56 = vector.load %arg7[%c0_62, %c0_63] : memref<8x1792xf32, #tpu.memory_space<vmem>>, vector<8x1792xf32>
    %57 = arith.addf %56, %55 : vector<8x1792xf32>
    %c0_64 = arith.constant 0 : index
    %c0_65 = arith.constant 0 : index
    %58 = vector.load %arg7[%c0_64, %c0_65] : memref<8x1792xf32, #tpu.memory_space<vmem>>, vector<8x1792xf32>
    tpu.vector_store %arg7[%c0_64, %c0_65], %57 {strides = array<i32>} : memref<8x1792xf32, #tpu.memory_space<vmem>>, vector<8x1792xf32>,
    %c0_66 = arith.constant 0 : index
    %c256_67 = arith.constant 256 : index
    %59 = vector.load %arg6[%c0_66, %c256_67] : memref<12x2048xf32, #tpu.memory_space<vmem>>, vector<12x1792xf32>
    %c2_68 = arith.constant 2 : index
    %c0_69 = arith.constant 0 : index
    %c0_70 = arith.constant 0 : index
    %60 = vector.load %arg2[%c2_68, %c0_69, %c0_70] : memref<3x8x12xf32, #tpu.memory_space<vmem>>, vector<1x8x12xf32>
    %61 = vector.shape_cast %60 : vector<1x8x12xf32> to vector<8x12xf32>
    %cst_71 = arith.constant dense<0.000000e+00> : vector<8x1792xf32>
    %62 = tpu.matmul %61, %59, %cst_71 {dimension_numbers = #tpu.dot_dimension_numbers<[1], [0], [0], [1], [0, 0, 1, 1], [], []>} : vector<8x12xf32>, vector<12x1792xf32>, vector<8x1792xf32> -> vector<8x1792xf32>
    %c0_72 = arith.constant 0 : index
    %c0_73 = arith.constant 0 : index
    %63 = vector.load %arg7[%c0_72, %c0_73] : memref<8x1792xf32, #tpu.memory_space<vmem>>, vector<8x1792xf32>
    %64 = arith.addf %63, %62 : vector<8x1792xf32>
    %c0_74 = arith.constant 0 : index
    %c0_75 = arith.constant 0 : index
    %65 = vector.load %arg7[%c0_74, %c0_75] : memref<8x1792xf32, #tpu.memory_space<vmem>>, vector<8x1792xf32>
    tpu.vector_store %arg7[%c0_74, %c0_75], %64 {strides = array<i32>} : memref<8x1792xf32, #tpu.memory_space<vmem>>, vector<8x1792xf32>,
    %c0_76 = arith.constant 0 : index
    %c0_77 = arith.constant 0 : index
    %66 = vector.load %arg7[%c0_76, %c0_77] : memref<8x1792xf32, #tpu.memory_space<vmem>>, vector<8x1792xf32>
    %c0_78 = arith.constant 0 : index
    %c0_79 = arith.constant 0 : index
    %67 = vector.load %arg3[%c0_78, %c0_79] : memref<8x1xf32, #tpu.memory_space<vmem>>, vector<8x1xf32>
    %68 = vector.broadcast %67 : vector<8x1xf32> to vector<8x1792xf32>
    %69 = arith.mulf %66, %68 : vector<8x1792xf32>
    %c0_80 = arith.constant 0 : index
    %c0_81 = arith.constant 0 : index
    %70 = vector.load %arg4[%c0_80, %c0_81] : memref<8x1xf32, #tpu.memory_space<vmem>>, vector<8x1xf32>
    %71 = vector.broadcast %70 : vector<8x1xf32> to vector<8x1792xf32>
    %72 = arith.addf %69, %71 : vector<8x1792xf32>
    %cst_82 = arith.constant 0.000000e+00 : f32
    %73 = vector.broadcast %cst_82 : f32 to vector<8x1792xf32>
    %74 = arith.maximumf %72, %73 : vector<8x1792xf32>
    %c1_83 = arith.constant 1 : index
    %c0_84 = arith.constant 0 : index
    %c0_85 = arith.constant 0 : index
    %75 = vector.load %arg5[%c1_83, %c0_84, %c0_85] : memref<2x8x1792xf32, #tpu.memory_space<vmem>>, vector<1x8x1792xf32>
    %76 = vector.shape_cast %75 : vector<1x8x1792xf32> to vector<8x1792xf32>
    %77 = vector.shape_cast %74 : vector<8x1792xf32> to vector<1x8x1792xf32>
    tpu.vector_store %arg5[%c1_83, %c0_84, %c0_85], %77 {strides = array<i32>} : memref<2x8x1792xf32, #tpu.memory_space<vmem>>, vector<1x8x1792xf32>,
    return
  }
  func.func @transform_0(%arg0: i32) -> (i32, i32, i32) {
    %c0_i32 = arith.constant 0 : i32
    %c0_i32_0 = arith.constant 0 : i32
    %c0_i32_1 = arith.constant 0 : i32
    return %arg0, %c0_i32, %c0_i32_0 : i32, i32, i32
  }
  func.func @transform_1(%arg0: i32) -> (i32, i32, i32) {
    %c0_i32 = arith.constant 0 : i32
    %c0_i32_0 = arith.constant 0 : i32
    %c0_i32_1 = arith.constant 0 : i32
    %c0_i32_2 = arith.constant 0 : i32
    return %c0_i32, %c0_i32_0, %c0_i32_1 : i32, i32, i32
  }
  func.func @transform_2(%arg0: i32) -> (i32, i32) {
    %c0_i32 = arith.constant 0 : i32
    %c0_i32_0 = arith.constant 0 : i32
    %c0_i32_1 = arith.constant 0 : i32
    return %c0_i32, %c0_i32_0 : i32, i32
  }
  func.func @transform_3(%arg0: i32) -> (i32, i32) {
    %c0_i32 = arith.constant 0 : i32
    %c0_i32_0 = arith.constant 0 : i32
    %c0_i32_1 = arith.constant 0 : i32
    return %c0_i32, %c0_i32_0 : i32, i32
  }
  func.func @transform_4(%arg0: i32) -> (i32, i32, i32) {
    %c0_i32 = arith.constant 0 : i32
    %c0_i32_0 = arith.constant 0 : i32
    %c0_i32_1 = arith.constant 0 : i32
    return %arg0, %c0_i32, %c0_i32_0 : i32, i32, i32
  }
}

</mosaic_0001>

<llo_original>
// kernel: tpu_custom_call.1
$region0: #{tpu_custom_call.1}
  #allocation0 [shape = 'u32[]', space=smem, size = 0x4, offset = 0x4, fixed_abs, tag = 'smem constant byte address 0x4 - core index']
  #allocation1 [shape = 'u32[144,128]{1,0:T(1,128)}', space=vmem, size = 0x12000, scoped, tag = 'internal scratch']
  #allocation2 [shape = 'f32[12,2048]{1,0:T(8,128)}', space=vmem, size = 0x20000, scoped, tag = 'scratch operand']
  #allocation3 [shape = 'f32[8,1792]{1,0:T(8,128)}', space=vmem, size = 0xe000, scoped, tag = 'scratch operand']
  %s0 = inlined_call_operand.hbm [shape: f32[2,4,2050], index: 0, kind: input, shape index: {}]
  %s1 = inlined_call_operand.hbm [shape: f32[3,8,12], index: 1, kind: input, shape index: {}]
  %s2 = inlined_call_operand.vmem [shape: f32[8,1], index: 2, kind: input, shape index: {}]
  %s3 = inlined_call_operand.vmem [shape: f32[8,1], index: 3, kind: input, shape index: {}]
  %s4 = inlined_call_operand.hbm [shape: f32[2,8,1792], index: 4, kind: output, shape index: {}]
  %s5 = sld [smem:[#allocation0]]
  $region34: #{tpu_custom_call.1} parent=0
    _
  %s7 = ssub.s32 1, %s5
  %s8 = scalar_select 0, %s7, %s5
  $region1: #{tpu_custom_call.1} parent=0
    #allocation4 [shape = 'u8[69632]{0}', space=vmem, size = 0x11000, scoped, tag = 'input window, operand 0, single buffered']
    #allocation5 [shape = 's32[1]{0}', space=sflag, size = 0x4, scoped, tag = 'scoped memory for tpu_custom_call.1']
    #allocation6 [shape = 's32[1]{0}', space=sflag, size = 0x4, scoped, tag = 'scoped memory for tpu_custom_call.1']
    #allocation7 [shape = 'u8[12288]{0}', space=vmem, size = 0x3000, scoped, tag = 'input window, operand 1, single buffered']
    #allocation8 [shape = 's32[1]{0}', space=sflag, size = 0x4, scoped, tag = 'scoped memory for tpu_custom_call.1']
    #allocation9 [shape = 'u8[114688]{0}', space=vmem, size = 0x1c000, scoped, tag = 'output window, operand 0, single buffered']
    %9 = vsyncpa [#allocation5], 0
    %10 = vsyncpa [#allocation8], 0
    %11 = vsyncpa [#allocation6], 0
    // Predicated region
    $region2: #{tpu_custom_call.1} parent=1 // pred_check
      _
    $region3: #{tpu_custom_call.1} parent=1 // pred_check_branch
      %13 = sbr.rel (0) target = $region5
    $region4: #{tpu_custom_call.1} parent=1 // pred_region
      %s15 = ssub.s32 2176, 2176
      %16 = vsyncadd [#allocation5], %s15
      %s17 = sshll.u32 [#allocation4], 4
      %s18 = int_to_ptr.vmem [resolvable:$true] %s17
      %23 = dma.hbm_to_vmem [thread:$0]  %s0, 2176, %s18, [#allocation5], 1088, 1088, 68
    $region5: #{tpu_custom_call.1} parent=1 // pred_fallthru
      _
    // Predicated region
    $region6: #{tpu_custom_call.1} parent=1 // pred_check
      _
    $region7: #{tpu_custom_call.1} parent=1 // pred_check_branch
      %25 = sbr.rel (0) target = $region9
    $region8: #{tpu_custom_call.1} parent=1 // pred_region
      %s27 = ssub.s32 384, 384
      %28 = vsyncadd [#allocation8], %s27
      %s29 = sshll.u32 [#allocation7], 4
      %s30 = int_to_ptr.vmem [resolvable:$true] %s29
      %35 = dma.hbm_to_vmem [thread:$0]  %s1, 384, %s30, [#allocation8], 128, 128, 8
    $region9: #{tpu_custom_call.1} parent=1 // pred_fallthru
      _
    // Predicated region
    $region10: #{tpu_custom_call.1} parent=1 // pred_check
      _
    $region11: #{tpu_custom_call.1} parent=1 // pred_check_branch
      %37 = sbr.rel (0) target = $region13
    $region12: #{tpu_custom_call.1} parent=1 // pred_region
      _
    $region13: #{tpu_custom_call.1} parent=1 // pred_fallthru
      _
    // Predicated region
    $region14: #{tpu_custom_call.1} parent=1 // pred_check
      _
    $region15: #{tpu_custom_call.1} parent=1 // pred_check_branch
      %39 = sbr.rel (0) target = $region17
    $region16: #{tpu_custom_call.1} parent=1 // pred_region
      _
    $region17: #{tpu_custom_call.1} parent=1 // pred_fallthru
      _
    // Predicated region
    $region18: #{tpu_custom_call.1} parent=1 // pred_check
      _
    $region19: #{tpu_custom_call.1} parent=1 // pred_check_branch
      %41 = sbr.rel (0) target = $region21
    $region20: #{tpu_custom_call.1} parent=1 // pred_region
      %42 = dma.done [#allocation5], 2176
    $region21: #{tpu_custom_call.1} parent=1 // pred_fallthru
      _
    // Predicated region
    $region22: #{tpu_custom_call.1} parent=1 // pred_check
      _
    $region23: #{tpu_custom_call.1} parent=1 // pred_check_branch
      %44 = sbr.rel (0) target = $region25
    $region24: #{tpu_custom_call.1} parent=1 // pred_region
      %45 = dma.done [#allocation8], 384
    $region25: #{tpu_custom_call.1} parent=1 // pred_fallthru
      _
    %v46 = vld [vmem:[#allocation4] sm:$0xff]
    %v47 = vld [vmem:[#allocation4 + $0x8] sm:$0xff]
    %v48 = vld [vmem:[#allocation4 + $0x10] sm:$0xff]
    %v49 = vld [vmem:[#allocation4 + $0x18] sm:$0xff]
    %v50 = vld [vmem:[#allocation4 + $0x20] sm:$0xff]
    %v51 = vld [vmem:[#allocation4 + $0x28] sm:$0xff]
    %v52 = vld [vmem:[#allocation4 + $0x30] sm:$0xff]
    %v53 = vld [vmem:[#allocation4 + $0x38] sm:$0xff]
    %v54 = vld [vmem:[#allocation4 + $0x40] sm:$0xf]
    %v63 = vcombine.high %v46, %v46
    %v64 = vcombine.high %v47, %v47
    %v65 = vcombine.high %v48, %v48
    %v66 = vcombine.high %v49, %v49
    %v67 = vcombine.high %v50, %v50
    %v68 = vcombine.high %v51, %v51
    %v69 = vcombine.high %v52, %v52
    %v70 = vcombine.high %v53, %v53
    %79 = vst [vmem:[#allocation2] sm:$0xf] %v46
    %80 = vst [vmem:[#allocation2 + $0x8] sm:$0xf] %v63
    %81 = vst [vmem:[#allocation2 + $0x10] sm:$0xf] %v47
    %82 = vst [vmem:[#allocation2 + $0x18] sm:$0xf] %v64
    %83 = vst [vmem:[#allocation2 + $0x20] sm:$0xf] %v48
    %84 = vst [vmem:[#allocation2 + $0x28] sm:$0xf] %v65
    %85 = vst [vmem:[#allocation2 + $0x30] sm:$0xf] %v49
    %86 = vst [vmem:[#allocation2 + $0x38] sm:$0xf] %v66
    %87 = vst [vmem:[#allocation2 + $0x40] sm:$0xf] %v50
    %88 = vst [vmem:[#allocation2 + $0x48] sm:$0xf] %v67
    %89 = vst [vmem:[#allocation2 + $0x50] sm:$0xf] %v51
    %90 = vst [vmem:[#allocation2 + $0x58] sm:$0xf] %v68
    %91 = vst [vmem:[#allocation2 + $0x60] sm:$0xf] %v52
    %92 = vst [vmem:[#allocation2 + $0x68] sm:$0xf] %v69
    %93 = vst [vmem:[#allocation2 + $0x70] sm:$0xf] %v53
    %94 = vst [vmem:[#allocation2 + $0x78] sm:$0xf] %v70
    %v96 = vcombine.low %v46, %v46
    %v97 = vcombine.low %v47, %v47
    %v98 = vcombine.low %v48, %v48
    %v99 = vcombine.low %v49, %v49
    %v100 = vcombine.low %v50, %v50
    %v101 = vcombine.low %v51, %v51
    %v102 = vcombine.low %v52, %v52
    %v103 = vcombine.low %v53, %v53
    %v104 = vcombine.low %v54, %v54
    %105 = vrot.lane.b32.xlu0 %v96, 127
    %v106 = vpop.permute.xlu0 %105
    %107 = vrot.lane.b32.xlu0 %v46, 127
    %v108 = vpop.permute.xlu0 %107
    %109 = vrot.lane.b32.xlu0 %v97, 127
    %v110 = vpop.permute.xlu0 %109
    %111 = vrot.lane.b32.xlu0 %v47, 127
    %v112 = vpop.permute.xlu0 %111
    %113 = vrot.lane.b32.xlu0 %v98, 127
    %v114 = vpop.permute.xlu0 %113
    %115 = vrot.lane.b32.xlu0 %v48, 127
    %v116 = vpop.permute.xlu0 %115
    %117 = vrot.lane.b32.xlu0 %v99, 127
    %v118 = vpop.permute.xlu0 %117
    %119 = vrot.lane.b32.xlu0 %v49, 127
    %v120 = vpop.permute.xlu0 %119
    %121 = vrot.lane.b32.xlu0 %v100, 127
    %v122 = vpop.permute.xlu0 %121
    %123 = vrot.lane.b32.xlu0 %v50, 127
    %v124 = vpop.permute.xlu0 %123
    %125 = vrot.lane.b32.xlu0 %v101, 127
    %v126 = vpop.permute.xlu0 %125
    %127 = vrot.lane.b32.xlu0 %v51, 127
    %v128 = vpop.permute.xlu0 %127
    %129 = vrot.lane.b32.xlu0 %v102, 127
    %v130 = vpop.permute.xlu0 %129
    %131 = vrot.lane.b32.xlu0 %v52, 127
    %v132 = vpop.permute.xlu0 %131
    %133 = vrot.lane.b32.xlu0 %v103, 127
    %v134 = vpop.permute.xlu0 %133
    %135 = vrot.lane.b32.xlu0 %v53, 127
    %v136 = vpop.permute.xlu0 %135
    %137 = vrot.lane.b32.xlu0 %v104, 127
    %v138 = vpop.permute.xlu0 %137
    %vm139 = vcmask 1039360
    %v140 = vsel %vm139, %v106, %v108
    %v141 = vsel %vm139, %v108, %v110
    %v142 = vsel %vm139, %v110, %v112
    %v143 = vsel %vm139, %v112, %v114
    %v144 = vsel %vm139, %v114, %v116
    %v145 = vsel %vm139, %v116, %v118
    %v146 = vsel %vm139, %v118, %v120
    %v147 = vsel %vm139, %v120, %v122
    %v148 = vsel %vm139, %v122, %v124
    %v149 = vsel %vm139, %v124, %v126
    %v150 = vsel %vm139, %v126, %v128
    %v151 = vsel %vm139, %v128, %v130
    %v152 = vsel %vm139, %v130, %v132
    %v153 = vsel %vm139, %v132, %v134
    %v154 = vsel %vm139, %v134, %v136
    %v155 = vsel %vm139, %v136, %v138
    %172 = vst [vmem:[#allocation2] sm:$0xf0] %v140
    %173 = vst [vmem:[#allocation2 + $0x8] sm:$0xf0] %v141
    %174 = vst [vmem:[#allocation2 + $0x10] sm:$0xf0] %v142
    %175 = vst [vmem:[#allocation2 + $0x18] sm:$0xf0] %v143
    %176 = vst [vmem:[#allocation2 + $0x20] sm:$0xf0] %v144
    %177 = vst [vmem:[#allocation2 + $0x28] sm:$0xf0] %v145
    %178 = vst [vmem:[#allocation2 + $0x30] sm:$0xf0] %v146
    %179 = vst [vmem:[#allocation2 + $0x38] sm:$0xf0] %v147
    %180 = vst [vmem:[#allocation2 + $0x40] sm:$0xf0] %v148
    %181 = vst [vmem:[#allocation2 + $0x48] sm:$0xf0] %v149
    %182 = vst [vmem:[#allocation2 + $0x50] sm:$0xf0] %v150
    %183 = vst [vmem:[#allocation2 + $0x58] sm:$0xf0] %v151
    %184 = vst [vmem:[#allocation2 + $0x60] sm:$0xf0] %v152
    %185 = vst [vmem:[#allocation2 + $0x68] sm:$0xf0] %v153
    %186 = vst [vmem:[#allocation2 + $0x70] sm:$0xf0] %v154
    %187 = vst [vmem:[#allocation2 + $0x78] sm:$0xf0] %v155
    %188 = vrot.lane.b32.xlu0 %v46, 126
    %v189 = vpop.permute.xlu0 %188
    %190 = vrot.lane.b32.xlu0 %v63, 126
    %v191 = vpop.permute.xlu0 %190
    %192 = vrot.lane.b32.xlu0 %v47, 126
    %v193 = vpop.permute.xlu0 %192
    %194 = vrot.lane.b32.xlu0 %v64, 126
    %v195 = vpop.permute.xlu0 %194
    %196 = vrot.lane.b32.xlu0 %v48, 126
    %v197 = vpop.permute.xlu0 %196
    %198 = vrot.lane.b32.xlu0 %v65, 126
    %v199 = vpop.permute.xlu0 %198
    %200 = vrot.lane.b32.xlu0 %v49, 126
    %v201 = vpop.permute.xlu0 %200
    %202 = vrot.lane.b32.xlu0 %v66, 126
    %v203 = vpop.permute.xlu0 %202
    %204 = vrot.lane.b32.xlu0 %v50, 126
    %v205 = vpop.permute.xlu0 %204
    %206 = vrot.lane.b32.xlu0 %v67, 126
    %v207 = vpop.permute.xlu0 %206
    %208 = vrot.lane.b32.xlu0 %v51, 126
    %v209 = vpop.permute.xlu0 %208
    %210 = vrot.lane.b32.xlu0 %v68, 126
    %v211 = vpop.permute.xlu0 %210
    %212 = vrot.lane.b32.xlu0 %v52, 126
    %v213 = vpop.permute.xlu0 %212
    %214 = vrot.lane.b32.xlu0 %v69, 126
    %v215 = vpop.permute.xlu0 %214
    %216 = vrot.lane.b32.xlu0 %v53, 126
    %v217 = vpop.permute.xlu0 %216
    %218 = vrot.lane.b32.xlu0 %v70, 126
    %v219 = vpop.permute.xlu0 %218
    %220 = vrot.lane.b32.xlu0 %v54, 126
    %v221 = vpop.permute.xlu0 %220
    %vm222 = vcmask 1031168
    %v223 = vsel %vm222, %v189, %v191
    %v224 = vsel %vm222, %v191, %v193
    %v225 = vsel %vm222, %v193, %v195
    %v226 = vsel %vm222, %v195, %v197
    %v227 = vsel %vm222, %v197, %v199
    %v228 = vsel %vm222, %v199, %v201
    %v229 = vsel %vm222, %v201, %v203
    %v230 = vsel %vm222, %v203, %v205
    %v231 = vsel %vm222, %v205, %v207
    %v232 = vsel %vm222, %v207, %v209
    %v233 = vsel %vm222, %v209, %v211
    %v234 = vsel %vm222, %v211, %v213
    %v235 = vsel %vm222, %v213, %v215
    %v236 = vsel %vm222, %v215, %v217
    %v237 = vsel %vm222, %v217, %v219
    %v238 = vsel %vm222, %v219, %v221
    %255 = vst [vmem:[#allocation2 + $0x80] sm:$0xf] %v223
    %256 = vst [vmem:[#allocation2 + $0x88] sm:$0xf] %v224
    %257 = vst [vmem:[#allocation2 + $0x90] sm:$0xf] %v225
    %258 = vst [vmem:[#allocation2 + $0x98] sm:$0xf] %v226
    %259 = vst [vmem:[#allocation2 + $0xa0] sm:$0xf] %v227
    %260 = vst [vmem:[#allocation2 + $0xa8] sm:$0xf] %v228
    %261 = vst [vmem:[#allocation2 + $0xb0] sm:$0xf] %v229
    %262 = vst [vmem:[#allocation2 + $0xb8] sm:$0xf] %v230
    %263 = vst [vmem:[#allocation2 + $0xc0] sm:$0xf] %v231
    %264 = vst [vmem:[#allocation2 + $0xc8] sm:$0xf] %v232
    %265 = vst [vmem:[#allocation2 + $0xd0] sm:$0xf] %v233
    %266 = vst [vmem:[#allocation2 + $0xd8] sm:$0xf] %v234
    %267 = vst [vmem:[#allocation2 + $0xe0] sm:$0xf] %v235
    %268 = vst [vmem:[#allocation2 + $0xe8] sm:$0xf] %v236
    %269 = vst [vmem:[#allocation2 + $0xf0] sm:$0xf] %v237
    %270 = vst [vmem:[#allocation2 + $0xf8] sm:$0xf] %v238
    %v271 = vld [vmem:[#allocation2] sm:$0xff]
    %v272 = vld [vmem:[#allocation2 + $0x8] sm:$0xff]
    %v273 = vld [vmem:[#allocation2 + $0x10] sm:$0xff]
    %v274 = vld [vmem:[#allocation2 + $0x18] sm:$0xff]
    %v275 = vld [vmem:[#allocation2 + $0x20] sm:$0xff]
    %v276 = vld [vmem:[#allocation2 + $0x28] sm:$0xff]
    %v277 = vld [vmem:[#allocation2 + $0x30] sm:$0xff]
    %v278 = vld [vmem:[#allocation2 + $0x38] sm:$0xff]
    %v279 = vld [vmem:[#allocation2 + $0x40] sm:$0xff]
    %v280 = vld [vmem:[#allocation2 + $0x48] sm:$0xff]
    %v281 = vld [vmem:[#allocation2 + $0x50] sm:$0xff]
    %v282 = vld [vmem:[#allocation2 + $0x58] sm:$0xff]
    %v283 = vld [vmem:[#allocation2 + $0x60] sm:$0xff]
    %v284 = vld [vmem:[#allocation2 + $0x68] sm:$0xff]
    %v285 = vld [vmem:[#allocation2 + $0x80] sm:$0xf]
    %v286 = vld [vmem:[#allocation2 + $0x88] sm:$0xf]
    %v287 = vld [vmem:[#allocation2 + $0x90] sm:$0xf]
    %v288 = vld [vmem:[#allocation2 + $0x98] sm:$0xf]
    %v289 = vld [vmem:[#allocation2 + $0xa0] sm:$0xf]
    %v290 = vld [vmem:[#allocation2 + $0xa8] sm:$0xf]
    %v291 = vld [vmem:[#allocation2 + $0xb0] sm:$0xf]
    %v292 = vld [vmem:[#allocation2 + $0xb8] sm:$0xf]
    %v293 = vld [vmem:[#allocation2 + $0xc0] sm:$0xf]
    %v294 = vld [vmem:[#allocation2 + $0xc8] sm:$0xf]
    %v295 = vld [vmem:[#allocation2 + $0xd0] sm:$0xf]
    %v296 = vld [vmem:[#allocation2 + $0xd8] sm:$0xf]
    %v297 = vld [vmem:[#allocation2 + $0xe0] sm:$0xf]
    %v298 = vld [vmem:[#allocation2 + $0xe8] sm:$0xf]
    %v299 = vld [vmem:[#allocation7] sm:$0xff]
    %vm300 = vcmask 97280
    %v302 = vsel %vm300, %v299, 0
    %vm304 = vcmask 1043456
    %v306 = vsel %vm304, %v285, 0
    %v309 = vsel %vm304, %v286, 0
    %v312 = vsel %vm304, %v287, 0
    %v315 = vsel %vm304, %v288, 0
    %v318 = vsel %vm304, %v289, 0
    %v321 = vsel %vm304, %v290, 0
    %v324 = vsel %vm304, %v291, 0
    %v327 = vsel %vm304, %v292, 0
    %v330 = vsel %vm304, %v293, 0
    %v333 = vsel %vm304, %v294, 0
    %v336 = vsel %vm304, %v295, 0
    %v339 = vsel %vm304, %v296, 0
    %v342 = vsel %vm304, %v297, 0
    %v345 = vsel %vm304, %v298, 0
    %347 = vmatprep.subr.mxu0 %v272
    %348 = vmatpush1.msra.mxu0 %v271
    %349 = vmatprep.subr.mxu0 %v309
    %350 = vmatpush1.msra.mxu0 %v306
    %351 = vmatprep.subr.mxu0 0.0
    %352 = vmatpush1.msra.mxu0 0.0
    %353 = vmatprep.subr.mxu0 0.0
    %354 = vmatpush1.msra.mxu0 0.0
    %355 = vmatprep.subr.mxu0 0.0
    %356 = vmatpush1.msra.mxu0 0.0
    %357 = vmatprep.subr.mxu0 0.0
    %358 = vmatpush1.msra.mxu0 0.0
    %359 = vmatprep.subr.mxu0 0.0
    %360 = vmatpush1.msra.mxu0 0.0
    %361 = vmatprep.subr.mxu0 0.0
    %362 = vmatpush1.msra.mxu0 0.0
    %363 = vmatprep.subr.mxu0 0.0
    %364 = vmatpush1.msra.mxu0 0.0
    %365 = vmatprep.subr.mxu0 0.0
    %366 = vmatpush1.msra.mxu0 0.0
    %367 = vmatprep.subr.mxu0 0.0
    %368 = vmatpush1.msra.mxu0 0.0
    %369 = vmatprep.subr.mxu0 0.0
    %370 = vmatpush1.msra.mxu0 0.0
    %371 = vmatprep.subr.mxu0 0.0
    %372 = vmatpush1.msra.mxu0 0.0
    %373 = vmatprep.subr.mxu0 0.0
    %374 = vmatpush1.msra.mxu0 0.0
    %375 = vmatprep.subr.mxu0 0.0
    %376 = vmatpush1.msra.mxu0 0.0
    %377 = vmatprep.subr.mxu0 0.0
    %378 = vmatpush1.msra.mxu0 0.0
    %379 = vmatprep.subr.mxu0 0.0
    %380 = vmatpush1.msra.mxu0 0.0
    %381 = vmatprep.subr.mxu0 0.0
    %382 = vmatpush1.msra.mxu0 0.0
    %383 = vmatprep.subr.mxu0 0.0
    %384 = vmatpush1.msra.mxu0 0.0
    %385 = vmatprep.subr.mxu0 0.0
    %386 = vmatpush1.msra.mxu0 0.0
    %387 = vmatprep.subr.mxu0 0.0
    %388 = vmatpush1.msra.mxu0 0.0
    %389 = vmatprep.subr.mxu0 0.0
    %390 = vmatpush1.msra.mxu0 0.0
    %391 = vmatprep.subr.mxu0 0.0
    %392 = vmatpush1.msra.mxu0 0.0
    %393 = vmatprep.subr.mxu0 0.0
    %394 = vmatpush1.msra.mxu0 0.0
    %395 = vmatprep.subr.mxu0 0.0
    %396 = vmatpush1.msra.mxu0 0.0
    %397 = vmatprep.subr.mxu0 0.0
    %398 = vmatpush1.msra.mxu0 0.0
    %399 = vmatprep.subr.mxu0 0.0
    %400 = vmatpush1.msra.mxu0 0.0
    %401 = vmatprep.subr.mxu0 0.0
    %402 = vmatpush1.msra.mxu0 0.0
    %403 = vmatprep.subr.mxu0 0.0
    %404 = vmatpush1.msra.mxu0 0.0
    %405 = vmatprep.subr.mxu0 0.0
    %406 = vmatpush1.msra.mxu0 0.0
    %407 = vmatprep.subr.mxu0 0.0
    %408 = vmatpush1.msra.mxu0 0.0
    %409 = vmatprep.subr.mxu0 0.0
    %410 = vmatpush1.msra.mxu0 0.0
    %411 = vmatprep.mubr.f32.mxu0 0.0
    %412 = vmatmul.mubr.f32.gmra.mrb[0].mxu0 %v302
    %v413 = vpop.f32.mrb[0].mxu0
    %v414 = vadd.f32 0.0, %v413
    %v415 = vpop.f32.mrb[0].mxu0
    %v416 = vadd.f32 0.0, %v415
    %417 = vdwg.mxu0
    %418 = vmatprep.subr.mxu0 %v274
    %419 = vmatpush1.msra.mxu0 %v273
    %420 = vmatprep.subr.mxu0 %v315
    %421 = vmatpush1.msra.mxu0 %v312
    %422 = vmatprep.subr.mxu0 0.0
    %423 = vmatpush1.msra.mxu0 0.0
    %424 = vmatprep.subr.mxu0 0.0
    %425 = vmatpush1.msra.mxu0 0.0
    %426 = vmatprep.subr.mxu0 0.0
    %427 = vmatpush1.msra.mxu0 0.0
    %428 = vmatprep.subr.mxu0 0.0
    %429 = vmatpush1.msra.mxu0 0.0
    %430 = vmatprep.subr.mxu0 0.0
    %431 = vmatpush1.msra.mxu0 0.0
    %432 = vmatprep.subr.mxu0 0.0
    %433 = vmatpush1.msra.mxu0 0.0
    %434 = vmatprep.subr.mxu0 0.0
    %435 = vmatpush1.msra.mxu0 0.0
    %436 = vmatprep.subr.mxu0 0.0
    %437 = vmatpush1.msra.mxu0 0.0
    %438 = vmatprep.subr.mxu0 0.0
    %439 = vmatpush1.msra.mxu0 0.0
    %440 = vmatprep.subr.mxu0 0.0
    %441 = vmatpush1.msra.mxu0 0.0
    %442 = vmatprep.subr.mxu0 0.0
    %443 = vmatpush1.msra.mxu0 0.0
    %444 = vmatprep.subr.mxu0 0.0
    %445 = vmatpush1.msra.mxu0 0.0
    %446 = vmatprep.subr.mxu0 0.0
    %447 = vmatpush1.msra.mxu0 0.0
    %448 = vmatprep.subr.mxu0 0.0
    %449 = vmatpush1.msra.mxu0 0.0
    %450 = vmatprep.subr.mxu0 0.0
    %451 = vmatpush1.msra.mxu0 0.0
    %452 = vmatprep.subr.mxu0 0.0
    %453 = vmatpush1.msra.mxu0 0.0
    %454 = vmatprep.subr.mxu0 0.0
    %455 = vmatpush1.msra.mxu0 0.0
    %456 = vmatprep.subr.mxu0 0.0
    %457 = vmatpush1.msra.mxu0 0.0
    %458 = vmatprep.subr.mxu0 0.0
    %459 = vmatpush1.msra.mxu0 0.0
    %460 = vmatprep.subr.mxu0 0.0
    %461 = vmatpush1.msra.mxu0 0.0
    %462 = vmatprep.subr.mxu0 0.0
    %463 = vmatpush1.msra.mxu0 0.0
    %464 = vmatprep.subr.mxu0 0.0
    %465 = vmatpush1.msra.mxu0 0.0
    %466 = vmatprep.subr.mxu0 0.0
    %467 = vmatpush1.msra.mxu0 0.0
    %468 = vmatprep.subr.mxu0 0.0
    %469 = vmatpush1.msra.mxu0 0.0
    %470 = vmatprep.subr.mxu0 0.0
    %471 = vmatpush1.msra.mxu0 0.0
    %472 = vmatprep.subr.mxu0 0.0
    %473 = vmatpush1.msra.mxu0 0.0
    %474 = vmatprep.subr.mxu0 0.0
    %475 = vmatpush1.msra.mxu0 0.0
    %476 = vmatprep.subr.mxu0 0.0
    %477 = vmatpush1.msra.mxu0 0.0
    %478 = vmatprep.subr.mxu0 0.0
    %479 = vmatpush1.msra.mxu0 0.0
    %480 = vmatprep.subr.mxu0 0.0
    %481 = vmatpush1.msra.mxu0 0.0
    %482 = vmatprep.mubr.f32.mxu0 0.0
    %483 = vmatmul.mubr.f32.gmra.mrb[0].mxu0 %v302
    %v484 = vpop.f32.mrb[0].mxu0
    %v485 = vadd.f32 0.0, %v484
    %v486 = vpop.f32.mrb[0].mxu0
    %v487 = vadd.f32 0.0, %v486
    %488 = vdwg.mxu0
    %489 = vmatprep.subr.mxu0 %v276
    %490 = vmatpush1.msra.mxu0 %v275
    %491 = vmatprep.subr.mxu0 %v321
    %492 = vmatpush1.msra.mxu0 %v318
    %493 = vmatprep.subr.mxu0 0.0
    %494 = vmatpush1.msra.mxu0 0.0
    %495 = vmatprep.subr.mxu0 0.0
    %496 = vmatpush1.msra.mxu0 0.0
    %497 = vmatprep.subr.mxu0 0.0
    %498 = vmatpush1.msra.mxu0 0.0
    %499 = vmatprep.subr.mxu0 0.0
    %500 = vmatpush1.msra.mxu0 0.0
    %501 = vmatprep.subr.mxu0 0.0
    %502 = vmatpush1.msra.mxu0 0.0
    %503 = vmatprep.subr.mxu0 0.0
    %504 = vmatpush1.msra.mxu0 0.0
    %505 = vmatprep.subr.mxu0 0.0
    %506 = vmatpush1.msra.mxu0 0.0
    %507 = vmatprep.subr.mxu0 0.0
    %508 = vmatpush1.msra.mxu0 0.0
    %509 = vmatprep.subr.mxu0 0.0
    %510 = vmatpush1.msra.mxu0 0.0
    %511 = vmatprep.subr.mxu0 0.0
    %512 = vmatpush1.msra.mxu0 0.0
    %513 = vmatprep.subr.mxu0 0.0
    %514 = vmatpush1.msra.mxu0 0.0
    %515 = vmatprep.subr.mxu0 0.0
    %516 = vmatpush1.msra.mxu0 0.0
    %517 = vmatprep.subr.mxu0 0.0
    %518 = vmatpush1.msra.mxu0 0.0
    %519 = vmatprep.subr.mxu0 0.0
    %520 = vmatpush1.msra.mxu0 0.0
    %521 = vmatprep.subr.mxu0 0.0
    %522 = vmatpush1.msra.mxu0 0.0
    %523 = vmatprep.subr.mxu0 0.0
    %524 = vmatpush1.msra.mxu0 0.0
    %525 = vmatprep.subr.mxu0 0.0
    %526 = vmatpush1.msra.mxu0 0.0
    %527 = vmatprep.subr.mxu0 0.0
    %528 = vmatpush1.msra.mxu0 0.0
    %529 = vmatprep.subr.mxu0 0.0
    %530 = vmatpush1.msra.mxu0 0.0
    %531 = vmatprep.subr.mxu0 0.0
    %532 = vmatpush1.msra.mxu0 0.0
    %533 = vmatprep.subr.mxu0 0.0
    %534 = vmatpush1.msra.mxu0 0.0
    %535 = vmatprep.subr.mxu0 0.0
    %536 = vmatpush1.msra.mxu0 0.0
    %537 = vmatprep.subr.mxu0 0.0
    %538 = vmatpush1.msra.mxu0 0.0
    %539 = vmatprep.subr.mxu0 0.0
    %540 = vmatpush1.msra.mxu0 0.0
    %541 = vmatprep.subr.mxu0 0.0
    %542 = vmatpush1.msra.mxu0 0.0
    %543 = vmatprep.subr.mxu0 0.0
    %544 = vmatpush1.msra.mxu0 0.0
    %545 = vmatprep.subr.mxu0 0.0
    %546 = vmatpush1.msra.mxu0 0.0
    %547 = vmatprep.subr.mxu0 0.0
    %548 = vmatpush1.msra.mxu0 0.0
    %549 = vmatprep.subr.mxu0 0.0
    %550 = vmatpush1.msra.mxu0 0.0
    %551 = vmatprep.subr.mxu0 0.0
    %552 = vmatpush1.msra.mxu0 0.0
    %553 = vmatprep.mubr.f32.mxu0 0.0
    %554 = vmatmul.mubr.f32.gmra.mrb[0].mxu0 %v302
    %v555 = vpop.f32.mrb[0].mxu0
    %v556 = vadd.f32 0.0, %v555
    %v557 = vpop.f32.mrb[0].mxu0
    %v558 = vadd.f32 0.0, %v557
    %559 = vdwg.mxu0
    %560 = vmatprep.subr.mxu0 %v278
    %561 = vmatpush1.msra.mxu0 %v277
    %562 = vmatprep.subr.mxu0 %v327
    %563 = vmatpush1.msra.mxu0 %v324
    %564 = vmatprep.subr.mxu0 0.0
    %565 = vmatpush1.msra.mxu0 0.0
    %566 = vmatprep.subr.mxu0 0.0
    %567 = vmatpush1.msra.mxu0 0.0
    %568 = vmatprep.subr.mxu0 0.0
    %569 = vmatpush1.msra.mxu0 0.0
    %570 = vmatprep.subr.mxu0 0.0
    %571 = vmatpush1.msra.mxu0 0.0
    %572 = vmatprep.subr.mxu0 0.0
    %573 = vmatpush1.msra.mxu0 0.0
    %574 = vmatprep.subr.mxu0 0.0
    %575 = vmatpush1.msra.mxu0 0.0
    %576 = vmatprep.subr.mxu0 0.0
    %577 = vmatpush1.msra.mxu0 0.0
    %578 = vmatprep.subr.mxu0 0.0
    %579 = vmatpush1.msra.mxu0 0.0
    %580 = vmatprep.subr.mxu0 0.0
    %581 = vmatpush1.msra.mxu0 0.0
    %582 = vmatprep.subr.mxu0 0.0
    %583 = vmatpush1.msra.mxu0 0.0
    %584 = vmatprep.subr.mxu0 0.0
    %585 = vmatpush1.msra.mxu0 0.0
    %586 = vmatprep.subr.mxu0 0.0
    %587 = vmatpush1.msra.mxu0 0.0
    %588 = vmatprep.subr.mxu0 0.0
    %589 = vmatpush1.msra.mxu0 0.0
    %590 = vmatprep.subr.mxu0 0.0
    %591 = vmatpush1.msra.mxu0 0.0
    %592 = vmatprep.subr.mxu0 0.0
    %593 = vmatpush1.msra.mxu0 0.0
    %594 = vmatprep.subr.mxu0 0.0
    %595 = vmatpush1.msra.mxu0 0.0
    %596 = vmatprep.subr.mxu0 0.0
    %597 = vmatpush1.msra.mxu0 0.0
    %598 = vmatprep.subr.mxu0 0.0
    %599 = vmatpush1.msra.mxu0 0.0
    %600 = vmatprep.subr.mxu0 0.0
    %601 = vmatpush1.msra.mxu0 0.0
    %602 = vmatprep.subr.mxu0 0.0
    %603 = vmatpush1.msra.mxu0 0.0
    %604 = vmatprep.subr.mxu0 0.0
    %605 = vmatpush1.msra.mxu0 0.0
    %606 = vmatprep.subr.mxu0 0.0
    %607 = vmatpush1.msra.mxu0 0.0
    %608 = vmatprep.subr.mxu0 0.0
    %609 = vmatpush1.msra.mxu0 0.0
    %610 = vmatprep.subr.mxu0 0.0
    %611 = vmatpush1.msra.mxu0 0.0
    %612 = vmatprep.subr.mxu0 0.0
    %613 = vmatpush1.msra.mxu0 0.0
    %614 = vmatprep.subr.mxu0 0.0
    %615 = vmatpush1.msra.mxu0 0.0
    %616 = vmatprep.subr.mxu0 0.0
    %617 = vmatpush1.msra.mxu0 0.0
    %618 = vmatprep.subr.mxu0 0.0
    %619 = vmatpush1.msra.mxu0 0.0
    %620 = vmatprep.subr.mxu0 0.0
    %621 = vmatpush1.msra.mxu0 0.0
    %622 = vmatprep.subr.mxu0 0.0
    %623 = vmatpush1.msra.mxu0 0.0
    %624 = vmatprep.mubr.f32.mxu0 0.0
    %625 = vmatmul.mubr.f32.gmra.mrb[0].mxu0 %v302
    %v626 = vpop.f32.mrb[0].mxu0
    %v627 = vadd.f32 0.0, %v626
    %v628 = vpop.f32.mrb[0].mxu0
    %v629 = vadd.f32 0.0, %v628
    %630 = vdwg.mxu0
    %631 = vmatprep.subr.mxu0 %v280
    %632 = vmatpush1.msra.mxu0 %v279
    %633 = vmatprep.subr.mxu0 %v333
    %634 = vmatpush1.msra.mxu0 %v330
    %635 = vmatprep.subr.mxu0 0.0
    %636 = vmatpush1.msra.mxu0 0.0
    %637 = vmatprep.subr.mxu0 0.0
    %638 = vmatpush1.msra.mxu0 0.0
    %639 = vmatprep.subr.mxu0 0.0
    %640 = vmatpush1.msra.mxu0 0.0
    %641 = vmatprep.subr.mxu0 0.0
    %642 = vmatpush1.msra.mxu0 0.0
    %643 = vmatprep.subr.mxu0 0.0
    %644 = vmatpush1.msra.mxu0 0.0
    %645 = vmatprep.subr.mxu0 0.0
    %646 = vmatpush1.msra.mxu0 0.0
    %647 = vmatprep.subr.mxu0 0.0
    %648 = vmatpush1.msra.mxu0 0.0
    %649 = vmatprep.subr.mxu0 0.0
    %650 = vmatpush1.msra.mxu0 0.0
    %651 = vmatprep.subr.mxu0 0.0
    %652 = vmatpush1.msra.mxu0 0.0
    %653 = vmatprep.subr.mxu0 0.0
    %654 = vmatpush1.msra.mxu0 0.0
    %655 = vmatprep.subr.mxu0 0.0
    %656 = vmatpush1.msra.mxu0 0.0
    %657 = vmatprep.subr.mxu0 0.0
    %658 = vmatpush1.msra.mxu0 0.0
    %659 = vmatprep.subr.mxu0 0.0
    %660 = vmatpush1.msra.mxu0 0.0
    %661 = vmatprep.subr.mxu0 0.0
    %662 = vmatpush1.msra.mxu0 0.0
    %663 = vmatprep.subr.mxu0 0.0
    %664 = vmatpush1.msra.mxu0 0.0
    %665 = vmatprep.subr.mxu0 0.0
    %666 = vmatpush1.msra.mxu0 0.0
    %667 = vmatprep.subr.mxu0 0.0
    %668 = vmatpush1.msra.mxu0 0.0
    %669 = vmatprep.subr.mxu0 0.0
    %670 = vmatpush1.msra.mxu0 0.0
    %671 = vmatprep.subr.mxu0 0.0
    %672 = vmatpush1.msra.mxu0 0.0
    %673 = vmatprep.subr.mxu0 0.0
    %674 = vmatpush1.msra.mxu0 0.0
    %675 = vmatprep.subr.mxu0 0.0
    %676 = vmatpush1.msra.mxu0 0.0
    %677 = vmatprep.subr.mxu0 0.0
    %678 = vmatpush1.msra.mxu0 0.0
    %679 = vmatprep.subr.mxu0 0.0
    %680 = vmatpush1.msra.mxu0 0.0
    %681 = vmatprep.subr.mxu0 0.0
    %682 = vmatpush1.msra.mxu0 0.0
    %683 = vmatprep.subr.mxu0 0.0
    %684 = vmatpush1.msra.mxu0 0.0
    %685 = vmatprep.subr.mxu0 0.0
    %686 = vmatpush1.msra.mxu0 0.0
    %687 = vmatprep.subr.mxu0 0.0
    %688 = vmatpush1.msra.mxu0 0.0
    %689 = vmatprep.subr.mxu0 0.0
    %690 = vmatpush1.msra.mxu0 0.0
    %691 = vmatprep.subr.mxu0 0.0
    %692 = vmatpush1.msra.mxu0 0.0
    %693 = vmatprep.subr.mxu0 0.0
    %694 = vmatpush1.msra.mxu0 0.0
    %695 = vmatprep.mubr.f32.mxu0 0.0
    %696 = vmatmul.mubr.f32.gmra.mrb[0].mxu0 %v302
    %v697 = vpop.f32.mrb[0].mxu0
    %v698 = vadd.f32 0.0, %v697
    %v699 = vpop.f32.mrb[0].mxu0
    %v700 = vadd.f32 0.0, %v699
    %701 = vdwg.mxu0
    %702 = vmatprep.subr.mxu0 %v282
    %703 = vmatpush1.msra.mxu0 %v281
    %704 = vmatprep.subr.mxu0 %v339
    %705 = vmatpush1.msra.mxu0 %v336
    %706 = vmatprep.subr.mxu0 0.0
    %707 = vmatpush1.msra.mxu0 0.0
    %708 = vmatprep.subr.mxu0 0.0
    %709 = vmatpush1.msra.mxu0 0.0
    %710 = vmatprep.subr.mxu0 0.0
    %711 = vmatpush1.msra.mxu0 0.0
    %712 = vmatprep.subr.mxu0 0.0
    %713 = vmatpush1.msra.mxu0 0.0
    %714 = vmatprep.subr.mxu0 0.0
    %715 = vmatpush1.msra.mxu0 0.0
    %716 = vmatprep.subr.mxu0 0.0
    %717 = vmatpush1.msra.mxu0 0.0
    %718 = vmatprep.subr.mxu0 0.0
    %719 = vmatpush1.msra.mxu0 0.0
    %720 = vmatprep.subr.mxu0 0.0
    %721 = vmatpush1.msra.mxu0 0.0
    %722 = vmatprep.subr.mxu0 0.0
    %723 = vmatpush1.msra.mxu0 0.0
    %724 = vmatprep.subr.mxu0 0.0
    %725 = vmatpush1.msra.mxu0 0.0
    %726 = vmatprep.subr.mxu0 0.0
    %727 = vmatpush1.msra.mxu0 0.0
    %728 = vmatprep.subr.mxu0 0.0
    %729 = vmatpush1.msra.mxu0 0.0
    %730 = vmatprep.subr.mxu0 0.0
    %731 = vmatpush1.msra.mxu0 0.0
    %732 = vmatprep.subr.mxu0 0.0
    %733 = vmatpush1.msra.mxu0 0.0
    %734 = vmatprep.subr.mxu0 0.0
    %735 = vmatpush1.msra.mxu0 0.0
    %736 = vmatprep.subr.mxu0 0.0
    %737 = vmatpush1.msra.mxu0 0.0
    %738 = vmatprep.subr.mxu0 0.0
    %739 = vmatpush1.msra.mxu0 0.0
    %740 = vmatprep.subr.mxu0 0.0
    %741 = vmatpush1.msra.mxu0 0.0
    %742 = vmatprep.subr.mxu0 0.0
    %743 = vmatpush1.msra.mxu0 0.0
    %744 = vmatprep.subr.mxu0 0.0
    %745 = vmatpush1.msra.mxu0 0.0
    %746 = vmatprep.subr.mxu0 0.0
    %747 = vmatpush1.msra.mxu0 0.0
    %748 = vmatprep.subr.mxu0 0.0
    %749 = vmatpush1.msra.mxu0 0.0
    %750 = vmatprep.subr.mxu0 0.0
    %751 = vmatpush1.msra.mxu0 0.0
    %752 = vmatprep.subr.mxu0 0.0
    %753 = vmatpush1.msra.mxu0 0.0
    %754 = vmatprep.subr.mxu0 0.0
    %755 = vmatpush1.msra.mxu0 0.0
    %756 = vmatprep.subr.mxu0 0.0
    %757 = vmatpush1.msra.mxu0 0.0
    %758 = vmatprep.subr.mxu0 0.0
    %759 = vmatpush1.msra.mxu0 0.0
    %760 = vmatprep.subr.mxu0 0.0
    %761 = vmatpush1.msra.mxu0 0.0
    %762 = vmatprep.subr.mxu0 0.0
    %763 = vmatpush1.msra.mxu0 0.0
    %764 = vmatprep.subr.mxu0 0.0
    %765 = vmatpush1.msra.mxu0 0.0
    %766 = vmatprep.mubr.f32.mxu0 0.0
    %767 = vmatmul.mubr.f32.gmra.mrb[0].mxu0 %v302
    %v768 = vpop.f32.mrb[0].mxu0
    %v769 = vadd.f32 0.0, %v768
    %v770 = vpop.f32.mrb[0].mxu0
    %v771 = vadd.f32 0.0, %v770
    %772 = vdwg.mxu0
    %773 = vmatprep.subr.mxu0 %v284
    %774 = vmatpush1.msra.mxu0 %v283
    %775 = vmatprep.subr.mxu0 %v345
    %776 = vmatpush1.msra.mxu0 %v342
    %777 = vmatprep.subr.mxu0 0.0
    %778 = vmatpush1.msra.mxu0 0.0
    %779 = vmatprep.subr.mxu0 0.0
    %780 = vmatpush1.msra.mxu0 0.0
    %781 = vmatprep.subr.mxu0 0.0
    %782 = vmatpush1.msra.mxu0 0.0
    %783 = vmatprep.subr.mxu0 0.0
    %784 = vmatpush1.msra.mxu0 0.0
    %785 = vmatprep.subr.mxu0 0.0
    %786 = vmatpush1.msra.mxu0 0.0
    %787 = vmatprep.subr.mxu0 0.0
    %788 = vmatpush1.msra.mxu0 0.0
    %789 = vmatprep.subr.mxu0 0.0
    %790 = vmatpush1.msra.mxu0 0.0
    %791 = vmatprep.subr.mxu0 0.0
    %792 = vmatpush1.msra.mxu0 0.0
    %793 = vmatprep.subr.mxu0 0.0
    %794 = vmatpush1.msra.mxu0 0.0
    %795 = vmatprep.subr.mxu0 0.0
    %796 = vmatpush1.msra.mxu0 0.0
    %797 = vmatprep.subr.mxu0 0.0
    %798 = vmatpush1.msra.mxu0 0.0
    %799 = vmatprep.subr.mxu0 0.0
    %800 = vmatpush1.msra.mxu0 0.0
    %801 = vmatprep.subr.mxu0 0.0
    %802 = vmatpush1.msra.mxu0 0.0
    %803 = vmatprep.subr.mxu0 0.0
    %804 = vmatpush1.msra.mxu0 0.0
    %805 = vmatprep.subr.mxu0 0.0
    %806 = vmatpush1.msra.mxu0 0.0
    %807 = vmatprep.subr.mxu0 0.0
    %808 = vmatpush1.msra.mxu0 0.0
    %809 = vmatprep.subr.mxu0 0.0
    %810 = vmatpush1.msra.mxu0 0.0
    %811 = vmatprep.subr.mxu0 0.0
    %812 = vmatpush1.msra.mxu0 0.0
    %813 = vmatprep.subr.mxu0 0.0
    %814 = vmatpush1.msra.mxu0 0.0
    %815 = vmatprep.subr.mxu0 0.0
    %816 = vmatpush1.msra.mxu0 0.0
    %817 = vmatprep.subr.mxu0 0.0
    %818 = vmatpush1.msra.mxu0 0.0
    %819 = vmatprep.subr.mxu0 0.0
    %820 = vmatpush1.msra.mxu0 0.0
    %821 = vmatprep.subr.mxu0 0.0
    %822 = vmatpush1.msra.mxu0 0.0
    %823 = vmatprep.subr.mxu0 0.0
    %824 = vmatpush1.msra.mxu0 0.0
    %825 = vmatprep.subr.mxu0 0.0
    %826 = vmatpush1.msra.mxu0 0.0
    %827 = vmatprep.subr.mxu0 0.0
    %828 = vmatpush1.msra.mxu0 0.0
    %829 = vmatprep.subr.mxu0 0.0
    %830 = vmatpush1.msra.mxu0 0.0
    %831 = vmatprep.subr.mxu0 0.0
    %832 = vmatpush1.msra.mxu0 0.0
    %833 = vmatprep.subr.mxu0 0.0
    %834 = vmatpush1.msra.mxu0 0.0
    %835 = vmatprep.subr.mxu0 0.0
    %836 = vmatpush1.msra.mxu0 0.0
    %837 = vmatprep.mubr.f32.mxu0 0.0
    %838 = vmatmul.mubr.f32.gmra.mrb[0].mxu0 %v302
    %v839 = vpop.f32.mrb[0].mxu0
    %v840 = vadd.f32 0.0, %v839
    %v841 = vpop.f32.mrb[0].mxu0
    %v842 = vadd.f32 0.0, %v841
    %843 = vdwg.mxu0
    %844 = vst [vmem:[#allocation3] sm:$0xff] %v414
    %845 = vst [vmem:[#allocation3 + $0x8] sm:$0xff] %v416
    %846 = vst [vmem:[#allocation3 + $0x10] sm:$0xff] %v485
    %847 = vst [vmem:[#allocation3 + $0x18] sm:$0xff] %v487
    %848 = vst [vmem:[#allocation3 + $0x20] sm:$0xff] %v556
    %849 = vst [vmem:[#allocation3 + $0x28] sm:$0xff] %v558
    %850 = vst [vmem:[#allocation3 + $0x30] sm:$0xff] %v627
    %851 = vst [vmem:[#allocation3 + $0x38] sm:$0xff] %v629
    %852 = vst [vmem:[#allocation3 + $0x40] sm:$0xff] %v698
    %853 = vst [vmem:[#allocation3 + $0x48] sm:$0xff] %v700
    %854 = vst [vmem:[#allocation3 + $0x50] sm:$0xff] %v769
    %855 = vst [vmem:[#allocation3 + $0x58] sm:$0xff] %v771
    %856 = vst [vmem:[#allocation3 + $0x60] sm:$0xff] %v840
    %857 = vst [vmem:[#allocation3 + $0x68] sm:$0xff] %v842
    %v858 = vld [vmem:[#allocation2 + $0x8] sm:$0xff]
    %v859 = vld [vmem:[#allocation2 + $0x10] sm:$0xff]
    %v860 = vld [vmem:[#allocation2 + $0x18] sm:$0xff]
    %v861 = vld [vmem:[#allocation2 + $0x20] sm:$0xff]
    %v862 = vld [vmem:[#allocation2 + $0x28] sm:$0xff]
    %v863 = vld [vmem:[#allocation2 + $0x30] sm:$0xff]
    %v864 = vld [vmem:[#allocation2 + $0x38] sm:$0xff]
    %v865 = vld [vmem:[#allocation2 + $0x40] sm:$0xff]
    %v866 = vld [vmem:[#allocation2 + $0x48] sm:$0xff]
    %v867 = vld [vmem:[#allocation2 + $0x50] sm:$0xff]
    %v868 = vld [vmem:[#allocation2 + $0x58] sm:$0xff]
    %v869 = vld [vmem:[#allocation2 + $0x60] sm:$0xff]
    %v870 = vld [vmem:[#allocation2 + $0x68] sm:$0xff]
    %v871 = vld [vmem:[#allocation2 + $0x70] sm:$0xff]
    %v872 = vld [vmem:[#allocation2 + $0x88] sm:$0xf]
    %v873 = vld [vmem:[#allocation2 + $0x90] sm:$0xf]
    %v874 = vld [vmem:[#allocation2 + $0x98] sm:$0xf]
    %v875 = vld [vmem:[#allocation2 + $0xa0] sm:$0xf]
    %v876 = vld [vmem:[#allocation2 + $0xa8] sm:$0xf]
    %v877 = vld [vmem:[#allocation2 + $0xb0] sm:$0xf]
    %v878 = vld [vmem:[#allocation2 + $0xb8] sm:$0xf]
    %v879 = vld [vmem:[#allocation2 + $0xc0] sm:$0xf]
    %v880 = vld [vmem:[#allocation2 + $0xc8] sm:$0xf]
    %v881 = vld [vmem:[#allocation2 + $0xd0] sm:$0xf]
    %v882 = vld [vmem:[#allocation2 + $0xd8] sm:$0xf]
    %v883 = vld [vmem:[#allocation2 + $0xe0] sm:$0xf]
    %v884 = vld [vmem:[#allocation2 + $0xe8] sm:$0xf]
    %v885 = vld [vmem:[#allocation2 + $0xf0] sm:$0xf]
    %s886 = scalar_lea.vmem [#allocation7], 8
    %v887 = vld [vmem:[%s886] sm:$0xff]
    %v889 = vsel %vm300, %v887, 0
    %v892 = vsel %vm304, %v872, 0
    %v895 = vsel %vm304, %v873, 0
    %v898 = vsel %vm304, %v874, 0
    %v901 = vsel %vm304, %v875, 0
    %v904 = vsel %vm304, %v876, 0
    %v907 = vsel %vm304, %v877, 0
    %v910 = vsel %vm304, %v878, 0
    %v913 = vsel %vm304, %v879, 0
    %v916 = vsel %vm304, %v880, 0
    %v919 = vsel %vm304, %v881, 0
    %v922 = vsel %vm304, %v882, 0
    %v925 = vsel %vm304, %v883, 0
    %v928 = vsel %vm304, %v884, 0
    %v931 = vsel %vm304, %v885, 0
    %933 = vmatprep.subr.mxu0 %v859
    %934 = vmatpush1.msra.mxu0 %v858
    %935 = vmatprep.subr.mxu0 %v895
    %936 = vmatpush1.msra.mxu0 %v892
    %937 = vmatprep.subr.mxu0 0.0
    %938 = vmatpush1.msra.mxu0 0.0
    %939 = vmatprep.subr.mxu0 0.0
    %940 = vmatpush1.msra.mxu0 0.0
    %941 = vmatprep.subr.mxu0 0.0
    %942 = vmatpush1.msra.mxu0 0.0
    %943 = vmatprep.subr.mxu0 0.0
    %944 = vmatpush1.msra.mxu0 0.0
    %945 = vmatprep.subr.mxu0 0.0
    %946 = vmatpush1.msra.mxu0 0.0
    %947 = vmatprep.subr.mxu0 0.0
    %948 = vmatpush1.msra.mxu0 0.0
    %949 = vmatprep.subr.mxu0 0.0
    %950 = vmatpush1.msra.mxu0 0.0
    %951 = vmatprep.subr.mxu0 0.0
    %952 = vmatpush1.msra.mxu0 0.0
    %953 = vmatprep.subr.mxu0 0.0
    %954 = vmatpush1.msra.mxu0 0.0
    %955 = vmatprep.subr.mxu0 0.0
    %956 = vmatpush1.msra.mxu0 0.0
    %957 = vmatprep.subr.mxu0 0.0
    %958 = vmatpush1.msra.mxu0 0.0
    %959 = vmatprep.subr.mxu0 0.0
    %960 = vmatpush1.msra.mxu0 0.0
    %961 = vmatprep.subr.mxu0 0.0
    %962 = vmatpush1.msra.mxu0 0.0
    %963 = vmatprep.subr.mxu0 0.0
    %964 = vmatpush1.msra.mxu0 0.0
    %965 = vmatprep.subr.mxu0 0.0
    %966 = vmatpush1.msra.mxu0 0.0
    %967 = vmatprep.subr.mxu0 0.0
    %968 = vmatpush1.msra.mxu0 0.0
    %969 = vmatprep.subr.mxu0 0.0
    %970 = vmatpush1.msra.mxu0 0.0
    %971 = vmatprep.subr.mxu0 0.0
    %972 = vmatpush1.msra.mxu0 0.0
    %973 = vmatprep.subr.mxu0 0.0
    %974 = vmatpush1.msra.mxu0 0.0
    %975 = vmatprep.subr.mxu0 0.0
    %976 = vmatpush1.msra.mxu0 0.0
    %977 = vmatprep.subr.mxu0 0.0
    %978 = vmatpush1.msra.mxu0 0.0
    %979 = vmatprep.subr.mxu0 0.0
    %980 = vmatpush1.msra.mxu0 0.0
    %981 = vmatprep.subr.mxu0 0.0
    %982 = vmatpush1.msra.mxu0 0.0
    %983 = vmatprep.subr.mxu0 0.0
    %984 = vmatpush1.msra.mxu0 0.0
    %985 = vmatprep.subr.mxu0 0.0
    %986 = vmatpush1.msra.mxu0 0.0
    %987 = vmatprep.subr.mxu0 0.0
    %988 = vmatpush1.msra.mxu0 0.0
    %989 = vmatprep.subr.mxu0 0.0
    %990 = vmatpush1.msra.mxu0 0.0
    %991 = vmatprep.subr.mxu0 0.0
    %992 = vmatpush1.msra.mxu0 0.0
    %993 = vmatprep.subr.mxu0 0.0
    %994 = vmatpush1.msra.mxu0 0.0
    %995 = vmatprep.subr.mxu0 0.0
    %996 = vmatpush1.msra.mxu0 0.0
    %997 = vmatprep.mubr.f32.mxu0 0.0
    %998 = vmatmul.mubr.f32.gmra.mrb[0].mxu0 %v889
    %v999 = vpop.f32.mrb[0].mxu0
    %v1000 = vadd.f32 0.0, %v999
    %v1001 = vpop.f32.mrb[0].mxu0
    %v1002 = vadd.f32 0.0, %v1001
    %1003 = vdwg.mxu0
    %1004 = vmatprep.subr.mxu0 %v861
    %1005 = vmatpush1.msra.mxu0 %v860
    %1006 = vmatprep.subr.mxu0 %v901
    %1007 = vmatpush1.msra.mxu0 %v898
    %1008 = vmatprep.subr.mxu0 0.0
    %1009 = vmatpush1.msra.mxu0 0.0
    %1010 = vmatprep.subr.mxu0 0.0
    %1011 = vmatpush1.msra.mxu0 0.0
    %1012 = vmatprep.subr.mxu0 0.0
    %1013 = vmatpush1.msra.mxu0 0.0
    %1014 = vmatprep.subr.mxu0 0.0
    %1015 = vmatpush1.msra.mxu0 0.0
    %1016 = vmatprep.subr.mxu0 0.0
    %1017 = vmatpush1.msra.mxu0 0.0
    %1018 = vmatprep.subr.mxu0 0.0
    %1019 = vmatpush1.msra.mxu0 0.0
    %1020 = vmatprep.subr.mxu0 0.0
    %1021 = vmatpush1.msra.mxu0 0.0
    %1022 = vmatprep.subr.mxu0 0.0
    %1023 = vmatpush1.msra.mxu0 0.0
    %1024 = vmatprep.subr.mxu0 0.0
    %1025 = vmatpush1.msra.mxu0 0.0
    %1026 = vmatprep.subr.mxu0 0.0
    %1027 = vmatpush1.msra.mxu0 0.0
    %1028 = vmatprep.subr.mxu0 0.0
    %1029 = vmatpush1.msra.mxu0 0.0
    %1030 = vmatprep.subr.mxu0 0.0
    %1031 = vmatpush1.msra.mxu0 0.0
    %1032 = vmatprep.subr.mxu0 0.0
    %1033 = vmatpush1.msra.mxu0 0.0
    %1034 = vmatprep.subr.mxu0 0.0
    %1035 = vmatpush1.msra.mxu0 0.0
    %1036 = vmatprep.subr.mxu0 0.0
    %1037 = vmatpush1.msra.mxu0 0.0
    %1038 = vmatprep.subr.mxu0 0.0
    %1039 = vmatpush1.msra.mxu0 0.0
    %1040 = vmatprep.subr.mxu0 0.0
    %1041 = vmatpush1.msra.mxu0 0.0
    %1042 = vmatprep.subr.mxu0 0.0
    %1043 = vmatpush1.msra.mxu0 0.0
    %1044 = vmatprep.subr.mxu0 0.0
    %1045 = vmatpush1.msra.mxu0 0.0
    %1046 = vmatprep.subr.mxu0 0.0
    %1047 = vmatpush1.msra.mxu0 0.0
    %1048 = vmatprep.subr.mxu0 0.0
    %1049 = vmatpush1.msra.mxu0 0.0
    %1050 = vmatprep.subr.mxu0 0.0
    %1051 = vmatpush1.msra.mxu0 0.0
    %1052 = vmatprep.subr.mxu0 0.0
    %1053 = vmatpush1.msra.mxu0 0.0
    %1054 = vmatprep.subr.mxu0 0.0
    %1055 = vmatpush1.msra.mxu0 0.0
    %1056 = vmatprep.subr.mxu0 0.0
    %1057 = vmatpush1.msra.mxu0 0.0
    %1058 = vmatprep.subr.mxu0 0.0
    %1059 = vmatpush1.msra.mxu0 0.0
    %1060 = vmatprep.subr.mxu0 0.0
    %1061 = vmatpush1.msra.mxu0 0.0
    %1062 = vmatprep.subr.mxu0 0.0
    %1063 = vmatpush1.msra.mxu0 0.0
    %1064 = vmatprep.subr.mxu0 0.0
    %1065 = vmatpush1.msra.mxu0 0.0
    %1066 = vmatprep.subr.mxu0 0.0
    %1067 = vmatpush1.msra.mxu0 0.0
    %1068 = vmatprep.mubr.f32.mxu0 0.0
    %1069 = vmatmul.mubr.f32.gmra.mrb[0].mxu0 %v889
    %v1070 = vpop.f32.mrb[0].mxu0
    %v1071 = vadd.f32 0.0, %v1070
    %v1072 = vpop.f32.mrb[0].mxu0
    %v1073 = vadd.f32 0.0, %v1072
    %1074 = vdwg.mxu0
    %1075 = vmatprep.subr.mxu0 %v863
    %1076 = vmatpush1.msra.mxu0 %v862
    %1077 = vmatprep.subr.mxu0 %v907
    %1078 = vmatpush1.msra.mxu0 %v904
    %1079 = vmatprep.subr.mxu0 0.0
    %1080 = vmatpush1.msra.mxu0 0.0
    %1081 = vmatprep.subr.mxu0 0.0
    %1082 = vmatpush1.msra.mxu0 0.0
    %1083 = vmatprep.subr.mxu0 0.0
    %1084 = vmatpush1.msra.mxu0 0.0
    %1085 = vmatprep.subr.mxu0 0.0
    %1086 = vmatpush1.msra.mxu0 0.0
    %1087 = vmatprep.subr.mxu0 0.0
    %1088 = vmatpush1.msra.mxu0 0.0
    %1089 = vmatprep.subr.mxu0 0.0
    %1090 = vmatpush1.msra.mxu0 0.0
    %1091 = vmatprep.subr.mxu0 0.0
    %1092 = vmatpush1.msra.mxu0 0.0
    %1093 = vmatprep.subr.mxu0 0.0
    %1094 = vmatpush1.msra.mxu0 0.0
    %1095 = vmatprep.subr.mxu0 0.0
    %1096 = vmatpush1.msra.mxu0 0.0
    %1097 = vmatprep.subr.mxu0 0.0
    %1098 = vmatpush1.msra.mxu0 0.0
    %1099 = vmatprep.subr.mxu0 0.0
    %1100 = vmatpush1.msra.mxu0 0.0
    %1101 = vmatprep.subr.mxu0 0.0
    %1102 = vmatpush1.msra.mxu0 0.0
    %1103 = vmatprep.subr.mxu0 0.0
    %1104 = vmatpush1.msra.mxu0 0.0
    %1105 = vmatprep.subr.mxu0 0.0
    %1106 = vmatpush1.msra.mxu0 0.0
    %1107 = vmatprep.subr.mxu0 0.0
    %1108 = vmatpush1.msra.mxu0 0.0
    %1109 = vmatprep.subr.mxu0 0.0
    %1110 = vmatpush1.msra.mxu0 0.0
    %1111 = vmatprep.subr.mxu0 0.0
    %1112 = vmatpush1.msra.mxu0 0.0
    %1113 = vmatprep.subr.mxu0 0.0
    %1114 = vmatpush1.msra.mxu0 0.0
    %1115 = vmatprep.subr.mxu0 0.0
    %1116 = vmatpush1.msra.mxu0 0.0
    %1117 = vmatprep.subr.mxu0 0.0
    %1118 = vmatpush1.msra.mxu0 0.0
    %1119 = vmatprep.subr.mxu0 0.0
    %1120 = vmatpush1.msra.mxu0 0.0
    %1121 = vmatprep.subr.mxu0 0.0
    %1122 = vmatpush1.msra.mxu0 0.0
    %1123 = vmatprep.subr.mxu0 0.0
    %1124 = vmatpush1.msra.mxu0 0.0
    %1125 = vmatprep.subr.mxu0 0.0
    %1126 = vmatpush1.msra.mxu0 0.0
    %1127 = vmatprep.subr.mxu0 0.0
    %1128 = vmatpush1.msra.mxu0 0.0
    %1129 = vmatprep.subr.mxu0 0.0
    %1130 = vmatpush1.msra.mxu0 0.0
    %1131 = vmatprep.subr.mxu0 0.0
    %1132 = vmatpush1.msra.mxu0 0.0
    %1133 = vmatprep.subr.mxu0 0.0
    %1134 = vmatpush1.msra.mxu0 0.0
    %1135 = vmatprep.subr.mxu0 0.0
    %1136 = vmatpush1.msra.mxu0 0.0
    %1137 = vmatprep.subr.mxu0 0.0
    %1138 = vmatpush1.msra.mxu0 0.0
    %1139 = vmatprep.mubr.f32.mxu0 0.0
    %1140 = vmatmul.mubr.f32.gmra.mrb[0].mxu0 %v889
    %v1141 = vpop.f32.mrb[0].mxu0
    %v1142 = vadd.f32 0.0, %v1141
    %v1143 = vpop.f32.mrb[0].mxu0
    %v1144 = vadd.f32 0.0, %v1143
    %1145 = vdwg.mxu0
    %1146 = vmatprep.subr.mxu0 %v865
    %1147 = vmatpush1.msra.mxu0 %v864
    %1148 = vmatprep.subr.mxu0 %v913
    %1149 = vmatpush1.msra.mxu0 %v910
    %1150 = vmatprep.subr.mxu0 0.0
    %1151 = vmatpush1.msra.mxu0 0.0
    %1152 = vmatprep.subr.mxu0 0.0
    %1153 = vmatpush1.msra.mxu0 0.0
    %1154 = vmatprep.subr.mxu0 0.0
    %1155 = vmatpush1.msra.mxu0 0.0
    %1156 = vmatprep.subr.mxu0 0.0
    %1157 = vmatpush1.msra.mxu0 0.0
    %1158 = vmatprep.subr.mxu0 0.0
    %1159 = vmatpush1.msra.mxu0 0.0
    %1160 = vmatprep.subr.mxu0 0.0
    %1161 = vmatpush1.msra.mxu0 0.0
    %1162 = vmatprep.subr.mxu0 0.0
    %1163 = vmatpush1.msra.mxu0 0.0
    %1164 = vmatprep.subr.mxu0 0.0
    %1165 = vmatpush1.msra.mxu0 0.0
    %1166 = vmatprep.subr.mxu0 0.0
    %1167 = vmatpush1.msra.mxu0 0.0
    %1168 = vmatprep.subr.mxu0 0.0
    %1169 = vmatpush1.msra.mxu0 0.0
    %1170 = vmatprep.subr.mxu0 0.0
    %1171 = vmatpush1.msra.mxu0 0.0
    %1172 = vmatprep.subr.mxu0 0.0
    %1173 = vmatpush1.msra.mxu0 0.0
    %1174 = vmatprep.subr.mxu0 0.0
    %1175 = vmatpush1.msra.mxu0 0.0
    %1176 = vmatprep.subr.mxu0 0.0
    %1177 = vmatpush1.msra.mxu0 0.0
    %1178 = vmatprep.subr.mxu0 0.0
    %1179 = vmatpush1.msra.mxu0 0.0
    %1180 = vmatprep.subr.mxu0 0.0
    %1181 = vmatpush1.msra.mxu0 0.0
    %1182 = vmatprep.subr.mxu0 0.0
    %1183 = vmatpush1.msra.mxu0 0.0
    %1184 = vmatprep.subr.mxu0 0.0
    %1185 = vmatpush1.msra.mxu0 0.0
    %1186 = vmatprep.subr.mxu0 0.0
    %1187 = vmatpush1.msra.mxu0 0.0
    %1188 = vmatprep.subr.mxu0 0.0
    %1189 = vmatpush1.msra.mxu0 0.0
    %1190 = vmatprep.subr.mxu0 0.0
    %1191 = vmatpush1.msra.mxu0 0.0
    %1192 = vmatprep.subr.mxu0 0.0
    %1193 = vmatpush1.msra.mxu0 0.0
    %1194 = vmatprep.subr.mxu0 0.0
    %1195 = vmatpush1.msra.mxu0 0.0
    %1196 = vmatprep.subr.mxu0 0.0
    %1197 = vmatpush1.msra.mxu0 0.0
    %1198 = vmatprep.subr.mxu0 0.0
    %1199 = vmatpush1.msra.mxu0 0.0
    %1200 = vmatprep.subr.mxu0 0.0
    %1201 = vmatpush1.msra.mxu0 0.0
    %1202 = vmatprep.subr.mxu0 0.0
    %1203 = vmatpush1.msra.mxu0 0.0
    %1204 = vmatprep.subr.mxu0 0.0
    %1205 = vmatpush1.msra.mxu0 0.0
    %1206 = vmatprep.subr.mxu0 0.0
    %1207 = vmatpush1.msra.mxu0 0.0
    %1208 = vmatprep.subr.mxu0 0.0
    %1209 = vmatpush1.msra.mxu0 0.0
    %1210 = vmatprep.mubr.f32.mxu0 0.0
    %1211 = vmatmul.mubr.f32.gmra.mrb[0].mxu0 %v889
    %v1212 = vpop.f32.mrb[0].mxu0
    %v1213 = vadd.f32 0.0, %v1212
    %v1214 = vpop.f32.mrb[0].mxu0
    %v1215 = vadd.f32 0.0, %v1214
    %1216 = vdwg.mxu0
    %1217 = vmatprep.subr.mxu0 %v867
    %1218 = vmatpush1.msra.mxu0 %v866
    %1219 = vmatprep.subr.mxu0 %v919
    %1220 = vmatpush1.msra.mxu0 %v916
    %1221 = vmatprep.subr.mxu0 0.0
    %1222 = vmatpush1.msra.mxu0 0.0
    %1223 = vmatprep.subr.mxu0 0.0
    %1224 = vmatpush1.msra.mxu0 0.0
    %1225 = vmatprep.subr.mxu0 0.0
    %1226 = vmatpush1.msra.mxu0 0.0
    %1227 = vmatprep.subr.mxu0 0.0
    %1228 = vmatpush1.msra.mxu0 0.0
    %1229 = vmatprep.subr.mxu0 0.0
    %1230 = vmatpush1.msra.mxu0 0.0
    %1231 = vmatprep.subr.mxu0 0.0
    %1232 = vmatpush1.msra.mxu0 0.0
    %1233 = vmatprep.subr.mxu0 0.0
    %1234 = vmatpush1.msra.mxu0 0.0
    %1235 = vmatprep.subr.mxu0 0.0
    %1236 = vmatpush1.msra.mxu0 0.0
    %1237 = vmatprep.subr.mxu0 0.0
    %1238 = vmatpush1.msra.mxu0 0.0
    %1239 = vmatprep.subr.mxu0 0.0
    %1240 = vmatpush1.msra.mxu0 0.0
    %1241 = vmatprep.subr.mxu0 0.0
    %1242 = vmatpush1.msra.mxu0 0.0
    %1243 = vmatprep.subr.mxu0 0.0
    %1244 = vmatpush1.msra.mxu0 0.0
    %1245 = vmatprep.subr.mxu0 0.0
    %1246 = vmatpush1.msra.mxu0 0.0
    %1247 = vmatprep.subr.mxu0 0.0
    %1248 = vmatpush1.msra.mxu0 0.0
    %1249 = vmatprep.subr.mxu0 0.0
    %1250 = vmatpush1.msra.mxu0 0.0
    %1251 = vmatprep.subr.mxu0 0.0
    %1252 = vmatpush1.msra.mxu0 0.0
    %1253 = vmatprep.subr.mxu0 0.0
    %1254 = vmatpush1.msra.mxu0 0.0
    %1255 = vmatprep.subr.mxu0 0.0
    %1256 = vmatpush1.msra.mxu0 0.0
    %1257 = vmatprep.subr.mxu0 0.0
    %1258 = vmatpush1.msra.mxu0 0.0
    %1259 = vmatprep.subr.mxu0 0.0
    %1260 = vmatpush1.msra.mxu0 0.0
    %1261 = vmatprep.subr.mxu0 0.0
    %1262 = vmatpush1.msra.mxu0 0.0
    %1263 = vmatprep.subr.mxu0 0.0
    %1264 = vmatpush1.msra.mxu0 0.0
    %1265 = vmatprep.subr.mxu0 0.0
    %1266 = vmatpush1.msra.mxu0 0.0
    %1267 = vmatprep.subr.mxu0 0.0
    %1268 = vmatpush1.msra.mxu0 0.0
    %1269 = vmatprep.subr.mxu0 0.0
    %1270 = vmatpush1.msra.mxu0 0.0
    %1271 = vmatprep.subr.mxu0 0.0
    %1272 = vmatpush1.msra.mxu0 0.0
    %1273 = vmatprep.subr.mxu0 0.0
    %1274 = vmatpush1.msra.mxu0 0.0
    %1275 = vmatprep.subr.mxu0 0.0
    %1276 = vmatpush1.msra.mxu0 0.0
    %1277 = vmatprep.subr.mxu0 0.0
    %1278 = vmatpush1.msra.mxu0 0.0
    %1279 = vmatprep.subr.mxu0 0.0
    %1280 = vmatpush1.msra.mxu0 0.0
    %1281 = vmatprep.mubr.f32.mxu0 0.0
    %1282 = vmatmul.mubr.f32.gmra.mrb[0].mxu0 %v889
    %v1283 = vpop.f32.mrb[0].mxu0
    %v1284 = vadd.f32 0.0, %v1283
    %v1285 = vpop.f32.mrb[0].mxu0
    %v1286 = vadd.f32 0.0, %v1285
    %1287 = vdwg.mxu0
    %1288 = vmatprep.subr.mxu0 %v869
    %1289 = vmatpush1.msra.mxu0 %v868
    %1290 = vmatprep.subr.mxu0 %v925
    %1291 = vmatpush1.msra.mxu0 %v922
    %1292 = vmatprep.subr.mxu0 0.0
    %1293 = vmatpush1.msra.mxu0 0.0
    %1294 = vmatprep.subr.mxu0 0.0
    %1295 = vmatpush1.msra.mxu0 0.0
    %1296 = vmatprep.subr.mxu0 0.0
    %1297 = vmatpush1.msra.mxu0 0.0
    %1298 = vmatprep.subr.mxu0 0.0
    %1299 = vmatpush1.msra.mxu0 0.0
    %1300 = vmatprep.subr.mxu0 0.0
    %1301 = vmatpush1.msra.mxu0 0.0
    %1302 = vmatprep.subr.mxu0 0.0
    %1303 = vmatpush1.msra.mxu0 0.0
    %1304 = vmatprep.subr.mxu0 0.0
    %1305 = vmatpush1.msra.mxu0 0.0
    %1306 = vmatprep.subr.mxu0 0.0
    %1307 = vmatpush1.msra.mxu0 0.0
    %1308 = vmatprep.subr.mxu0 0.0
    %1309 = vmatpush1.msra.mxu0 0.0
    %1310 = vmatprep.subr.mxu0 0.0
    %1311 = vmatpush1.msra.mxu0 0.0
    %1312 = vmatprep.subr.mxu0 0.0
    %1313 = vmatpush1.msra.mxu0 0.0
    %1314 = vmatprep.subr.mxu0 0.0
    %1315 = vmatpush1.msra.mxu0 0.0
    %1316 = vmatprep.subr.mxu0 0.0
    %1317 = vmatpush1.msra.mxu0 0.0
    %1318 = vmatprep.subr.mxu0 0.0
    %1319 = vmatpush1.msra.mxu0 0.0
    %1320 = vmatprep.subr.mxu0 0.0
    %1321 = vmatpush1.msra.mxu0 0.0
    %1322 = vmatprep.subr.mxu0 0.0
    %1323 = vmatpush1.msra.mxu0 0.0
    %1324 = vmatprep.subr.mxu0 0.0
    %1325 = vmatpush1.msra.mxu0 0.0
    %1326 = vmatprep.subr.mxu0 0.0
    %1327 = vmatpush1.msra.mxu0 0.0
    %1328 = vmatprep.subr.mxu0 0.0
    %1329 = vmatpush1.msra.mxu0 0.0
    %1330 = vmatprep.subr.mxu0 0.0
    %1331 = vmatpush1.msra.mxu0 0.0
    %1332 = vmatprep.subr.mxu0 0.0
    %1333 = vmatpush1.msra.mxu0 0.0
    %1334 = vmatprep.subr.mxu0 0.0
    %1335 = vmatpush1.msra.mxu0 0.0
    %1336 = vmatprep.subr.mxu0 0.0
    %1337 = vmatpush1.msra.mxu0 0.0
    %1338 = vmatprep.subr.mxu0 0.0
    %1339 = vmatpush1.msra.mxu0 0.0
    %1340 = vmatprep.subr.mxu0 0.0
    %1341 = vmatpush1.msra.mxu0 0.0
    %1342 = vmatprep.subr.mxu0 0.0
    %1343 = vmatpush1.msra.mxu0 0.0
    %1344 = vmatprep.subr.mxu0 0.0
    %1345 = vmatpush1.msra.mxu0 0.0
    %1346 = vmatprep.subr.mxu0 0.0
    %1347 = vmatpush1.msra.mxu0 0.0
    %1348 = vmatprep.subr.mxu0 0.0
    %1349 = vmatpush1.msra.mxu0 0.0
    %1350 = vmatprep.subr.mxu0 0.0
    %1351 = vmatpush1.msra.mxu0 0.0
    %1352 = vmatprep.mubr.f32.mxu0 0.0
    %1353 = vmatmul.mubr.f32.gmra.mrb[0].mxu0 %v889
    %v1354 = vpop.f32.mrb[0].mxu0
    %v1355 = vadd.f32 0.0, %v1354
    %v1356 = vpop.f32.mrb[0].mxu0
    %v1357 = vadd.f32 0.0, %v1356
    %1358 = vdwg.mxu0
    %1359 = vmatprep.subr.mxu0 %v871
    %1360 = vmatpush1.msra.mxu0 %v870
    %1361 = vmatprep.subr.mxu0 %v931
    %1362 = vmatpush1.msra.mxu0 %v928
    %1363 = vmatprep.subr.mxu0 0.0
    %1364 = vmatpush1.msra.mxu0 0.0
    %1365 = vmatprep.subr.mxu0 0.0
    %1366 = vmatpush1.msra.mxu0 0.0
    %1367 = vmatprep.subr.mxu0 0.0
    %1368 = vmatpush1.msra.mxu0 0.0
    %1369 = vmatprep.subr.mxu0 0.0
    %1370 = vmatpush1.msra.mxu0 0.0
    %1371 = vmatprep.subr.mxu0 0.0
    %1372 = vmatpush1.msra.mxu0 0.0
    %1373 = vmatprep.subr.mxu0 0.0
    %1374 = vmatpush1.msra.mxu0 0.0
    %1375 = vmatprep.subr.mxu0 0.0
    %1376 = vmatpush1.msra.mxu0 0.0
    %1377 = vmatprep.subr.mxu0 0.0
    %1378 = vmatpush1.msra.mxu0 0.0
    %1379 = vmatprep.subr.mxu0 0.0
    %1380 = vmatpush1.msra.mxu0 0.0
    %1381 = vmatprep.subr.mxu0 0.0
    %1382 = vmatpush1.msra.mxu0 0.0
    %1383 = vmatprep.subr.mxu0 0.0
    %1384 = vmatpush1.msra.mxu0 0.0
    %1385 = vmatprep.subr.mxu0 0.0
    %1386 = vmatpush1.msra.mxu0 0.0
    %1387 = vmatprep.subr.mxu0 0.0
    %1388 = vmatpush1.msra.mxu0 0.0
    %1389 = vmatprep.subr.mxu0 0.0
    %1390 = vmatpush1.msra.mxu0 0.0
    %1391 = vmatprep.subr.mxu0 0.0
    %1392 = vmatpush1.msra.mxu0 0.0
    %1393 = vmatprep.subr.mxu0 0.0
    %1394 = vmatpush1.msra.mxu0 0.0
    %1395 = vmatprep.subr.mxu0 0.0
    %1396 = vmatpush1.msra.mxu0 0.0
    %1397 = vmatprep.subr.mxu0 0.0
    %1398 = vmatpush1.msra.mxu0 0.0
    %1399 = vmatprep.subr.mxu0 0.0
    %1400 = vmatpush1.msra.mxu0 0.0
    %1401 = vmatprep.subr.mxu0 0.0
    %1402 = vmatpush1.msra.mxu0 0.0
    %1403 = vmatprep.subr.mxu0 0.0
    %1404 = vmatpush1.msra.mxu0 0.0
    %1405 = vmatprep.subr.mxu0 0.0
    %1406 = vmatpush1.msra.mxu0 0.0
    %1407 = vmatprep.subr.mxu0 0.0
    %1408 = vmatpush1.msra.mxu0 0.0
    %1409 = vmatprep.subr.mxu0 0.0
    %1410 = vmatpush1.msra.mxu0 0.0
    %1411 = vmatprep.subr.mxu0 0.0
    %1412 = vmatpush1.msra.mxu0 0.0
    %1413 = vmatprep.subr.mxu0 0.0
    %1414 = vmatpush1.msra.mxu0 0.0
    %1415 = vmatprep.subr.mxu0 0.0
    %1416 = vmatpush1.msra.mxu0 0.0
    %1417 = vmatprep.subr.mxu0 0.0
    %1418 = vmatpush1.msra.mxu0 0.0
    %1419 = vmatprep.subr.mxu0 0.0
    %1420 = vmatpush1.msra.mxu0 0.0
    %1421 = vmatprep.subr.mxu0 0.0
    %1422 = vmatpush1.msra.mxu0 0.0
    %1423 = vmatprep.mubr.f32.mxu0 0.0
    %1424 = vmatmul.mubr.f32.gmra.mrb[0].mxu0 %v889
    %v1425 = vpop.f32.mrb[0].mxu0
    %v1426 = vadd.f32 0.0, %v1425
    %v1427 = vpop.f32.mrb[0].mxu0
    %v1428 = vadd.f32 0.0, %v1427
    %1429 = vdwg.mxu0
    %v1430 = vld [vmem:[#allocation3] sm:$0xff]
    %v1431 = vld [vmem:[#allocation3 + $0x8] sm:$0xff]
    %v1432 = vld [vmem:[#allocation3 + $0x10] sm:$0xff]
    %v1433 = vld [vmem:[#allocation3 + $0x18] sm:$0xff]
    %v1434 = vld [vmem:[#allocation3 + $0x20] sm:$0xff]
    %v1435 = vld [vmem:[#allocation3 + $0x28] sm:$0xff]
    %v1436 = vld [vmem:[#allocation3 + $0x30] sm:$0xff]
    %v1437 = vld [vmem:[#allocation3 + $0x38] sm:$0xff]
    %v1438 = vld [vmem:[#allocation3 + $0x40] sm:$0xff]
    %v1439 = vld [vmem:[#allocation3 + $0x48] sm:$0xff]
    %v1440 = vld [vmem:[#allocation3 + $0x50] sm:$0xff]
    %v1441 = vld [vmem:[#allocation3 + $0x58] sm:$0xff]
    %v1442 = vld [vmem:[#allocation3 + $0x60] sm:$0xff]
    %v1443 = vld [vmem:[#allocation3 + $0x68] sm:$0xff]
    %v1444 = vadd.f32 %v1430, %v1000
    %v1445 = vadd.f32 %v1431, %v1002
    %v1446 = vadd.f32 %v1432, %v1071
    %v1447 = vadd.f32 %v1433, %v1073
    %v1448 = vadd.f32 %v1434, %v1142
    %v1449 = vadd.f32 %v1435, %v1144
    %v1450 = vadd.f32 %v1436, %v1213
    %v1451 = vadd.f32 %v1437, %v1215
    %v1452 = vadd.f32 %v1438, %v1284
    %v1453 = vadd.f32 %v1439, %v1286
    %v1454 = vadd.f32 %v1440, %v1355
    %v1455 = vadd.f32 %v1441, %v1357
    %v1456 = vadd.f32 %v1442, %v1426
    %v1457 = vadd.f32 %v1443, %v1428
    %1458 = vst [vmem:[#allocation3] sm:$0xff] %v1444
    %1459 = vst [vmem:[#allocation3 + $0x8] sm:$0xff] %v1445
    %1460 = vst [vmem:[#allocation3 + $0x10] sm:$0xff] %v1446
    %1461 = vst [vmem:[#allocation3 + $0x18] sm:$0xff] %v1447
    %1462 = vst [vmem:[#allocation3 + $0x20] sm:$0xff] %v1448
    %1463 = vst [vmem:[#allocation3 + $0x28] sm:$0xff] %v1449
    %1464 = vst [vmem:[#allocation3 + $0x30] sm:$0xff] %v1450
    %1465 = vst [vmem:[#allocation3 + $0x38] sm:$0xff] %v1451
    %1466 = vst [vmem:[#allocation3 + $0x40] sm:$0xff] %v1452
    %1467 = vst [vmem:[#allocation3 + $0x48] sm:$0xff] %v1453
    %1468 = vst [vmem:[#allocation3 + $0x50] sm:$0xff] %v1454
    %1469 = vst [vmem:[#allocation3 + $0x58] sm:$0xff] %v1455
    %1470 = vst [vmem:[#allocation3 + $0x60] sm:$0xff] %v1456
    %1471 = vst [vmem:[#allocation3 + $0x68] sm:$0xff] %v1457
    %v1472 = vld [vmem:[#allocation2 + $0x10] sm:$0xff]
    %v1473 = vld [vmem:[#allocation2 + $0x18] sm:$0xff]
    %v1474 = vld [vmem:[#allocation2 + $0x20] sm:$0xff]
    %v1475 = vld [vmem:[#allocation2 + $0x28] sm:$0xff]
    %v1476 = vld [vmem:[#allocation2 + $0x30] sm:$0xff]
    %v1477 = vld [vmem:[#allocation2 + $0x38] sm:$0xff]
    %v1478 = vld [vmem:[#allocation2 + $0x40] sm:$0xff]
    %v1479 = vld [vmem:[#allocation2 + $0x48] sm:$0xff]
    %v1480 = vld [vmem:[#allocation2 + $0x50] sm:$0xff]
    %v1481 = vld [vmem:[#allocation2 + $0x58] sm:$0xff]
    %v1482 = vld [vmem:[#allocation2 + $0x60] sm:$0xff]
    %v1483 = vld [vmem:[#allocation2 + $0x68] sm:$0xff]
    %v1484 = vld [vmem:[#allocation2 + $0x70] sm:$0xff]
    %v1485 = vld [vmem:[#allocation2 + $0x78] sm:$0xff]
    %v1486 = vld [vmem:[#allocation2 + $0x90] sm:$0xf]
    %v1487 = vld [vmem:[#allocation2 + $0x98] sm:$0xf]
    %v1488 = vld [vmem:[#allocation2 + $0xa0] sm:$0xf]
    %v1489 = vld [vmem:[#allocation2 + $0xa8] sm:$0xf]
    %v1490 = vld [vmem:[#allocation2 + $0xb0] sm:$0xf]
    %v1491 = vld [vmem:[#allocation2 + $0xb8] sm:$0xf]
    %v1492 = vld [vmem:[#allocation2 + $0xc0] sm:$0xf]
    %v1493 = vld [vmem:[#allocation2 + $0xc8] sm:$0xf]
    %v1494 = vld [vmem:[#allocation2 + $0xd0] sm:$0xf]
    %v1495 = vld [vmem:[#allocation2 + $0xd8] sm:$0xf]
    %v1496 = vld [vmem:[#allocation2 + $0xe0] sm:$0xf]
    %v1497 = vld [vmem:[#allocation2 + $0xe8] sm:$0xf]
    %v1498 = vld [vmem:[#allocation2 + $0xf0] sm:$0xf]
    %v1499 = vld [vmem:[#allocation2 + $0xf8] sm:$0xf]
    %s1500 = scalar_lea.vmem [#allocation7], 16
    %v1501 = vld [vmem:[%s1500] sm:$0xff]
    %v1503 = vsel %vm300, %v1501, 0
    %v1506 = vsel %vm304, %v1486, 0
    %v1509 = vsel %vm304, %v1487, 0
    %v1512 = vsel %vm304, %v1488, 0
    %v1515 = vsel %vm304, %v1489, 0
    %v1518 = vsel %vm304, %v1490, 0
    %v1521 = vsel %vm304, %v1491, 0
    %v1524 = vsel %vm304, %v1492, 0
    %v1527 = vsel %vm304, %v1493, 0
    %v1530 = vsel %vm304, %v1494, 0
    %v1533 = vsel %vm304, %v1495, 0
    %v1536 = vsel %vm304, %v1496, 0
    %v1539 = vsel %vm304, %v1497, 0
    %v1542 = vsel %vm304, %v1498, 0
    %v1545 = vsel %vm304, %v1499, 0
    %1547 = vmatprep.subr.mxu0 %v1473
    %1548 = vmatpush1.msra.mxu0 %v1472
    %1549 = vmatprep.subr.mxu0 %v1509
    %1550 = vmatpush1.msra.mxu0 %v1506
    %1551 = vmatprep.subr.mxu0 0.0
    %1552 = vmatpush1.msra.mxu0 0.0
    %1553 = vmatprep.subr.mxu0 0.0
    %1554 = vmatpush1.msra.mxu0 0.0
    %1555 = vmatprep.subr.mxu0 0.0
    %1556 = vmatpush1.msra.mxu0 0.0
    %1557 = vmatprep.subr.mxu0 0.0
    %1558 = vmatpush1.msra.mxu0 0.0
    %1559 = vmatprep.subr.mxu0 0.0
    %1560 = vmatpush1.msra.mxu0 0.0
    %1561 = vmatprep.subr.mxu0 0.0
    %1562 = vmatpush1.msra.mxu0 0.0
    %1563 = vmatprep.subr.mxu0 0.0
    %1564 = vmatpush1.msra.mxu0 0.0
    %1565 = vmatprep.subr.mxu0 0.0
    %1566 = vmatpush1.msra.mxu0 0.0
    %1567 = vmatprep.subr.mxu0 0.0
    %1568 = vmatpush1.msra.mxu0 0.0
    %1569 = vmatprep.subr.mxu0 0.0
    %1570 = vmatpush1.msra.mxu0 0.0
    %1571 = vmatprep.subr.mxu0 0.0
    %1572 = vmatpush1.msra.mxu0 0.0
    %1573 = vmatprep.subr.mxu0 0.0
    %1574 = vmatpush1.msra.mxu0 0.0
    %1575 = vmatprep.subr.mxu0 0.0
    %1576 = vmatpush1.msra.mxu0 0.0
    %1577 = vmatprep.subr.mxu0 0.0
    %1578 = vmatpush1.msra.mxu0 0.0
    %1579 = vmatprep.subr.mxu0 0.0
    %1580 = vmatpush1.msra.mxu0 0.0
    %1581 = vmatprep.subr.mxu0 0.0
    %1582 = vmatpush1.msra.mxu0 0.0
    %1583 = vmatprep.subr.mxu0 0.0
    %1584 = vmatpush1.msra.mxu0 0.0
    %1585 = vmatprep.subr.mxu0 0.0
    %1586 = vmatpush1.msra.mxu0 0.0
    %1587 = vmatprep.subr.mxu0 0.0
    %1588 = vmatpush1.msra.mxu0 0.0
    %1589 = vmatprep.subr.mxu0 0.0
    %1590 = vmatpush1.msra.mxu0 0.0
    %1591 = vmatprep.subr.mxu0 0.0
    %1592 = vmatpush1.msra.mxu0 0.0
    %1593 = vmatprep.subr.mxu0 0.0
    %1594 = vmatpush1.msra.mxu0 0.0
    %1595 = vmatprep.subr.mxu0 0.0
    %1596 = vmatpush1.msra.mxu0 0.0
    %1597 = vmatprep.subr.mxu0 0.0
    %1598 = vmatpush1.msra.mxu0 0.0
    %1599 = vmatprep.subr.mxu0 0.0
    %1600 = vmatpush1.msra.mxu0 0.0
    %1601 = vmatprep.subr.mxu0 0.0
    %1602 = vmatpush1.msra.mxu0 0.0
    %1603 = vmatprep.subr.mxu0 0.0
    %1604 = vmatpush1.msra.mxu0 0.0
    %1605 = vmatprep.subr.mxu0 0.0
    %1606 = vmatpush1.msra.mxu0 0.0
    %1607 = vmatprep.subr.mxu0 0.0
    %1608 = vmatpush1.msra.mxu0 0.0
    %1609 = vmatprep.subr.mxu0 0.0
    %1610 = vmatpush1.msra.mxu0 0.0
    %1611 = vmatprep.mubr.f32.mxu0 0.0
    %1612 = vmatmul.mubr.f32.gmra.mrb[0].mxu0 %v1503
    %v1613 = vpop.f32.mrb[0].mxu0
    %v1614 = vadd.f32 0.0, %v1613
    %v1615 = vpop.f32.mrb[0].mxu0
    %v1616 = vadd.f32 0.0, %v1615
    %1617 = vdwg.mxu0
    %1618 = vmatprep.subr.mxu0 %v1475
    %1619 = vmatpush1.msra.mxu0 %v1474
    %1620 = vmatprep.subr.mxu0 %v1515
    %1621 = vmatpush1.msra.mxu0 %v1512
    %1622 = vmatprep.subr.mxu0 0.0
    %1623 = vmatpush1.msra.mxu0 0.0
    %1624 = vmatprep.subr.mxu0 0.0
    %1625 = vmatpush1.msra.mxu0 0.0
    %1626 = vmatprep.subr.mxu0 0.0
    %1627 = vmatpush1.msra.mxu0 0.0
    %1628 = vmatprep.subr.mxu0 0.0
    %1629 = vmatpush1.msra.mxu0 0.0
    %1630 = vmatprep.subr.mxu0 0.0
    %1631 = vmatpush1.msra.mxu0 0.0
    %1632 = vmatprep.subr.mxu0 0.0
    %1633 = vmatpush1.msra.mxu0 0.0
    %1634 = vmatprep.subr.mxu0 0.0
    %1635 = vmatpush1.msra.mxu0 0.0
    %1636 = vmatprep.subr.mxu0 0.0
    %1637 = vmatpush1.msra.mxu0 0.0
    %1638 = vmatprep.subr.mxu0 0.0
    %1639 = vmatpush1.msra.mxu0 0.0
    %1640 = vmatprep.subr.mxu0 0.0
    %1641 = vmatpush1.msra.mxu0 0.0
    %1642 = vmatprep.subr.mxu0 0.0
    %1643 = vmatpush1.msra.mxu0 0.0
    %1644 = vmatprep.subr.mxu0 0.0
    %1645 = vmatpush1.msra.mxu0 0.0
    %1646 = vmatprep.subr.mxu0 0.0
    %1647 = vmatpush1.msra.mxu0 0.0
    %1648 = vmatprep.subr.mxu0 0.0
    %1649 = vmatpush1.msra.mxu0 0.0
    %1650 = vmatprep.subr.mxu0 0.0
    %1651 = vmatpush1.msra.mxu0 0.0
    %1652 = vmatprep.subr.mxu0 0.0
    %1653 = vmatpush1.msra.mxu0 0.0
    %1654 = vmatprep.subr.mxu0 0.0
    %1655 = vmatpush1.msra.mxu0 0.0
    %1656 = vmatprep.subr.mxu0 0.0
    %1657 = vmatpush1.msra.mxu0 0.0
    %1658 = vmatprep.subr.mxu0 0.0
    %1659 = vmatpush1.msra.mxu0 0.0
    %1660 = vmatprep.subr.mxu0 0.0
    %1661 = vmatpush1.msra.mxu0 0.0
    %1662 = vmatprep.subr.mxu0 0.0
    %1663 = vmatpush1.msra.mxu0 0.0
    %1664 = vmatprep.subr.mxu0 0.0
    %1665 = vmatpush1.msra.mxu0 0.0
    %1666 = vmatprep.subr.mxu0 0.0
    %1667 = vmatpush1.msra.mxu0 0.0
    %1668 = vmatprep.subr.mxu0 0.0
    %1669 = vmatpush1.msra.mxu0 0.0
    %1670 = vmatprep.subr.mxu0 0.0
    %1671 = vmatpush1.msra.mxu0 0.0
    %1672 = vmatprep.subr.mxu0 0.0
    %1673 = vmatpush1.msra.mxu0 0.0
    %1674 = vmatprep.subr.mxu0 0.0
    %1675 = vmatpush1.msra.mxu0 0.0
    %1676 = vmatprep.subr.mxu0 0.0
    %1677 = vmatpush1.msra.mxu0 0.0
    %1678 = vmatprep.subr.mxu0 0.0
    %1679 = vmatpush1.msra.mxu0 0.0
    %1680 = vmatprep.subr.mxu0 0.0
    %1681 = vmatpush1.msra.mxu0 0.0
    %1682 = vmatprep.mubr.f32.mxu0 0.0
    %1683 = vmatmul.mubr.f32.gmra.mrb[0].mxu0 %v1503
    %v1684 = vpop.f32.mrb[0].mxu0
    %v1685 = vadd.f32 0.0, %v1684
    %v1686 = vpop.f32.mrb[0].mxu0
    %v1687 = vadd.f32 0.0, %v1686
    %1688 = vdwg.mxu0
    %1689 = vmatprep.subr.mxu0 %v1477
    %1690 = vmatpush1.msra.mxu0 %v1476
    %1691 = vmatprep.subr.mxu0 %v1521
    %1692 = vmatpush1.msra.mxu0 %v1518
    %1693 = vmatprep.subr.mxu0 0.0
    %1694 = vmatpush1.msra.mxu0 0.0
    %1695 = vmatprep.subr.mxu0 0.0
    %1696 = vmatpush1.msra.mxu0 0.0
    %1697 = vmatprep.subr.mxu0 0.0
    %1698 = vmatpush1.msra.mxu0 0.0
    %1699 = vmatprep.subr.mxu0 0.0
    %1700 = vmatpush1.msra.mxu0 0.0
    %1701 = vmatprep.subr.mxu0 0.0
    %1702 = vmatpush1.msra.mxu0 0.0
    %1703 = vmatprep.subr.mxu0 0.0
    %1704 = vmatpush1.msra.mxu0 0.0
    %1705 = vmatprep.subr.mxu0 0.0
    %1706 = vmatpush1.msra.mxu0 0.0
    %1707 = vmatprep.subr.mxu0 0.0
    %1708 = vmatpush1.msra.mxu0 0.0
    %1709 = vmatprep.subr.mxu0 0.0
    %1710 = vmatpush1.msra.mxu0 0.0
    %1711 = vmatprep.subr.mxu0 0.0
    %1712 = vmatpush1.msra.mxu0 0.0
    %1713 = vmatprep.subr.mxu0 0.0
    %1714 = vmatpush1.msra.mxu0 0.0
    %1715 = vmatprep.subr.mxu0 0.0
    %1716 = vmatpush1.msra.mxu0 0.0
    %1717 = vmatprep.subr.mxu0 0.0
    %1718 = vmatpush1.msra.mxu0 0.0
    %1719 = vmatprep.subr.mxu0 0.0
    %1720 = vmatpush1.msra.mxu0 0.0
    %1721 = vmatprep.subr.mxu0 0.0
    %1722 = vmatpush1.msra.mxu0 0.0
    %1723 = vmatprep.subr.mxu0 0.0
    %1724 = vmatpush1.msra.mxu0 0.0
    %1725 = vmatprep.subr.mxu0 0.0
    %1726 = vmatpush1.msra.mxu0 0.0
    %1727 = vmatprep.subr.mxu0 0.0
    %1728 = vmatpush1.msra.mxu0 0.0
    %1729 = vmatprep.subr.mxu0 0.0
    %1730 = vmatpush1.msra.mxu0 0.0
    %1731 = vmatprep.subr.mxu0 0.0
    %1732 = vmatpush1.msra.mxu0 0.0
    %1733 = vmatprep.subr.mxu0 0.0
    %1734 = vmatpush1.msra.mxu0 0.0
    %1735 = vmatprep.subr.mxu0 0.0
    %1736 = vmatpush1.msra.mxu0 0.0
    %1737 = vmatprep.subr.mxu0 0.0
    %1738 = vmatpush1.msra.mxu0 0.0
    %1739 = vmatprep.subr.mxu0 0.0
    %1740 = vmatpush1.msra.mxu0 0.0
    %1741 = vmatprep.subr.mxu0 0.0
    %1742 = vmatpush1.msra.mxu0 0.0
    %1743 = vmatprep.subr.mxu0 0.0
    %1744 = vmatpush1.msra.mxu0 0.0
    %1745 = vmatprep.subr.mxu0 0.0
    %1746 = vmatpush1.msra.mxu0 0.0
    %1747 = vmatprep.subr.mxu0 0.0
    %1748 = vmatpush1.msra.mxu0 0.0
    %1749 = vmatprep.subr.mxu0 0.0
    %1750 = vmatpush1.msra.mxu0 0.0
    %1751 = vmatprep.subr.mxu0 0.0
    %1752 = vmatpush1.msra.mxu0 0.0
    %1753 = vmatprep.mubr.f32.mxu0 0.0
    %1754 = vmatmul.mubr.f32.gmra.mrb[0].mxu0 %v1503
    %v1755 = vpop.f32.mrb[0].mxu0
    %v1756 = vadd.f32 0.0, %v1755
    %v1757 = vpop.f32.mrb[0].mxu0
    %v1758 = vadd.f32 0.0, %v1757
    %1759 = vdwg.mxu0
    %1760 = vmatprep.subr.mxu0 %v1479
    %1761 = vmatpush1.msra.mxu0 %v1478
    %1762 = vmatprep.subr.mxu0 %v1527
    %1763 = vmatpush1.msra.mxu0 %v1524
    %1764 = vmatprep.subr.mxu0 0.0
    %1765 = vmatpush1.msra.mxu0 0.0
    %1766 = vmatprep.subr.mxu0 0.0
    %1767 = vmatpush1.msra.mxu0 0.0
    %1768 = vmatprep.subr.mxu0 0.0
    %1769 = vmatpush1.msra.mxu0 0.0
    %1770 = vmatprep.subr.mxu0 0.0
    %1771 = vmatpush1.msra.mxu0 0.0
    %1772 = vmatprep.subr.mxu0 0.0
    %1773 = vmatpush1.msra.mxu0 0.0
    %1774 = vmatprep.subr.mxu0 0.0
    %1775 = vmatpush1.msra.mxu0 0.0
    %1776 = vmatprep.subr.mxu0 0.0
    %1777 = vmatpush1.msra.mxu0 0.0
    %1778 = vmatprep.subr.mxu0 0.0
    %1779 = vmatpush1.msra.mxu0 0.0
    %1780 = vmatprep.subr.mxu0 0.0
    %1781 = vmatpush1.msra.mxu0 0.0
    %1782 = vmatprep.subr.mxu0 0.0
    %1783 = vmatpush1.msra.mxu0 0.0
    %1784 = vmatprep.subr.mxu0 0.0
    %1785 = vmatpush1.msra.mxu0 0.0
    %1786 = vmatprep.subr.mxu0 0.0
    %1787 = vmatpush1.msra.mxu0 0.0
    %1788 = vmatprep.subr.mxu0 0.0
    %1789 = vmatpush1.msra.mxu0 0.0
    %1790 = vmatprep.subr.mxu0 0.0
    %1791 = vmatpush1.msra.mxu0 0.0
    %1792 = vmatprep.subr.mxu0 0.0
    %1793 = vmatpush1.msra.mxu0 0.0
    %1794 = vmatprep.subr.mxu0 0.0
    %1795 = vmatpush1.msra.mxu0 0.0
    %1796 = vmatprep.subr.mxu0 0.0
    %1797 = vmatpush1.msra.mxu0 0.0
    %1798 = vmatprep.subr.mxu0 0.0
    %1799 = vmatpush1.msra.mxu0 0.0
    %1800 = vmatprep.subr.mxu0 0.0
    %1801 = vmatpush1.msra.mxu0 0.0
    %1802 = vmatprep.subr.mxu0 0.0
    %1803 = vmatpush1.msra.mxu0 0.0
    %1804 = vmatprep.subr.mxu0 0.0
    %1805 = vmatpush1.msra.mxu0 0.0
    %1806 = vmatprep.subr.mxu0 0.0
    %1807 = vmatpush1.msra.mxu0 0.0
    %1808 = vmatprep.subr.mxu0 0.0
    %1809 = vmatpush1.msra.mxu0 0.0
    %1810 = vmatprep.subr.mxu0 0.0
    %1811 = vmatpush1.msra.mxu0 0.0
    %1812 = vmatprep.subr.mxu0 0.0
    %1813 = vmatpush1.msra.mxu0 0.0
    %1814 = vmatprep.subr.mxu0 0.0
    %1815 = vmatpush1.msra.mxu0 0.0
    %1816 = vmatprep.subr.mxu0 0.0
    %1817 = vmatpush1.msra.mxu0 0.0
    %1818 = vmatprep.subr.mxu0 0.0
    %1819 = vmatpush1.msra.mxu0 0.0
    %1820 = vmatprep.subr.mxu0 0.0
    %1821 = vmatpush1.msra.mxu0 0.0
    %1822 = vmatprep.subr.mxu0 0.0
    %1823 = vmatpush1.msra.mxu0 0.0
    %1824 = vmatprep.mubr.f32.mxu0 0.0
    %1825 = vmatmul.mubr.f32.gmra.mrb[0].mxu0 %v1503
    %v1826 = vpop.f32.mrb[0].mxu0
    %v1827 = vadd.f32 0.0, %v1826
    %v1828 = vpop.f32.mrb[0].mxu0
    %v1829 = vadd.f32 0.0, %v1828
    %1830 = vdwg.mxu0
    %1831 = vmatprep.subr.mxu0 %v1481
    %1832 = vmatpush1.msra.mxu0 %v1480
    %1833 = vmatprep.subr.mxu0 %v1533
    %1834 = vmatpush1.msra.mxu0 %v1530
    %1835 = vmatprep.subr.mxu0 0.0
    %1836 = vmatpush1.msra.mxu0 0.0
    %1837 = vmatprep.subr.mxu0 0.0
    %1838 = vmatpush1.msra.mxu0 0.0
    %1839 = vmatprep.subr.mxu0 0.0
    %1840 = vmatpush1.msra.mxu0 0.0
    %1841 = vmatprep.subr.mxu0 0.0
    %1842 = vmatpush1.msra.mxu0 0.0
    %1843 = vmatprep.subr.mxu0 0.0
    %1844 = vmatpush1.msra.mxu0 0.0
    %1845 = vmatprep.subr.mxu0 0.0
    %1846 = vmatpush1.msra.mxu0 0.0
    %1847 = vmatprep.subr.mxu0 0.0
    %1848 = vmatpush1.msra.mxu0 0.0
    %1849 = vmatprep.subr.mxu0 0.0
    %1850 = vmatpush1.msra.mxu0 0.0
    %1851 = vmatprep.subr.mxu0 0.0
    %1852 = vmatpush1.msra.mxu0 0.0
    %1853 = vmatprep.subr.mxu0 0.0
    %1854 = vmatpush1.msra.mxu0 0.0
    %1855 = vmatprep.subr.mxu0 0.0
    %1856 = vmatpush1.msra.mxu0 0.0
    %1857 = vmatprep.subr.mxu0 0.0
    %1858 = vmatpush1.msra.mxu0 0.0
    %1859 = vmatprep.subr.mxu0 0.0
    %1860 = vmatpush1.msra.mxu0 0.0
    %1861 = vmatprep.subr.mxu0 0.0
    %1862 = vmatpush1.msra.mxu0 0.0
    %1863 = vmatprep.subr.mxu0 0.0
    %1864 = vmatpush1.msra.mxu0 0.0
    %1865 = vmatprep.subr.mxu0 0.0
    %1866 = vmatpush1.msra.mxu0 0.0
    %1867 = vmatprep.subr.mxu0 0.0
    %1868 = vmatpush1.msra.mxu0 0.0
    %1869 = vmatprep.subr.mxu0 0.0
    %1870 = vmatpush1.msra.mxu0 0.0
    %1871 = vmatprep.subr.mxu0 0.0
    %1872 = vmatpush1.msra.mxu0 0.0
    %1873 = vmatprep.subr.mxu0 0.0
    %1874 = vmatpush1.msra.mxu0 0.0
    %1875 = vmatprep.subr.mxu0 0.0
    %1876 = vmatpush1.msra.mxu0 0.0
    %1877 = vmatprep.subr.mxu0 0.0
    %1878 = vmatpush1.msra.mxu0 0.0
    %1879 = vmatprep.subr.mxu0 0.0
    %1880 = vmatpush1.msra.mxu0 0.0
    %1881 = vmatprep.subr.mxu0 0.0
    %1882 = vmatpush1.msra.mxu0 0.0
    %1883 = vmatprep.subr.mxu0 0.0
    %1884 = vmatpush1.msra.mxu0 0.0
    %1885 = vmatprep.subr.mxu0 0.0
    %1886 = vmatpush1.msra.mxu0 0.0
    %1887 = vmatprep.subr.mxu0 0.0
    %1888 = vmatpush1.msra.mxu0 0.0
    %1889 = vmatprep.subr.mxu0 0.0
    %1890 = vmatpush1.msra.mxu0 0.0
    %1891 = vmatprep.subr.mxu0 0.0
    %1892 = vmatpush1.msra.mxu0 0.0
    %1893 = vmatprep.subr.mxu0 0.0
    %1894 = vmatpush1.msra.mxu0 0.0
    %1895 = vmatprep.mubr.f32.mxu0 0.0
    %1896 = vmatmul.mubr.f32.gmra.mrb[0].mxu0 %v1503
    %v1897 = vpop.f32.mrb[0].mxu0
    %v1898 = vadd.f32 0.0, %v1897
    %v1899 = vpop.f32.mrb[0].mxu0
    %v1900 = vadd.f32 0.0, %v1899
    %1901 = vdwg.mxu0
    %1902 = vmatprep.subr.mxu0 %v1483
    %1903 = vmatpush1.msra.mxu0 %v1482
    %1904 = vmatprep.subr.mxu0 %v1539
    %1905 = vmatpush1.msra.mxu0 %v1536
    %1906 = vmatprep.subr.mxu0 0.0
    %1907 = vmatpush1.msra.mxu0 0.0
    %1908 = vmatprep.subr.mxu0 0.0
    %1909 = vmatpush1.msra.mxu0 0.0
    %1910 = vmatprep.subr.mxu0 0.0
    %1911 = vmatpush1.msra.mxu0 0.0
    %1912 = vmatprep.subr.mxu0 0.0
    %1913 = vmatpush1.msra.mxu0 0.0
    %1914 = vmatprep.subr.mxu0 0.0
    %1915 = vmatpush1.msra.mxu0 0.0
    %1916 = vmatprep.subr.mxu0 0.0
    %1917 = vmatpush1.msra.mxu0 0.0
    %1918 = vmatprep.subr.mxu0 0.0
    %1919 = vmatpush1.msra.mxu0 0.0
    %1920 = vmatprep.subr.mxu0 0.0
    %1921 = vmatpush1.msra.mxu0 0.0
    %1922 = vmatprep.subr.mxu0 0.0
    %1923 = vmatpush1.msra.mxu0 0.0
    %1924 = vmatprep.subr.mxu0 0.0
    %1925 = vmatpush1.msra.mxu0 0.0
    %1926 = vmatprep.subr.mxu0 0.0
    %1927 = vmatpush1.msra.mxu0 0.0
    %1928 = vmatprep.subr.mxu0 0.0
    %1929 = vmatpush1.msra.mxu0 0.0
    %1930 = vmatprep.subr.mxu0 0.0
    %1931 = vmatpush1.msra.mxu0 0.0
    %1932 = vmatprep.subr.mxu0 0.0
    %1933 = vmatpush1.msra.mxu0 0.0
    %1934 = vmatprep.subr.mxu0 0.0
    %1935 = vmatpush1.msra.mxu0 0.0
    %1936 = vmatprep.subr.mxu0 0.0
    %1937 = vmatpush1.msra.mxu0 0.0
    %1938 = vmatprep.subr.mxu0 0.0
    %1939 = vmatpush1.msra.mxu0 0.0
    %1940 = vmatprep.subr.mxu0 0.0
    %1941 = vmatpush1.msra.mxu0 0.0
    %1942 = vmatprep.subr.mxu0 0.0
    %1943 = vmatpush1.msra.mxu0 0.0
    %1944 = vmatprep.subr.mxu0 0.0
    %1945 = vmatpush1.msra.mxu0 0.0
    %1946 = vmatprep.subr.mxu0 0.0
    %1947 = vmatpush1.msra.mxu0 0.0
    %1948 = vmatprep.subr.mxu0 0.0
    %1949 = vmatpush1.msra.mxu0 0.0
    %1950 = vmatprep.subr.mxu0 0.0
    %1951 = vmatpush1.msra.mxu0 0.0
    %1952 = vmatprep.subr.mxu0 0.0
    %1953 = vmatpush1.msra.mxu0 0.0
    %1954 = vmatprep.subr.mxu0 0.0
    %1955 = vmatpush1.msra.mxu0 0.0
    %1956 = vmatprep.subr.mxu0 0.0
    %1957 = vmatpush1.msra.mxu0 0.0
    %1958 = vmatprep.subr.mxu0 0.0
    %1959 = vmatpush1.msra.mxu0 0.0
    %1960 = vmatprep.subr.mxu0 0.0
    %1961 = vmatpush1.msra.mxu0 0.0
    %1962 = vmatprep.subr.mxu0 0.0
    %1963 = vmatpush1.msra.mxu0 0.0
    %1964 = vmatprep.subr.mxu0 0.0
    %1965 = vmatpush1.msra.mxu0 0.0
    %1966 = vmatprep.mubr.f32.mxu0 0.0
    %1967 = vmatmul.mubr.f32.gmra.mrb[0].mxu0 %v1503
    %v1968 = vpop.f32.mrb[0].mxu0
    %v1969 = vadd.f32 0.0, %v1968
    %v1970 = vpop.f32.mrb[0].mxu0
    %v1971 = vadd.f32 0.0, %v1970
    %1972 = vdwg.mxu0
    %1973 = vmatprep.subr.mxu0 %v1485
    %1974 = vmatpush1.msra.mxu0 %v1484
    %1975 = vmatprep.subr.mxu0 %v1545
    %1976 = vmatpush1.msra.mxu0 %v1542
    %1977 = vmatprep.subr.mxu0 0.0
    %1978 = vmatpush1.msra.mxu0 0.0
    %1979 = vmatprep.subr.mxu0 0.0
    %1980 = vmatpush1.msra.mxu0 0.0
    %1981 = vmatprep.subr.mxu0 0.0
    %1982 = vmatpush1.msra.mxu0 0.0
    %1983 = vmatprep.subr.mxu0 0.0
    %1984 = vmatpush1.msra.mxu0 0.0
    %1985 = vmatprep.subr.mxu0 0.0
    %1986 = vmatpush1.msra.mxu0 0.0
    %1987 = vmatprep.subr.mxu0 0.0
    %1988 = vmatpush1.msra.mxu0 0.0
    %1989 = vmatprep.subr.mxu0 0.0
    %1990 = vmatpush1.msra.mxu0 0.0
    %1991 = vmatprep.subr.mxu0 0.0
    %1992 = vmatpush1.msra.mxu0 0.0
    %1993 = vmatprep.subr.mxu0 0.0
    %1994 = vmatpush1.msra.mxu0 0.0
    %1995 = vmatprep.subr.mxu0 0.0
    %1996 = vmatpush1.msra.mxu0 0.0
    %1997 = vmatprep.subr.mxu0 0.0
    %1998 = vmatpush1.msra.mxu0 0.0
    %1999 = vmatprep.subr.mxu0 0.0
    %2000 = vmatpush1.msra.mxu0 0.0
    %2001 = vmatprep.subr.mxu0 0.0
    %2002 = vmatpush1.msra.mxu0 0.0
    %2003 = vmatprep.subr.mxu0 0.0
    %2004 = vmatpush1.msra.mxu0 0.0
    %2005 = vmatprep.subr.mxu0 0.0
    %2006 = vmatpush1.msra.mxu0 0.0
    %2007 = vmatprep.subr.mxu0 0.0
    %2008 = vmatpush1.msra.mxu0 0.0
    %2009 = vmatprep.subr.mxu0 0.0
    %2010 = vmatpush1.msra.mxu0 0.0
    %2011 = vmatprep.subr.mxu0 0.0
    %2012 = vmatpush1.msra.mxu0 0.0
    %2013 = vmatprep.subr.mxu0 0.0
    %2014 = vmatpush1.msra.mxu0 0.0
    %2015 = vmatprep.subr.mxu0 0.0
    %2016 = vmatpush1.msra.mxu0 0.0
    %2017 = vmatprep.subr.mxu0 0.0
    %2018 = vmatpush1.msra.mxu0 0.0
    %2019 = vmatprep.subr.mxu0 0.0
    %2020 = vmatpush1.msra.mxu0 0.0
    %2021 = vmatprep.subr.mxu0 0.0
    %2022 = vmatpush1.msra.mxu0 0.0
    %2023 = vmatprep.subr.mxu0 0.0
    %2024 = vmatpush1.msra.mxu0 0.0
    %2025 = vmatprep.subr.mxu0 0.0
    %2026 = vmatpush1.msra.mxu0 0.0
    %2027 = vmatprep.subr.mxu0 0.0
    %2028 = vmatpush1.msra.mxu0 0.0
    %2029 = vmatprep.subr.mxu0 0.0
    %2030 = vmatpush1.msra.mxu0 0.0
    %2031 = vmatprep.subr.mxu0 0.0
    %2032 = vmatpush1.msra.mxu0 0.0
    %2033 = vmatprep.subr.mxu0 0.0
    %2034 = vmatpush1.msra.mxu0 0.0
    %2035 = vmatprep.subr.mxu0 0.0
    %2036 = vmatpush1.msra.mxu0 0.0
    %2037 = vmatprep.mubr.f32.mxu0 0.0
    %2038 = vmatmul.mubr.f32.gmra.mrb[0].mxu0 %v1503
    %v2039 = vpop.f32.mrb[0].mxu0
    %v2040 = vadd.f32 0.0, %v2039
    %v2041 = vpop.f32.mrb[0].mxu0
    %v2042 = vadd.f32 0.0, %v2041
    %2043 = vdwg.mxu0
    %v2044 = vld [vmem:[#allocation3] sm:$0xff]
    %v2045 = vld [vmem:[#allocation3 + $0x8] sm:$0xff]
    %v2046 = vld [vmem:[#allocation3 + $0x10] sm:$0xff]
    %v2047 = vld [vmem:[#allocation3 + $0x18] sm:$0xff]
    %v2048 = vld [vmem:[#allocation3 + $0x20] sm:$0xff]
    %v2049 = vld [vmem:[#allocation3 + $0x28] sm:$0xff]
    %v2050 = vld [vmem:[#allocation3 + $0x30] sm:$0xff]
    %v2051 = vld [vmem:[#allocation3 + $0x38] sm:$0xff]
    %v2052 = vld [vmem:[#allocation3 + $0x40] sm:$0xff]
    %v2053 = vld [vmem:[#allocation3 + $0x48] sm:$0xff]
    %v2054 = vld [vmem:[#allocation3 + $0x50] sm:$0xff]
    %v2055 = vld [vmem:[#allocation3 + $0x58] sm:$0xff]
    %v2056 = vld [vmem:[#allocation3 + $0x60] sm:$0xff]
    %v2057 = vld [vmem:[#allocation3 + $0x68] sm:$0xff]
    %v2058 = vadd.f32 %v2044, %v1614
    %v2059 = vadd.f32 %v2045, %v1616
    %v2060 = vadd.f32 %v2046, %v1685
    %v2061 = vadd.f32 %v2047, %v1687
    %v2062 = vadd.f32 %v2048, %v1756
    %v2063 = vadd.f32 %v2049, %v1758
    %v2064 = vadd.f32 %v2050, %v1827
    %v2065 = vadd.f32 %v2051, %v1829
    %v2066 = vadd.f32 %v2052, %v1898
    %v2067 = vadd.f32 %v2053, %v1900
    %v2068 = vadd.f32 %v2054, %v1969
    %v2069 = vadd.f32 %v2055, %v1971
    %v2070 = vadd.f32 %v2056, %v2040
    %v2071 = vadd.f32 %v2057, %v2042
    %2072 = vst [vmem:[#allocation3] sm:$0xff] %v2058
    %2073 = vst [vmem:[#allocation3 + $0x8] sm:$0xff] %v2059
    %2074 = vst [vmem:[#allocation3 + $0x10] sm:$0xff] %v2060
    %2075 = vst [vmem:[#allocation3 + $0x18] sm:$0xff] %v2061
    %2076 = vst [vmem:[#allocation3 + $0x20] sm:$0xff] %v2062
    %2077 = vst [vmem:[#allocation3 + $0x28] sm:$0xff] %v2063
    %2078 = vst [vmem:[#allocation3 + $0x30] sm:$0xff] %v2064
    %2079 = vst [vmem:[#allocation3 + $0x38] sm:$0xff] %v2065
    %2080 = vst [vmem:[#allocation3 + $0x40] sm:$0xff] %v2066
    %2081 = vst [vmem:[#allocation3 + $0x48] sm:$0xff] %v2067
    %2082 = vst [vmem:[#allocation3 + $0x50] sm:$0xff] %v2068
    %2083 = vst [vmem:[#allocation3 + $0x58] sm:$0xff] %v2069
    %2084 = vst [vmem:[#allocation3 + $0x60] sm:$0xff] %v2070
    %2085 = vst [vmem:[#allocation3 + $0x68] sm:$0xff] %v2071
    %v2086 = vld [vmem:[#allocation3] sm:$0xff]
    %v2087 = vld [vmem:[#allocation3 + $0x8] sm:$0xff]
    %v2088 = vld [vmem:[#allocation3 + $0x10] sm:$0xff]
    %v2089 = vld [vmem:[#allocation3 + $0x18] sm:$0xff]
    %v2090 = vld [vmem:[#allocation3 + $0x20] sm:$0xff]
    %v2091 = vld [vmem:[#allocation3 + $0x28] sm:$0xff]
    %v2092 = vld [vmem:[#allocation3 + $0x30] sm:$0xff]
    %v2093 = vld [vmem:[#allocation3 + $0x38] sm:$0xff]
    %v2094 = vld [vmem:[#allocation3 + $0x40] sm:$0xff]
    %v2095 = vld [vmem:[#allocation3 + $0x48] sm:$0xff]
    %v2096 = vld [vmem:[#allocation3 + $0x50] sm:$0xff]
    %v2097 = vld [vmem:[#allocation3 + $0x58] sm:$0xff]
    %v2098 = vld [vmem:[#allocation3 + $0x60] sm:$0xff]
    %v2099 = vld [vmem:[#allocation3 + $0x68] sm:$0xff]
    %v2100 = vld [vmem:[%s2] sm:$0xff]
    %2102 = vset.pattern.permute.xlu0 0
    %2103 = vperm.xlu0 %2102, %v2100
    %v2104 = vpop.permute.xlu0 %2103
    %v2106 = vmul.f32 %v2086, %v2104
    %v2107 = vmul.f32 %v2087, %v2104
    %v2108 = vmul.f32 %v2088, %v2104
    %v2109 = vmul.f32 %v2089, %v2104
    %v2110 = vmul.f32 %v2090, %v2104
    %v2111 = vmul.f32 %v2091, %v2104
    %v2112 = vmul.f32 %v2092, %v2104
    %v2113 = vmul.f32 %v2093, %v2104
    %v2114 = vmul.f32 %v2094, %v2104
    %v2115 = vmul.f32 %v2095, %v2104
    %v2116 = vmul.f32 %v2096, %v2104
    %v2117 = vmul.f32 %v2097, %v2104
    %v2118 = vmul.f32 %v2098, %v2104
    %v2119 = vmul.f32 %v2099, %v2104
    %v2120 = vld [vmem:[%s3] sm:$0xff]
    %2122 = vset.pattern.permute.xlu0 0
    %2123 = vperm.xlu0 %2122, %v2120
    %v2124 = vpop.permute.xlu0 %2123
    %v2126 = vadd.f32 %v2106, %v2124
    %v2127 = vadd.f32 %v2107, %v2124
    %v2128 = vadd.f32 %v2108, %v2124
    %v2129 = vadd.f32 %v2109, %v2124
    %v2130 = vadd.f32 %v2110, %v2124
    %v2131 = vadd.f32 %v2111, %v2124
    %v2132 = vadd.f32 %v2112, %v2124
    %v2133 = vadd.f32 %v2113, %v2124
    %v2134 = vadd.f32 %v2114, %v2124
    %v2135 = vadd.f32 %v2115, %v2124
    %v2136 = vadd.f32 %v2116, %v2124
    %v2137 = vadd.f32 %v2117, %v2124
    %v2138 = vadd.f32 %v2118, %v2124
    %v2139 = vadd.f32 %v2119, %v2124
    %v2140 = vmax.f32 %v2126, 0.0
    %v2141 = vmax.f32 %v2127, 0.0
    %v2142 = vmax.f32 %v2128, 0.0
    %v2143 = vmax.f32 %v2129, 0.0
    %v2144 = vmax.f32 %v2130, 0.0
    %v2145 = vmax.f32 %v2131, 0.0
    %v2146 = vmax.f32 %v2132, 0.0
    %v2147 = vmax.f32 %v2133, 0.0
    %v2148 = vmax.f32 %v2134, 0.0
    %v2149 = vmax.f32 %v2135, 0.0
    %v2150 = vmax.f32 %v2136, 0.0
    %v2151 = vmax.f32 %v2137, 0.0
    %v2152 = vmax.f32 %v2138, 0.0
    %v2153 = vmax.f32 %v2139, 0.0
    %2154 = vst [vmem:[#allocation9] sm:$0xff] %v2140
    %2155 = vst [vmem:[#allocation9 + $0x8] sm:$0xff] %v2141
    %2156 = vst [vmem:[#allocation9 + $0x10] sm:$0xff] %v2142
    %2157 = vst [vmem:[#allocation9 + $0x18] sm:$0xff] %v2143
    %2158 = vst [vmem:[#allocation9 + $0x20] sm:$0xff] %v2144
    %2159 = vst [vmem:[#allocation9 + $0x28] sm:$0xff] %v2145
    %2160 = vst [vmem:[#allocation9 + $0x30] sm:$0xff] %v2146
    %2161 = vst [vmem:[#allocation9 + $0x38] sm:$0xff] %v2147
    %2162 = vst [vmem:[#allocation9 + $0x40] sm:$0xff] %v2148
    %2163 = vst [vmem:[#allocation9 + $0x48] sm:$0xff] %v2149
    %2164 = vst [vmem:[#allocation9 + $0x50] sm:$0xff] %v2150
    %2165 = vst [vmem:[#allocation9 + $0x58] sm:$0xff] %v2151
    %2166 = vst [vmem:[#allocation9 + $0x60] sm:$0xff] %v2152
    %2167 = vst [vmem:[#allocation9 + $0x68] sm:$0xff] %v2153
    %s2168 = scalar_lea.vmem [#allocation4], 68
    %v2169 = vld [vmem:[%s2168] sm:$0xff]
    %v2170 = vld [vmem:[%s2168 + $0x8] sm:$0xff]
    %v2171 = vld [vmem:[%s2168 + $0x10] sm:$0xff]
    %v2172 = vld [vmem:[%s2168 + $0x18] sm:$0xff]
    %v2173 = vld [vmem:[%s2168 + $0x20] sm:$0xff]
    %v2174 = vld [vmem:[%s2168 + $0x28] sm:$0xff]
    %v2175 = vld [vmem:[%s2168 + $0x30] sm:$0xff]
    %v2176 = vld [vmem:[%s2168 + $0x38] sm:$0xff]
    %v2177 = vld [vmem:[%s2168 + $0x40] sm:$0xf]
    %v2186 = vcombine.high %v2169, %v2169
    %v2187 = vcombine.high %v2170, %v2170
    %v2188 = vcombine.high %v2171, %v2171
    %v2189 = vcombine.high %v2172, %v2172
    %v2190 = vcombine.high %v2173, %v2173
    %v2191 = vcombine.high %v2174, %v2174
    %v2192 = vcombine.high %v2175, %v2175
    %v2193 = vcombine.high %v2176, %v2176
    %2202 = vst [vmem:[#allocation2] sm:$0xf] %v2169
    %2203 = vst [vmem:[#allocation2 + $0x8] sm:$0xf] %v2186
    %2204 = vst [vmem:[#allocation2 + $0x10] sm:$0xf] %v2170
    %2205 = vst [vmem:[#allocation2 + $0x18] sm:$0xf] %v2187
    %2206 = vst [vmem:[#allocation2 + $0x20] sm:$0xf] %v2171
    %2207 = vst [vmem:[#allocation2 + $0x28] sm:$0xf] %v2188
    %2208 = vst [vmem:[#allocation2 + $0x30] sm:$0xf] %v2172
    %2209 = vst [vmem:[#allocation2 + $0x38] sm:$0xf] %v2189
    %2210 = vst [vmem:[#allocation2 + $0x40] sm:$0xf] %v2173
    %2211 = vst [vmem:[#allocation2 + $0x48] sm:$0xf] %v2190
    %2212 = vst [vmem:[#allocation2 + $0x50] sm:$0xf] %v2174
    %2213 = vst [vmem:[#allocation2 + $0x58] sm:$0xf] %v2191
    %2214 = vst [vmem:[#allocation2 + $0x60] sm:$0xf] %v2175
    %2215 = vst [vmem:[#allocation2 + $0x68] sm:$0xf] %v2192
    %2216 = vst [vmem:[#allocation2 + $0x70] sm:$0xf] %v2176
    %2217 = vst [vmem:[#allocation2 + $0x78] sm:$0xf] %v2193
    %v2219 = vcombine.low %v2169, %v2169
    %v2220 = vcombine.low %v2170, %v2170
    %v2221 = vcombine.low %v2171, %v2171
    %v2222 = vcombine.low %v2172, %v2172
    %v2223 = vcombine.low %v2173, %v2173
    %v2224 = vcombine.low %v2174, %v2174
    %v2225 = vcombine.low %v2175, %v2175
    %v2226 = vcombine.low %v2176, %v2176
    %v2227 = vcombine.low %v2177, %v2177
    %2228 = vrot.lane.b32.xlu0 %v2219, 127
    %v2229 = vpop.permute.xlu0 %2228
    %2230 = vrot.lane.b32.xlu0 %v2169, 127
    %v2231 = vpop.permute.xlu0 %2230
    %2232 = vrot.lane.b32.xlu0 %v2220, 127
    %v2233 = vpop.permute.xlu0 %2232
    %2234 = vrot.lane.b32.xlu0 %v2170, 127
    %v2235 = vpop.permute.xlu0 %2234
    %2236 = vrot.lane.b32.xlu0 %v2221, 127
    %v2237 = vpop.permute.xlu0 %2236
    %2238 = vrot.lane.b32.xlu0 %v2171, 127
    %v2239 = vpop.permute.xlu0 %2238
    %2240 = vrot.lane.b32.xlu0 %v2222, 127
    %v2241 = vpop.permute.xlu0 %2240
    %2242 = vrot.lane.b32.xlu0 %v2172, 127
    %v2243 = vpop.permute.xlu0 %2242
    %2244 = vrot.lane.b32.xlu0 %v2223, 127
    %v2245 = vpop.permute.xlu0 %2244
    %2246 = vrot.lane.b32.xlu0 %v2173, 127
    %v2247 = vpop.permute.xlu0 %2246
    %2248 = vrot.lane.b32.xlu0 %v2224, 127
    %v2249 = vpop.permute.xlu0 %2248
    %2250 = vrot.lane.b32.xlu0 %v2174, 127
    %v2251 = vpop.permute.xlu0 %2250
    %2252 = vrot.lane.b32.xlu0 %v2225, 127
    %v2253 = vpop.permute.xlu0 %2252
    %2254 = vrot.lane.b32.xlu0 %v2175, 127
    %v2255 = vpop.permute.xlu0 %2254
    %2256 = vrot.lane.b32.xlu0 %v2226, 127
    %v2257 = vpop.permute.xlu0 %2256
    %2258 = vrot.lane.b32.xlu0 %v2176, 127
    %v2259 = vpop.permute.xlu0 %2258
    %2260 = vrot.lane.b32.xlu0 %v2227, 127
    %v2261 = vpop.permute.xlu0 %2260
    %v2262 = vsel %vm139, %v2229, %v2231
    %v2263 = vsel %vm139, %v2231, %v2233
    %v2264 = vsel %vm139, %v2233, %v2235
    %v2265 = vsel %vm139, %v2235, %v2237
    %v2266 = vsel %vm139, %v2237, %v2239
    %v2267 = vsel %vm139, %v2239, %v2241
    %v2268 = vsel %vm139, %v2241, %v2243
    %v2269 = vsel %vm139, %v2243, %v2245
    %v2270 = vsel %vm139, %v2245, %v2247
    %v2271 = vsel %vm139, %v2247, %v2249
    %v2272 = vsel %vm139, %v2249, %v2251
    %v2273 = vsel %vm139, %v2251, %v2253
    %v2274 = vsel %vm139, %v2253, %v2255
    %v2275 = vsel %vm139, %v2255, %v2257
    %v2276 = vsel %vm139, %v2257, %v2259
    %v2277 = vsel %vm139, %v2259, %v2261
    %2294 = vst [vmem:[#allocation2] sm:$0xf0] %v2262
    %2295 = vst [vmem:[#allocation2 + $0x8] sm:$0xf0] %v2263
    %2296 = vst [vmem:[#allocation2 + $0x10] sm:$0xf0] %v2264
    %2297 = vst [vmem:[#allocation2 + $0x18] sm:$0xf0] %v2265
    %2298 = vst [vmem:[#allocation2 + $0x20] sm:$0xf0] %v2266
    %2299 = vst [vmem:[#allocation2 + $0x28] sm:$0xf0] %v2267
    %2300 = vst [vmem:[#allocation2 + $0x30] sm:$0xf0] %v2268
    %2301 = vst [vmem:[#allocation2 + $0x38] sm:$0xf0] %v2269
    %2302 = vst [vmem:[#allocation2 + $0x40] sm:$0xf0] %v2270
    %2303 = vst [vmem:[#allocation2 + $0x48] sm:$0xf0] %v2271
    %2304 = vst [vmem:[#allocation2 + $0x50] sm:$0xf0] %v2272
    %2305 = vst [vmem:[#allocation2 + $0x58] sm:$0xf0] %v2273
    %2306 = vst [vmem:[#allocation2 + $0x60] sm:$0xf0] %v2274
    %2307 = vst [vmem:[#allocation2 + $0x68] sm:$0xf0] %v2275
    %2308 = vst [vmem:[#allocation2 + $0x70] sm:$0xf0] %v2276
    %2309 = vst [vmem:[#allocation2 + $0x78] sm:$0xf0] %v2277
    %2310 = vrot.lane.b32.xlu0 %v2169, 126
    %v2311 = vpop.permute.xlu0 %2310
    %2312 = vrot.lane.b32.xlu0 %v2186, 126
    %v2313 = vpop.permute.xlu0 %2312
    %2314 = vrot.lane.b32.xlu0 %v2170, 126
    %v2315 = vpop.permute.xlu0 %2314
    %2316 = vrot.lane.b32.xlu0 %v2187, 126
    %v2317 = vpop.permute.xlu0 %2316
    %2318 = vrot.lane.b32.xlu0 %v2171, 126
    %v2319 = vpop.permute.xlu0 %2318
    %2320 = vrot.lane.b32.xlu0 %v2188, 126
    %v2321 = vpop.permute.xlu0 %2320
    %2322 = vrot.lane.b32.xlu0 %v2172, 126
    %v2323 = vpop.permute.xlu0 %2322
    %2324 = vrot.lane.b32.xlu0 %v2189, 126
    %v2325 = vpop.permute.xlu0 %2324
    %2326 = vrot.lane.b32.xlu0 %v2173, 126
    %v2327 = vpop.permute.xlu0 %2326
    %2328 = vrot.lane.b32.xlu0 %v2190, 126
    %v2329 = vpop.permute.xlu0 %2328
    %2330 = vrot.lane.b32.xlu0 %v2174, 126
    %v2331 = vpop.permute.xlu0 %2330
    %2332 = vrot.lane.b32.xlu0 %v2191, 126
    %v2333 = vpop.permute.xlu0 %2332
    %2334 = vrot.lane.b32.xlu0 %v2175, 126
    %v2335 = vpop.permute.xlu0 %2334
    %2336 = vrot.lane.b32.xlu0 %v2192, 126
    %v2337 = vpop.permute.xlu0 %2336
    %2338 = vrot.lane.b32.xlu0 %v2176, 126
    %v2339 = vpop.permute.xlu0 %2338
    %2340 = vrot.lane.b32.xlu0 %v2193, 126
    %v2341 = vpop.permute.xlu0 %2340
    %2342 = vrot.lane.b32.xlu0 %v2177, 126
    %v2343 = vpop.permute.xlu0 %2342
    %v2344 = vsel %vm222, %v2311, %v2313
    %v2345 = vsel %vm222, %v2313, %v2315
    %v2346 = vsel %vm222, %v2315, %v2317
    %v2347 = vsel %vm222, %v2317, %v2319
    %v2348 = vsel %vm222, %v2319, %v2321
    %v2349 = vsel %vm222, %v2321, %v2323
    %v2350 = vsel %vm222, %v2323, %v2325
    %v2351 = vsel %vm222, %v2325, %v2327
    %v2352 = vsel %vm222, %v2327, %v2329
    %v2353 = vsel %vm222, %v2329, %v2331
    %v2354 = vsel %vm222, %v2331, %v2333
    %v2355 = vsel %vm222, %v2333, %v2335
    %v2356 = vsel %vm222, %v2335, %v2337
    %v2357 = vsel %vm222, %v2337, %v2339
    %v2358 = vsel %vm222, %v2339, %v2341
    %v2359 = vsel %vm222, %v2341, %v2343
    %2376 = vst [vmem:[#allocation2 + $0x80] sm:$0xf] %v2344
    %2377 = vst [vmem:[#allocation2 + $0x88] sm:$0xf] %v2345
    %2378 = vst [vmem:[#allocation2 + $0x90] sm:$0xf] %v2346
    %2379 = vst [vmem:[#allocation2 + $0x98] sm:$0xf] %v2347
    %2380 = vst [vmem:[#allocation2 + $0xa0] sm:$0xf] %v2348
    %2381 = vst [vmem:[#allocation2 + $0xa8] sm:$0xf] %v2349
    %2382 = vst [vmem:[#allocation2 + $0xb0] sm:$0xf] %v2350
    %2383 = vst [vmem:[#allocation2 + $0xb8] sm:$0xf] %v2351
    %2384 = vst [vmem:[#allocation2 + $0xc0] sm:$0xf] %v2352
    %2385 = vst [vmem:[#allocation2 + $0xc8] sm:$0xf] %v2353
    %2386 = vst [vmem:[#allocation2 + $0xd0] sm:$0xf] %v2354
    %2387 = vst [vmem:[#allocation2 + $0xd8] sm:$0xf] %v2355
    %2388 = vst [vmem:[#allocation2 + $0xe0] sm:$0xf] %v2356
    %2389 = vst [vmem:[#allocation2 + $0xe8] sm:$0xf] %v2357
    %2390 = vst [vmem:[#allocation2 + $0xf0] sm:$0xf] %v2358
    %2391 = vst [vmem:[#allocation2 + $0xf8] sm:$0xf] %v2359
    %v2392 = vld [vmem:[#allocation2] sm:$0xff]
    %v2393 = vld [vmem:[#allocation2 + $0x8] sm:$0xff]
    %v2394 = vld [vmem:[#allocation2 + $0x10] sm:$0xff]
    %v2395 = vld [vmem:[#allocation2 + $0x18] sm:$0xff]
    %v2396 = vld [vmem:[#allocation2 + $0x20] sm:$0xff]
    %v2397 = vld [vmem:[#allocation2 + $0x28] sm:$0xff]
    %v2398 = vld [vmem:[#allocation2 + $0x30] sm:$0xff]
    %v2399 = vld [vmem:[#allocation2 + $0x38] sm:$0xff]
    %v2400 = vld [vmem:[#allocation2 + $0x40] sm:$0xff]
    %v2401 = vld [vmem:[#allocation2 + $0x48] sm:$0xff]
    %v2402 = vld [vmem:[#allocation2 + $0x50] sm:$0xff]
    %v2403 = vld [vmem:[#allocation2 + $0x58] sm:$0xff]
    %v2404 = vld [vmem:[#allocation2 + $0x60] sm:$0xff]
    %v2405 = vld [vmem:[#allocation2 + $0x68] sm:$0xff]
    %v2406 = vld [vmem:[#allocation2 + $0x80] sm:$0xf]
    %v2407 = vld [vmem:[#allocation2 + $0x88] sm:$0xf]
    %v2408 = vld [vmem:[#allocation2 + $0x90] sm:$0xf]
    %v2409 = vld [vmem:[#allocation2 + $0x98] sm:$0xf]
    %v2410 = vld [vmem:[#allocation2 + $0xa0] sm:$0xf]
    %v2411 = vld [vmem:[#allocation2 + $0xa8] sm:$0xf]
    %v2412 = vld [vmem:[#allocation2 + $0xb0] sm:$0xf]
    %v2413 = vld [vmem:[#allocation2 + $0xb8] sm:$0xf]
    %v2414 = vld [vmem:[#allocation2 + $0xc0] sm:$0xf]
    %v2415 = vld [vmem:[#allocation2 + $0xc8] sm:$0xf]
    %v2416 = vld [vmem:[#allocation2 + $0xd0] sm:$0xf]
    %v2417 = vld [vmem:[#allocation2 + $0xd8] sm:$0xf]
    %v2418 = vld [vmem:[#allocation2 + $0xe0] sm:$0xf]
    %v2419 = vld [vmem:[#allocation2 + $0xe8] sm:$0xf]
    %v2420 = vld [vmem:[#allocation7] sm:$0xff]
    %v2422 = vsel %vm300, %v2420, 0
    %v2425 = vsel %vm304, %v2406, 0
    %v2428 = vsel %vm304, %v2407, 0
    %v2431 = vsel %vm304, %v2408, 0
    %v2434 = vsel %vm304, %v2409, 0
    %v2437 = vsel %vm304, %v2410, 0
    %v2440 = vsel %vm304, %v2411, 0
    %v2443 = vsel %vm304, %v2412, 0
    %v2446 = vsel %vm304, %v2413, 0
    %v2449 = vsel %vm304, %v2414, 0
    %v2452 = vsel %vm304, %v2415, 0
    %v2455 = vsel %vm304, %v2416, 0
    %v2458 = vsel %vm304, %v2417, 0
    %v2461 = vsel %vm304, %v2418, 0
    %v2464 = vsel %vm304, %v2419, 0
    %2466 = vmatprep.subr.mxu0 %v2393
    %2467 = vmatpush1.msra.mxu0 %v2392
    %2468 = vmatprep.subr.mxu0 %v2428
    %2469 = vmatpush1.msra.mxu0 %v2425
    %2470 = vmatprep.subr.mxu0 0.0
    %2471 = vmatpush1.msra.mxu0 0.0
    %2472 = vmatprep.subr.mxu0 0.0
    %2473 = vmatpush1.msra.mxu0 0.0
    %2474 = vmatprep.subr.mxu0 0.0
    %2475 = vmatpush1.msra.mxu0 0.0
    %2476 = vmatprep.subr.mxu0 0.0
    %2477 = vmatpush1.msra.mxu0 0.0
    %2478 = vmatprep.subr.mxu0 0.0
    %2479 = vmatpush1.msra.mxu0 0.0
    %2480 = vmatprep.subr.mxu0 0.0
    %2481 = vmatpush1.msra.mxu0 0.0
    %2482 = vmatprep.subr.mxu0 0.0
    %2483 = vmatpush1.msra.mxu0 0.0
    %2484 = vmatprep.subr.mxu0 0.0
    %2485 = vmatpush1.msra.mxu0 0.0
    %2486 = vmatprep.subr.mxu0 0.0
    %2487 = vmatpush1.msra.mxu0 0.0
    %2488 = vmatprep.subr.mxu0 0.0
    %2489 = vmatpush1.msra.mxu0 0.0
    %2490 = vmatprep.subr.mxu0 0.0
    %2491 = vmatpush1.msra.mxu0 0.0
    %2492 = vmatprep.subr.mxu0 0.0
    %2493 = vmatpush1.msra.mxu0 0.0
    %2494 = vmatprep.subr.mxu0 0.0
    %2495 = vmatpush1.msra.mxu0 0.0
    %2496 = vmatprep.subr.mxu0 0.0
    %2497 = vmatpush1.msra.mxu0 0.0
    %2498 = vmatprep.subr.mxu0 0.0
    %2499 = vmatpush1.msra.mxu0 0.0
    %2500 = vmatprep.subr.mxu0 0.0
    %2501 = vmatpush1.msra.mxu0 0.0
    %2502 = vmatprep.subr.mxu0 0.0
    %2503 = vmatpush1.msra.mxu0 0.0
    %2504 = vmatprep.subr.mxu0 0.0
    %2505 = vmatpush1.msra.mxu0 0.0
    %2506 = vmatprep.subr.mxu0 0.0
    %2507 = vmatpush1.msra.mxu0 0.0
    %2508 = vmatprep.subr.mxu0 0.0
    %2509 = vmatpush1.msra.mxu0 0.0
    %2510 = vmatprep.subr.mxu0 0.0
    %2511 = vmatpush1.msra.mxu0 0.0
    %2512 = vmatprep.subr.mxu0 0.0
    %2513 = vmatpush1.msra.mxu0 0.0
    %2514 = vmatprep.subr.mxu0 0.0
    %2515 = vmatpush1.msra.mxu0 0.0
    %2516 = vmatprep.subr.mxu0 0.0
    %2517 = vmatpush1.msra.mxu0 0.0
    %2518 = vmatprep.subr.mxu0 0.0
    %2519 = vmatpush1.msra.mxu0 0.0
    %2520 = vmatprep.subr.mxu0 0.0
    %2521 = vmatpush1.msra.mxu0 0.0
    %2522 = vmatprep.subr.mxu0 0.0
    %2523 = vmatpush1.msra.mxu0 0.0
    %2524 = vmatprep.subr.mxu0 0.0
    %2525 = vmatpush1.msra.mxu0 0.0
    %2526 = vmatprep.subr.mxu0 0.0
    %2527 = vmatpush1.msra.mxu0 0.0
    %2528 = vmatprep.subr.mxu0 0.0
    %2529 = vmatpush1.msra.mxu0 0.0
    %2530 = vmatprep.mubr.f32.mxu0 0.0
    %2531 = vmatmul.mubr.f32.gmra.mrb[0].mxu0 %v2422
    %v2532 = vpop.f32.mrb[0].mxu0
    %v2533 = vadd.f32 0.0, %v2532
    %v2534 = vpop.f32.mrb[0].mxu0
    %v2535 = vadd.f32 0.0, %v2534
    %2536 = vdwg.mxu0
    %2537 = vmatprep.subr.mxu0 %v2395
    %2538 = vmatpush1.msra.mxu0 %v2394
    %2539 = vmatprep.subr.mxu0 %v2434
    %2540 = vmatpush1.msra.mxu0 %v2431
    %2541 = vmatprep.subr.mxu0 0.0
    %2542 = vmatpush1.msra.mxu0 0.0
    %2543 = vmatprep.subr.mxu0 0.0
    %2544 = vmatpush1.msra.mxu0 0.0
    %2545 = vmatprep.subr.mxu0 0.0
    %2546 = vmatpush1.msra.mxu0 0.0
    %2547 = vmatprep.subr.mxu0 0.0
    %2548 = vmatpush1.msra.mxu0 0.0
    %2549 = vmatprep.subr.mxu0 0.0
    %2550 = vmatpush1.msra.mxu0 0.0
    %2551 = vmatprep.subr.mxu0 0.0
    %2552 = vmatpush1.msra.mxu0 0.0
    %2553 = vmatprep.subr.mxu0 0.0
    %2554 = vmatpush1.msra.mxu0 0.0
    %2555 = vmatprep.subr.mxu0 0.0
    %2556 = vmatpush1.msra.mxu0 0.0
    %2557 = vmatprep.subr.mxu0 0.0
    %2558 = vmatpush1.msra.mxu0 0.0
    %2559 = vmatprep.subr.mxu0 0.0
    %2560 = vmatpush1.msra.mxu0 0.0
    %2561 = vmatprep.subr.mxu0 0.0
    %2562 = vmatpush1.msra.mxu0 0.0
    %2563 = vmatprep.subr.mxu0 0.0
    %2564 = vmatpush1.msra.mxu0 0.0
    %2565 = vmatprep.subr.mxu0 0.0
    %2566 = vmatpush1.msra.mxu0 0.0
    %2567 = vmatprep.subr.mxu0 0.0
    %2568 = vmatpush1.msra.mxu0 0.0
    %2569 = vmatprep.subr.mxu0 0.0
    %2570 = vmatpush1.msra.mxu0 0.0
    %2571 = vmatprep.subr.mxu0 0.0
    %2572 = vmatpush1.msra.mxu0 0.0
    %2573 = vmatprep.subr.mxu0 0.0
    %2574 = vmatpush1.msra.mxu0 0.0
    %2575 = vmatprep.subr.mxu0 0.0
    %2576 = vmatpush1.msra.mxu0 0.0
    %2577 = vmatprep.subr.mxu0 0.0
    %2578 = vmatpush1.msra.mxu0 0.0
    %2579 = vmatprep.subr.mxu0 0.0
    %2580 = vmatpush1.msra.mxu0 0.0
    %2581 = vmatprep.subr.mxu0 0.0
    %2582 = vmatpush1.msra.mxu0 0.0
    %2583 = vmatprep.subr.mxu0 0.0
    %2584 = vmatpush1.msra.mxu0 0.0
    %2585 = vmatprep.subr.mxu0 0.0
    %2586 = vmatpush1.msra.mxu0 0.0
    %2587 = vmatprep.subr.mxu0 0.0
    %2588 = vmatpush1.msra.mxu0 0.0
    %2589 = vmatprep.subr.mxu0 0.0
    %2590 = vmatpush1.msra.mxu0 0.0
    %2591 = vmatprep.subr.mxu0 0.0
    %2592 = vmatpush1.msra.mxu0 0.0
    %2593 = vmatprep.subr.mxu0 0.0
    %2594 = vmatpush1.msra.mxu0 0.0
    %2595 = vmatprep.subr.mxu0 0.0
    %2596 = vmatpush1.msra.mxu0 0.0
    %2597 = vmatprep.subr.mxu0 0.0
    %2598 = vmatpush1.msra.mxu0 0.0
    %2599 = vmatprep.subr.mxu0 0.0
    %2600 = vmatpush1.msra.mxu0 0.0
    %2601 = vmatprep.mubr.f32.mxu0 0.0
    %2602 = vmatmul.mubr.f32.gmra.mrb[0].mxu0 %v2422
    %v2603 = vpop.f32.mrb[0].mxu0
    %v2604 = vadd.f32 0.0, %v2603
    %v2605 = vpop.f32.mrb[0].mxu0
    %v2606 = vadd.f32 0.0, %v2605
    %2607 = vdwg.mxu0
    %2608 = vmatprep.subr.mxu0 %v2397
    %2609 = vmatpush1.msra.mxu0 %v2396
    %2610 = vmatprep.subr.mxu0 %v2440
    %2611 = vmatpush1.msra.mxu0 %v2437
    %2612 = vmatprep.subr.mxu0 0.0
    %2613 = vmatpush1.msra.mxu0 0.0
    %2614 = vmatprep.subr.mxu0 0.0
    %2615 = vmatpush1.msra.mxu0 0.0
    %2616 = vmatprep.subr.mxu0 0.0
    %2617 = vmatpush1.msra.mxu0 0.0
    %2618 = vmatprep.subr.mxu0 0.0
    %2619 = vmatpush1.msra.mxu0 0.0
    %2620 = vmatprep.subr.mxu0 0.0
    %2621 = vmatpush1.msra.mxu0 0.0
    %2622 = vmatprep.subr.mxu0 0.0
    %2623 = vmatpush1.msra.mxu0 0.0
    %2624 = vmatprep.subr.mxu0 0.0
    %2625 = vmatpush1.msra.mxu0 0.0
    %2626 = vmatprep.subr.mxu0 0.0
    %2627 = vmatpush1.msra.mxu0 0.0
    %2628 = vmatprep.subr.mxu0 0.0
    %2629 = vmatpush1.msra.mxu0 0.0
    %2630 = vmatprep.subr.mxu0 0.0
    %2631 = vmatpush1.msra.mxu0 0.0
    %2632 = vmatprep.subr.mxu0 0.0
    %2633 = vmatpush1.msra.mxu0 0.0
    %2634 = vmatprep.subr.mxu0 0.0
    %2635 = vmatpush1.msra.mxu0 0.0
    %2636 = vmatprep.subr.mxu0 0.0
    %2637 = vmatpush1.msra.mxu0 0.0
    %2638 = vmatprep.subr.mxu0 0.0
    %2639 = vmatpush1.msra.mxu0 0.0
    %2640 = vmatprep.subr.mxu0 0.0
    %2641 = vmatpush1.msra.mxu0 0.0
    %2642 = vmatprep.subr.mxu0 0.0
    %2643 = vmatpush1.msra.mxu0 0.0
    %2644 = vmatprep.subr.mxu0 0.0
    %2645 = vmatpush1.msra.mxu0 0.0
    %2646 = vmatprep.subr.mxu0 0.0
    %2647 = vmatpush1.msra.mxu0 0.0
    %2648 = vmatprep.subr.mxu0 0.0
    %2649 = vmatpush1.msra.mxu0 0.0
    %2650 = vmatprep.subr.mxu0 0.0
    %2651 = vmatpush1.msra.mxu0 0.0
    %2652 = vmatprep.subr.mxu0 0.0
    %2653 = vmatpush1.msra.mxu0 0.0
    %2654 = vmatprep.subr.mxu0 0.0
    %2655 = vmatpush1.msra.mxu0 0.0
    %2656 = vmatprep.subr.mxu0 0.0
    %2657 = vmatpush1.msra.mxu0 0.0
    %2658 = vmatprep.subr.mxu0 0.0
    %2659 = vmatpush1.msra.mxu0 0.0
    %2660 = vmatprep.subr.mxu0 0.0
    %2661 = vmatpush1.msra.mxu0 0.0
    %2662 = vmatprep.subr.mxu0 0.0
    %2663 = vmatpush1.msra.mxu0 0.0
    %2664 = vmatprep.subr.mxu0 0.0
    %2665 = vmatpush1.msra.mxu0 0.0
    %2666 = vmatprep.subr.mxu0 0.0
    %2667 = vmatpush1.msra.mxu0 0.0
    %2668 = vmatprep.subr.mxu0 0.0
    %2669 = vmatpush1.msra.mxu0 0.0
    %2670 = vmatprep.subr.mxu0 0.0
    %2671 = vmatpush1.msra.mxu0 0.0
    %2672 = vmatprep.mubr.f32.mxu0 0.0
    %2673 = vmatmul.mubr.f32.gmra.mrb[0].mxu0 %v2422
    %v2674 = vpop.f32.mrb[0].mxu0
    %v2675 = vadd.f32 0.0, %v2674
    %v2676 = vpop.f32.mrb[0].mxu0
    %v2677 = vadd.f32 0.0, %v2676
    %2678 = vdwg.mxu0
    %2679 = vmatprep.subr.mxu0 %v2399
    %2680 = vmatpush1.msra.mxu0 %v2398
    %2681 = vmatprep.subr.mxu0 %v2446
    %2682 = vmatpush1.msra.mxu0 %v2443
    %2683 = vmatprep.subr.mxu0 0.0
    %2684 = vmatpush1.msra.mxu0 0.0
    %2685 = vmatprep.subr.mxu0 0.0
    %2686 = vmatpush1.msra.mxu0 0.0
    %2687 = vmatprep.subr.mxu0 0.0
    %2688 = vmatpush1.msra.mxu0 0.0
    %2689 = vmatprep.subr.mxu0 0.0
    %2690 = vmatpush1.msra.mxu0 0.0
    %2691 = vmatprep.subr.mxu0 0.0
    %2692 = vmatpush1.msra.mxu0 0.0
    %2693 = vmatprep.subr.mxu0 0.0
    %2694 = vmatpush1.msra.mxu0 0.0
    %2695 = vmatprep.subr.mxu0 0.0
    %2696 = vmatpush1.msra.mxu0 0.0
    %2697 = vmatprep.subr.mxu0 0.0
    %2698 = vmatpush1.msra.mxu0 0.0
    %2699 = vmatprep.subr.mxu0 0.0
    %2700 = vmatpush1.msra.mxu0 0.0
    %2701 = vmatprep.subr.mxu0 0.0
    %2702 = vmatpush1.msra.mxu0 0.0
    %2703 = vmatprep.subr.mxu0 0.0
    %2704 = vmatpush1.msra.mxu0 0.0
    %2705 = vmatprep.subr.mxu0 0.0
    %2706 = vmatpush1.msra.mxu0 0.0
    %2707 = vmatprep.subr.mxu0 0.0
    %2708 = vmatpush1.msra.mxu0 0.0
    %2709 = vmatprep.subr.mxu0 0.0
    %2710 = vmatpush1.msra.mxu0 0.0
    %2711 = vmatprep.subr.mxu0 0.0
    %2712 = vmatpush1.msra.mxu0 0.0
    %2713 = vmatprep.subr.mxu0 0.0
    %2714 = vmatpush1.msra.mxu0 0.0
    %2715 = vmatprep.subr.mxu0 0.0
    %2716 = vmatpush1.msra.mxu0 0.0
    %2717 = vmatprep.subr.mxu0 0.0
    %2718 = vmatpush1.msra.mxu0 0.0
    %2719 = vmatprep.subr.mxu0 0.0
    %2720 = vmatpush1.msra.mxu0 0.0
    %2721 = vmatprep.subr.mxu0 0.0
    %2722 = vmatpush1.msra.mxu0 0.0
    %2723 = vmatprep.subr.mxu0 0.0
    %2724 = vmatpush1.msra.mxu0 0.0
    %2725 = vmatprep.subr.mxu0 0.0
    %2726 = vmatpush1.msra.mxu0 0.0
    %2727 = vmatprep.subr.mxu0 0.0
    %2728 = vmatpush1.msra.mxu0 0.0
    %2729 = vmatprep.subr.mxu0 0.0
    %2730 = vmatpush1.msra.mxu0 0.0
    %2731 = vmatprep.subr.mxu0 0.0
    %2732 = vmatpush1.msra.mxu0 0.0
    %2733 = vmatprep.subr.mxu0 0.0
    %2734 = vmatpush1.msra.mxu0 0.0
    %2735 = vmatprep.subr.mxu0 0.0
    %2736 = vmatpush1.msra.mxu0 0.0
    %2737 = vmatprep.subr.mxu0 0.0
    %2738 = vmatpush1.msra.mxu0 0.0
    %2739 = vmatprep.subr.mxu0 0.0
    %2740 = vmatpush1.msra.mxu0 0.0
    %2741 = vmatprep.subr.mxu0 0.0
    %2742 = vmatpush1.msra.mxu0 0.0
    %2743 = vmatprep.mubr.f32.mxu0 0.0
    %2744 = vmatmul.mubr.f32.gmra.mrb[0].mxu0 %v2422
    %v2745 = vpop.f32.mrb[0].mxu0
    %v2746 = vadd.f32 0.0, %v2745
    %v2747 = vpop.f32.mrb[0].mxu0
    %v2748 = vadd.f32 0.0, %v2747
    %2749 = vdwg.mxu0
    %2750 = vmatprep.subr.mxu0 %v2401
    %2751 = vmatpush1.msra.mxu0 %v2400
    %2752 = vmatprep.subr.mxu0 %v2452
    %2753 = vmatpush1.msra.mxu0 %v2449
    %2754 = vmatprep.subr.mxu0 0.0
    %2755 = vmatpush1.msra.mxu0 0.0
    %2756 = vmatprep.subr.mxu0 0.0
    %2757 = vmatpush1.msra.mxu0 0.0
    %2758 = vmatprep.subr.mxu0 0.0
    %2759 = vmatpush1.msra.mxu0 0.0
    %2760 = vmatprep.subr.mxu0 0.0
    %2761 = vmatpush1.msra.mxu0 0.0
    %2762 = vmatprep.subr.mxu0 0.0
    %2763 = vmatpush1.msra.mxu0 0.0
    %2764 = vmatprep.subr.mxu0 0.0
    %2765 = vmatpush1.msra.mxu0 0.0
    %2766 = vmatprep.subr.mxu0 0.0
    %2767 = vmatpush1.msra.mxu0 0.0
    %2768 = vmatprep.subr.mxu0 0.0
    %2769 = vmatpush1.msra.mxu0 0.0
    %2770 = vmatprep.subr.mxu0 0.0
    %2771 = vmatpush1.msra.mxu0 0.0
    %2772 = vmatprep.subr.mxu0 0.0
    %2773 = vmatpush1.msra.mxu0 0.0
    %2774 = vmatprep.subr.mxu0 0.0
    %2775 = vmatpush1.msra.mxu0 0.0
    %2776 = vmatprep.subr.mxu0 0.0
    %2777 = vmatpush1.msra.mxu0 0.0
    %2778 = vmatprep.subr.mxu0 0.0
    %2779 = vmatpush1.msra.mxu0 0.0
    %2780 = vmatprep.subr.mxu0 0.0
    %2781 = vmatpush1.msra.mxu0 0.0
    %2782 = vmatprep.subr.mxu0 0.0
    %2783 = vmatpush1.msra.mxu0 0.0
    %2784 = vmatprep.subr.mxu0 0.0
    %2785 = vmatpush1.msra.mxu0 0.0
    %2786 = vmatprep.subr.mxu0 0.0
    %2787 = vmatpush1.msra.mxu0 0.0
    %2788 = vmatprep.subr.mxu0 0.0
    %2789 = vmatpush1.msra.mxu0 0.0
    %2790 = vmatprep.subr.mxu0 0.0
    %2791 = vmatpush1.msra.mxu0 0.0
    %2792 = vmatprep.subr.mxu0 0.0
    %2793 = vmatpush1.msra.mxu0 0.0
    %2794 = vmatprep.subr.mxu0 0.0
    %2795 = vmatpush1.msra.mxu0 0.0
    %2796 = vmatprep.subr.mxu0 0.0
    %2797 = vmatpush1.msra.mxu0 0.0
    %2798 = vmatprep.subr.mxu0 0.0
    %2799 = vmatpush1.msra.mxu0 0.0
    %2800 = vmatprep.subr.mxu0 0.0
    %2801 = vmatpush1.msra.mxu0 0.0
    %2802 = vmatprep.subr.mxu0 0.0
    %2803 = vmatpush1.msra.mxu0 0.0
    %2804 = vmatprep.subr.mxu0 0.0
    %2805 = vmatpush1.msra.mxu0 0.0
    %2806 = vmatprep.subr.mxu0 0.0
    %2807 = vmatpush1.msra.mxu0 0.0
    %2808 = vmatprep.subr.mxu0 0.0
    %2809 = vmatpush1.msra.mxu0 0.0
    %2810 = vmatprep.subr.mxu0 0.0
    %2811 = vmatpush1.msra.mxu0 0.0
    %2812 = vmatprep.subr.mxu0 0.0
    %2813 = vmatpush1.msra.mxu0 0.0
    %2814 = vmatprep.mubr.f32.mxu0 0.0
    %2815 = vmatmul.mubr.f32.gmra.mrb[0].mxu0 %v2422
    %v2816 = vpop.f32.mrb[0].mxu0
    %v2817 = vadd.f32 0.0, %v2816
    %v2818 = vpop.f32.mrb[0].mxu0
    %v2819 = vadd.f32 0.0, %v2818
    %2820 = vdwg.mxu0
    %2821 = vmatprep.subr.mxu0 %v2403
    %2822 = vmatpush1.msra.mxu0 %v2402
    %2823 = vmatprep.subr.mxu0 %v2458
    %2824 = vmatpush1.msra.mxu0 %v2455
    %2825 = vmatprep.subr.mxu0 0.0
    %2826 = vmatpush1.msra.mxu0 0.0
    %2827 = vmatprep.subr.mxu0 0.0
    %2828 = vmatpush1.msra.mxu0 0.0
    %2829 = vmatprep.subr.mxu0 0.0
    %2830 = vmatpush1.msra.mxu0 0.0
    %2831 = vmatprep.subr.mxu0 0.0
    %2832 = vmatpush1.msra.mxu0 0.0
    %2833 = vmatprep.subr.mxu0 0.0
    %2834 = vmatpush1.msra.mxu0 0.0
    %2835 = vmatprep.subr.mxu0 0.0
    %2836 = vmatpush1.msra.mxu0 0.0
    %2837 = vmatprep.subr.mxu0 0.0
    %2838 = vmatpush1.msra.mxu0 0.0
    %2839 = vmatprep.subr.mxu0 0.0
    %2840 = vmatpush1.msra.mxu0 0.0
    %2841 = vmatprep.subr.mxu0 0.0
    %2842 = vmatpush1.msra.mxu0 0.0
    %2843 = vmatprep.subr.mxu0 0.0
    %2844 = vmatpush1.msra.mxu0 0.0
    %2845 = vmatprep.subr.mxu0 0.0
    %2846 = vmatpush1.msra.mxu0 0.0
    %2847 = vmatprep.subr.mxu0 0.0
    %2848 = vmatpush1.msra.mxu0 0.0
    %2849 = vmatprep.subr.mxu0 0.0
    %2850 = vmatpush1.msra.mxu0 0.0
    %2851 = vmatprep.subr.mxu0 0.0
    %2852 = vmatpush1.msra.mxu0 0.0
    %2853 = vmatprep.subr.mxu0 0.0
    %2854 = vmatpush1.msra.mxu0 0.0
    %2855 = vmatprep.subr.mxu0 0.0
    %2856 = vmatpush1.msra.mxu0 0.0
    %2857 = vmatprep.subr.mxu0 0.0
    %2858 = vmatpush1.msra.mxu0 0.0
    %2859 = vmatprep.subr.mxu0 0.0
    %2860 = vmatpush1.msra.mxu0 0.0
    %2861 = vmatprep.subr.mxu0 0.0
    %2862 = vmatpush1.msra.mxu0 0.0
    %2863 = vmatprep.subr.mxu0 0.0
    %2864 = vmatpush1.msra.mxu0 0.0
    %2865 = vmatprep.subr.mxu0 0.0
    %2866 = vmatpush1.msra.mxu0 0.0
    %2867 = vmatprep.subr.mxu0 0.0
    %2868 = vmatpush1.msra.mxu0 0.0
    %2869 = vmatprep.subr.mxu0 0.0
    %2870 = vmatpush1.msra.mxu0 0.0
    %2871 = vmatprep.subr.mxu0 0.0
    %2872 = vmatpush1.msra.mxu0 0.0
    %2873 = vmatprep.subr.mxu0 0.0
    %2874 = vmatpush1.msra.mxu0 0.0
    %2875 = vmatprep.subr.mxu0 0.0
    %2876 = vmatpush1.msra.mxu0 0.0
    %2877 = vmatprep.subr.mxu0 0.0
    %2878 = vmatpush1.msra.mxu0 0.0
    %2879 = vmatprep.subr.mxu0 0.0
    %2880 = vmatpush1.msra.mxu0 0.0
    %2881 = vmatprep.subr.mxu0 0.0
    %2882 = vmatpush1.msra.mxu0 0.0
    %2883 = vmatprep.subr.mxu0 0.0
    %2884 = vmatpush1.msra.mxu0 0.0
    %2885 = vmatprep.mubr.f32.mxu0 0.0
    %2886 = vmatmul.mubr.f32.gmra.mrb[0].mxu0 %v2422
    %v2887 = vpop.f32.mrb[0].mxu0
    %v2888 = vadd.f32 0.0, %v2887
    %v2889 = vpop.f32.mrb[0].mxu0
    %v2890 = vadd.f32 0.0, %v2889
    %2891 = vdwg.mxu0
    %2892 = vmatprep.subr.mxu0 %v2405
    %2893 = vmatpush1.msra.mxu0 %v2404
    %2894 = vmatprep.subr.mxu0 %v2464
    %2895 = vmatpush1.msra.mxu0 %v2461
    %2896 = vmatprep.subr.mxu0 0.0
    %2897 = vmatpush1.msra.mxu0 0.0
    %2898 = vmatprep.subr.mxu0 0.0
    %2899 = vmatpush1.msra.mxu0 0.0
    %2900 = vmatprep.subr.mxu0 0.0
    %2901 = vmatpush1.msra.mxu0 0.0
    %2902 = vmatprep.subr.mxu0 0.0
    %2903 = vmatpush1.msra.mxu0 0.0
    %2904 = vmatprep.subr.mxu0 0.0
    %2905 = vmatpush1.msra.mxu0 0.0
    %2906 = vmatprep.subr.mxu0 0.0
    %2907 = vmatpush1.msra.mxu0 0.0
    %2908 = vmatprep.subr.mxu0 0.0
    %2909 = vmatpush1.msra.mxu0 0.0
    %2910 = vmatprep.subr.mxu0 0.0
    %2911 = vmatpush1.msra.mxu0 0.0
    %2912 = vmatprep.subr.mxu0 0.0
    %2913 = vmatpush1.msra.mxu0 0.0
    %2914 = vmatprep.subr.mxu0 0.0
    %2915 = vmatpush1.msra.mxu0 0.0
    %2916 = vmatprep.subr.mxu0 0.0
    %2917 = vmatpush1.msra.mxu0 0.0
    %2918 = vmatprep.subr.mxu0 0.0
    %2919 = vmatpush1.msra.mxu0 0.0
    %2920 = vmatprep.subr.mxu0 0.0
    %2921 = vmatpush1.msra.mxu0 0.0
    %2922 = vmatprep.subr.mxu0 0.0
    %2923 = vmatpush1.msra.mxu0 0.0
    %2924 = vmatprep.subr.mxu0 0.0
    %2925 = vmatpush1.msra.mxu0 0.0
    %2926 = vmatprep.subr.mxu0 0.0
    %2927 = vmatpush1.msra.mxu0 0.0
    %2928 = vmatprep.subr.mxu0 0.0
    %2929 = vmatpush1.msra.mxu0 0.0
    %2930 = vmatprep.subr.mxu0 0.0
    %2931 = vmatpush1.msra.mxu0 0.0
    %2932 = vmatprep.subr.mxu0 0.0
    %2933 = vmatpush1.msra.mxu0 0.0
    %2934 = vmatprep.subr.mxu0 0.0
    %2935 = vmatpush1.msra.mxu0 0.0
    %2936 = vmatprep.subr.mxu0 0.0
    %2937 = vmatpush1.msra.mxu0 0.0
    %2938 = vmatprep.subr.mxu0 0.0
    %2939 = vmatpush1.msra.mxu0 0.0
    %2940 = vmatprep.subr.mxu0 0.0
    %2941 = vmatpush1.msra.mxu0 0.0
    %2942 = vmatprep.subr.mxu0 0.0
    %2943 = vmatpush1.msra.mxu0 0.0
    %2944 = vmatprep.subr.mxu0 0.0
    %2945 = vmatpush1.msra.mxu0 0.0
    %2946 = vmatprep.subr.mxu0 0.0
    %2947 = vmatpush1.msra.mxu0 0.0
    %2948 = vmatprep.subr.mxu0 0.0
    %2949 = vmatpush1.msra.mxu0 0.0
    %2950 = vmatprep.subr.mxu0 0.0
    %2951 = vmatpush1.msra.mxu0 0.0
    %2952 = vmatprep.subr.mxu0 0.0
    %2953 = vmatpush1.msra.mxu0 0.0
    %2954 = vmatprep.subr.mxu0 0.0
    %2955 = vmatpush1.msra.mxu0 0.0
    %2956 = vmatprep.mubr.f32.mxu0 0.0
    %2957 = vmatmul.mubr.f32.gmra.mrb[0].mxu0 %v2422
    %v2958 = vpop.f32.mrb[0].mxu0
    %v2959 = vadd.f32 0.0, %v2958
    %v2960 = vpop.f32.mrb[0].mxu0
    %v2961 = vadd.f32 0.0, %v2960
    %2962 = vdwg.mxu0
    %2963 = vst [vmem:[#allocation3] sm:$0xff] %v2533
    %2964 = vst [vmem:[#allocation3 + $0x8] sm:$0xff] %v2535
    %2965 = vst [vmem:[#allocation3 + $0x10] sm:$0xff] %v2604
    %2966 = vst [vmem:[#allocation3 + $0x18] sm:$0xff] %v2606
    %2967 = vst [vmem:[#allocation3 + $0x20] sm:$0xff] %v2675
    %2968 = vst [vmem:[#allocation3 + $0x28] sm:$0xff] %v2677
    %2969 = vst [vmem:[#allocation3 + $0x30] sm:$0xff] %v2746
    %2970 = vst [vmem:[#allocation3 + $0x38] sm:$0xff] %v2748
    %2971 = vst [vmem:[#allocation3 + $0x40] sm:$0xff] %v2817
    %2972 = vst [vmem:[#allocation3 + $0x48] sm:$0xff] %v2819
    %2973 = vst [vmem:[#allocation3 + $0x50] sm:$0xff] %v2888
    %2974 = vst [vmem:[#allocation3 + $0x58] sm:$0xff] %v2890
    %2975 = vst [vmem:[#allocation3 + $0x60] sm:$0xff] %v2959
    %2976 = vst [vmem:[#allocation3 + $0x68] sm:$0xff] %v2961
    %v2977 = vld [vmem:[#allocation2 + $0x8] sm:$0xff]
    %v2978 = vld [vmem:[#allocation2 + $0x10] sm:$0xff]
    %v2979 = vld [vmem:[#allocation2 + $0x18] sm:$0xff]
    %v2980 = vld [vmem:[#allocation2 + $0x20] sm:$0xff]
    %v2981 = vld [vmem:[#allocation2 + $0x28] sm:$0xff]
    %v2982 = vld [vmem:[#allocation2 + $0x30] sm:$0xff]
    %v2983 = vld [vmem:[#allocation2 + $0x38] sm:$0xff]
    %v2984 = vld [vmem:[#allocation2 + $0x40] sm:$0xff]
    %v2985 = vld [vmem:[#allocation2 + $0x48] sm:$0xff]
    %v2986 = vld [vmem:[#allocation2 + $0x50] sm:$0xff]
    %v2987 = vld [vmem:[#allocation2 + $0x58] sm:$0xff]
    %v2988 = vld [vmem:[#allocation2 + $0x60] sm:$0xff]
    %v2989 = vld [vmem:[#allocation2 + $0x68] sm:$0xff]
    %v2990 = vld [vmem:[#allocation2 + $0x70] sm:$0xff]
    %v2991 = vld [vmem:[#allocation2 + $0x88] sm:$0xf]
    %v2992 = vld [vmem:[#allocation2 + $0x90] sm:$0xf]
    %v2993 = vld [vmem:[#allocation2 + $0x98] sm:$0xf]
    %v2994 = vld [vmem:[#allocation2 + $0xa0] sm:$0xf]
    %v2995 = vld [vmem:[#allocation2 + $0xa8] sm:$0xf]
    %v2996 = vld [vmem:[#allocation2 + $0xb0] sm:$0xf]
    %v2997 = vld [vmem:[#allocation2 + $0xb8] sm:$0xf]
    %v2998 = vld [vmem:[#allocation2 + $0xc0] sm:$0xf]
    %v2999 = vld [vmem:[#allocation2 + $0xc8] sm:$0xf]
    %v3000 = vld [vmem:[#allocation2 + $0xd0] sm:$0xf]
    %v3001 = vld [vmem:[#allocation2 + $0xd8] sm:$0xf]
    %v3002 = vld [vmem:[#allocation2 + $0xe0] sm:$0xf]
    %v3003 = vld [vmem:[#allocation2 + $0xe8] sm:$0xf]
    %v3004 = vld [vmem:[#allocation2 + $0xf0] sm:$0xf]
    %v3005 = vld [vmem:[%s886] sm:$0xff]
    %v3007 = vsel %vm300, %v3005, 0
    %v3010 = vsel %vm304, %v2991, 0
    %v3013 = vsel %vm304, %v2992, 0
    %v3016 = vsel %vm304, %v2993, 0
    %v3019 = vsel %vm304, %v2994, 0
    %v3022 = vsel %vm304, %v2995, 0
    %v3025 = vsel %vm304, %v2996, 0
    %v3028 = vsel %vm304, %v2997, 0
    %v3031 = vsel %vm304, %v2998, 0
    %v3034 = vsel %vm304, %v2999, 0
    %v3037 = vsel %vm304, %v3000, 0
    %v3040 = vsel %vm304, %v3001, 0
    %v3043 = vsel %vm304, %v3002, 0
    %v3046 = vsel %vm304, %v3003, 0
    %v3049 = vsel %vm304, %v3004, 0
    %3051 = vmatprep.subr.mxu0 %v2978
    %3052 = vmatpush1.msra.mxu0 %v2977
    %3053 = vmatprep.subr.mxu0 %v3013
    %3054 = vmatpush1.msra.mxu0 %v3010
    %3055 = vmatprep.subr.mxu0 0.0
    %3056 = vmatpush1.msra.mxu0 0.0
    %3057 = vmatprep.subr.mxu0 0.0
    %3058 = vmatpush1.msra.mxu0 0.0
    %3059 = vmatprep.subr.mxu0 0.0
    %3060 = vmatpush1.msra.mxu0 0.0
    %3061 = vmatprep.subr.mxu0 0.0
    %3062 = vmatpush1.msra.mxu0 0.0
    %3063 = vmatprep.subr.mxu0 0.0
    %3064 = vmatpush1.msra.mxu0 0.0
    %3065 = vmatprep.subr.mxu0 0.0
    %3066 = vmatpush1.msra.mxu0 0.0
    %3067 = vmatprep.subr.mxu0 0.0
    %3068 = vmatpush1.msra.mxu0 0.0
    %3069 = vmatprep.subr.mxu0 0.0
    %3070 = vmatpush1.msra.mxu0 0.0
    %3071 = vmatprep.subr.mxu0 0.0
    %3072 = vmatpush1.msra.mxu0 0.0
    %3073 = vmatprep.subr.mxu0 0.0
    %3074 = vmatpush1.msra.mxu0 0.0
    %3075 = vmatprep.subr.mxu0 0.0
    %3076 = vmatpush1.msra.mxu0 0.0
    %3077 = vmatprep.subr.mxu0 0.0
    %3078 = vmatpush1.msra.mxu0 0.0
    %3079 = vmatprep.subr.mxu0 0.0
    %3080 = vmatpush1.msra.mxu0 0.0
    %3081 = vmatprep.subr.mxu0 0.0
    %3082 = vmatpush1.msra.mxu0 0.0
    %3083 = vmatprep.subr.mxu0 0.0
    %3084 = vmatpush1.msra.mxu0 0.0
    %3085 = vmatprep.subr.mxu0 0.0
    %3086 = vmatpush1.msra.mxu0 0.0
    %3087 = vmatprep.subr.mxu0 0.0
    %3088 = vmatpush1.msra.mxu0 0.0
    %3089 = vmatprep.subr.mxu0 0.0
    %3090 = vmatpush1.msra.mxu0 0.0
    %3091 = vmatprep.subr.mxu0 0.0
    %3092 = vmatpush1.msra.mxu0 0.0
    %3093 = vmatprep.subr.mxu0 0.0
    %3094 = vmatpush1.msra.mxu0 0.0
    %3095 = vmatprep.subr.mxu0 0.0
    %3096 = vmatpush1.msra.mxu0 0.0
    %3097 = vmatprep.subr.mxu0 0.0
    %3098 = vmatpush1.msra.mxu0 0.0
    %3099 = vmatprep.subr.mxu0 0.0
    %3100 = vmatpush1.msra.mxu0 0.0
    %3101 = vmatprep.subr.mxu0 0.0
    %3102 = vmatpush1.msra.mxu0 0.0
    %3103 = vmatprep.subr.mxu0 0.0
    %3104 = vmatpush1.msra.mxu0 0.0
    %3105 = vmatprep.subr.mxu0 0.0
    %3106 = vmatpush1.msra.mxu0 0.0
    %3107 = vmatprep.subr.mxu0 0.0
    %3108 = vmatpush1.msra.mxu0 0.0
    %3109 = vmatprep.subr.mxu0 0.0
    %3110 = vmatpush1.msra.mxu0 0.0
    %3111 = vmatprep.subr.mxu0 0.0
    %3112 = vmatpush1.msra.mxu0 0.0
    %3113 = vmatprep.subr.mxu0 0.0
    %3114 = vmatpush1.msra.mxu0 0.0
    %3115 = vmatprep.mubr.f32.mxu0 0.0
    %3116 = vmatmul.mubr.f32.gmra.mrb[0].mxu0 %v3007
    %v3117 = vpop.f32.mrb[0].mxu0
    %v3118 = vadd.f32 0.0, %v3117
    %v3119 = vpop.f32.mrb[0].mxu0
    %v3120 = vadd.f32 0.0, %v3119
    %3121 = vdwg.mxu0
    %3122 = vmatprep.subr.mxu0 %v2980
    %3123 = vmatpush1.msra.mxu0 %v2979
    %3124 = vmatprep.subr.mxu0 %v3019
    %3125 = vmatpush1.msra.mxu0 %v3016
    %3126 = vmatprep.subr.mxu0 0.0
    %3127 = vmatpush1.msra.mxu0 0.0
    %3128 = vmatprep.subr.mxu0 0.0
    %3129 = vmatpush1.msra.mxu0 0.0
    %3130 = vmatprep.subr.mxu0 0.0
    %3131 = vmatpush1.msra.mxu0 0.0
    %3132 = vmatprep.subr.mxu0 0.0
    %3133 = vmatpush1.msra.mxu0 0.0
    %3134 = vmatprep.subr.mxu0 0.0
    %3135 = vmatpush1.msra.mxu0 0.0
    %3136 = vmatprep.subr.mxu0 0.0
    %3137 = vmatpush1.msra.mxu0 0.0
    %3138 = vmatprep.subr.mxu0 0.0
    %3139 = vmatpush1.msra.mxu0 0.0
    %3140 = vmatprep.subr.mxu0 0.0
    %3141 = vmatpush1.msra.mxu0 0.0
    %3142 = vmatprep.subr.mxu0 0.0
    %3143 = vmatpush1.msra.mxu0 0.0
    %3144 = vmatprep.subr.mxu0 0.0
    %3145 = vmatpush1.msra.mxu0 0.0
    %3146 = vmatprep.subr.mxu0 0.0
    %3147 = vmatpush1.msra.mxu0 0.0
    %3148 = vmatprep.subr.mxu0 0.0
    %3149 = vmatpush1.msra.mxu0 0.0
    %3150 = vmatprep.subr.mxu0 0.0
    %3151 = vmatpush1.msra.mxu0 0.0
    %3152 = vmatprep.subr.mxu0 0.0
    %3153 = vmatpush1.msra.mxu0 0.0
    %3154 = vmatprep.subr.mxu0 0.0
    %3155 = vmatpush1.msra.mxu0 0.0
    %3156 = vmatprep.subr.mxu0 0.0
    %3157 = vmatpush1.msra.mxu0 0.0
    %3158 = vmatprep.subr.mxu0 0.0
    %3159 = vmatpush1.msra.mxu0 0.0
    %3160 = vmatprep.subr.mxu0 0.0
    %3161 = vmatpush1.msra.mxu0 0.0
    %3162 = vmatprep.subr.mxu0 0.0
    %3163 = vmatpush1.msra.mxu0 0.0
    %3164 = vmatprep.subr.mxu0 0.0
    %3165 = vmatpush1.msra.mxu0 0.0
    %3166 = vmatprep.subr.mxu0 0.0
    %3167 = vmatpush1.msra.mxu0 0.0
    %3168 = vmatprep.subr.mxu0 0.0
    %3169 = vmatpush1.msra.mxu0 0.0
    %3170 = vmatprep.subr.mxu0 0.0
    %3171 = vmatpush1.msra.mxu0 0.0
    %3172 = vmatprep.subr.mxu0 0.0
    %3173 = vmatpush1.msra.mxu0 0.0
    %3174 = vmatprep.subr.mxu0 0.0
    %3175 = vmatpush1.msra.mxu0 0.0
    %3176 = vmatprep.subr.mxu0 0.0
    %3177 = vmatpush1.msra.mxu0 0.0
    %3178 = vmatprep.subr.mxu0 0.0
    %3179 = vmatpush1.msra.mxu0 0.0
    %3180 = vmatprep.subr.mxu0 0.0
    %3181 = vmatpush1.msra.mxu0 0.0
    %3182 = vmatprep.subr.mxu0 0.0
    %3183 = vmatpush1.msra.mxu0 0.0
    %3184 = vmatprep.subr.mxu0 0.0
    %3185 = vmatpush1.msra.mxu0 0.0
    %3186 = vmatprep.mubr.f32.mxu0 0.0
    %3187 = vmatmul.mubr.f32.gmra.mrb[0].mxu0 %v3007
    %v3188 = vpop.f32.mrb[0].mxu0
    %v3189 = vadd.f32 0.0, %v3188
    %v3190 = vpop.f32.mrb[0].mxu0
    %v3191 = vadd.f32 0.0, %v3190
    %3192 = vdwg.mxu0
    %3193 = vmatprep.subr.mxu0 %v2982
    %3194 = vmatpush1.msra.mxu0 %v2981
    %3195 = vmatprep.subr.mxu0 %v3025
    %3196 = vmatpush1.msra.mxu0 %v3022
    %3197 = vmatprep.subr.mxu0 0.0
    %3198 = vmatpush1.msra.mxu0 0.0
    %3199 = vmatprep.subr.mxu0 0.0
    %3200 = vmatpush1.msra.mxu0 0.0
    %3201 = vmatprep.subr.mxu0 0.0
    %3202 = vmatpush1.msra.mxu0 0.0
    %3203 = vmatprep.subr.mxu0 0.0
    %3204 = vmatpush1.msra.mxu0 0.0
    %3205 = vmatprep.subr.mxu0 0.0
    %3206 = vmatpush1.msra.mxu0 0.0
    %3207 = vmatprep.subr.mxu0 0.0
    %3208 = vmatpush1.msra.mxu0 0.0
    %3209 = vmatprep.subr.mxu0 0.0
    %3210 = vmatpush1.msra.mxu0 0.0
    %3211 = vmatprep.subr.mxu0 0.0
    %3212 = vmatpush1.msra.mxu0 0.0
    %3213 = vmatprep.subr.mxu0 0.0
    %3214 = vmatpush1.msra.mxu0 0.0
    %3215 = vmatprep.subr.mxu0 0.0
    %3216 = vmatpush1.msra.mxu0 0.0
    %3217 = vmatprep.subr.mxu0 0.0
    %3218 = vmatpush1.msra.mxu0 0.0
    %3219 = vmatprep.subr.mxu0 0.0
    %3220 = vmatpush1.msra.mxu0 0.0
    %3221 = vmatprep.subr.mxu0 0.0
    %3222 = vmatpush1.msra.mxu0 0.0
    %3223 = vmatprep.subr.mxu0 0.0
    %3224 = vmatpush1.msra.mxu0 0.0
    %3225 = vmatprep.subr.mxu0 0.0
    %3226 = vmatpush1.msra.mxu0 0.0
    %3227 = vmatprep.subr.mxu0 0.0
    %3228 = vmatpush1.msra.mxu0 0.0
    %3229 = vmatprep.subr.mxu0 0.0
    %3230 = vmatpush1.msra.mxu0 0.0
    %3231 = vmatprep.subr.mxu0 0.0
    %3232 = vmatpush1.msra.mxu0 0.0
    %3233 = vmatprep.subr.mxu0 0.0
    %3234 = vmatpush1.msra.mxu0 0.0
    %3235 = vmatprep.subr.mxu0 0.0
    %3236 = vmatpush1.msra.mxu0 0.0
    %3237 = vmatprep.subr.mxu0 0.0
    %3238 = vmatpush1.msra.mxu0 0.0
    %3239 = vmatprep.subr.mxu0 0.0
    %3240 = vmatpush1.msra.mxu0 0.0
    %3241 = vmatprep.subr.mxu0 0.0
    %3242 = vmatpush1.msra.mxu0 0.0
    %3243 = vmatprep.subr.mxu0 0.0
    %3244 = vmatpush1.msra.mxu0 0.0
    %3245 = vmatprep.subr.mxu0 0.0
    %3246 = vmatpush1.msra.mxu0 0.0
    %3247 = vmatprep.subr.mxu0 0.0
    %3248 = vmatpush1.msra.mxu0 0.0
    %3249 = vmatprep.subr.mxu0 0.0
    %3250 = vmatpush1.msra.mxu0 0.0
    %3251 = vmatprep.subr.mxu0 0.0
    %3252 = vmatpush1.msra.mxu0 0.0
    %3253 = vmatprep.subr.mxu0 0.0
    %3254 = vmatpush1.msra.mxu0 0.0
    %3255 = vmatprep.subr.mxu0 0.0
    %3256 = vmatpush1.msra.mxu0 0.0
    %3257 = vmatprep.mubr.f32.mxu0 0.0
    %3258 = vmatmul.mubr.f32.gmra.mrb[0].mxu0 %v3007
    %v3259 = vpop.f32.mrb[0].mxu0
    %v3260 = vadd.f32 0.0, %v3259
    %v3261 = vpop.f32.mrb[0].mxu0
    %v3262 = vadd.f32 0.0, %v3261
    %3263 = vdwg.mxu0
    %3264 = vmatprep.subr.mxu0 %v2984
    %3265 = vmatpush1.msra.mxu0 %v2983
    %3266 = vmatprep.subr.mxu0 %v3031
    %3267 = vmatpush1.msra.mxu0 %v3028
    %3268 = vmatprep.subr.mxu0 0.0
    %3269 = vmatpush1.msra.mxu0 0.0
    %3270 = vmatprep.subr.mxu0 0.0
    %3271 = vmatpush1.msra.mxu0 0.0
    %3272 = vmatprep.subr.mxu0 0.0
    %3273 = vmatpush1.msra.mxu0 0.0
    %3274 = vmatprep.subr.mxu0 0.0
    %3275 = vmatpush1.msra.mxu0 0.0
    %3276 = vmatprep.subr.mxu0 0.0
    %3277 = vmatpush1.msra.mxu0 0.0
    %3278 = vmatprep.subr.mxu0 0.0
    %3279 = vmatpush1.msra.mxu0 0.0
    %3280 = vmatprep.subr.mxu0 0.0
    %3281 = vmatpush1.msra.mxu0 0.0
    %3282 = vmatprep.subr.mxu0 0.0
    %3283 = vmatpush1.msra.mxu0 0.0
    %3284 = vmatprep.subr.mxu0 0.0
    %3285 = vmatpush1.msra.mxu0 0.0
    %3286 = vmatprep.subr.mxu0 0.0
    %3287 = vmatpush1.msra.mxu0 0.0
    %3288 = vmatprep.subr.mxu0 0.0
    %3289 = vmatpush1.msra.mxu0 0.0
    %3290 = vmatprep.subr.mxu0 0.0
    %3291 = vmatpush1.msra.mxu0 0.0
    %3292 = vmatprep.subr.mxu0 0.0
    %3293 = vmatpush1.msra.mxu0 0.0
    %3294 = vmatprep.subr.mxu0 0.0
    %3295 = vmatpush1.msra.mxu0 0.0
    %3296 = vmatprep.subr.mxu0 0.0
    %3297 = vmatpush1.msra.mxu0 0.0
    %3298 = vmatprep.subr.mxu0 0.0
    %3299 = vmatpush1.msra.mxu0 0.0
    %3300 = vmatprep.subr.mxu0 0.0
    %3301 = vmatpush1.msra.mxu0 0.0
    %3302 = vmatprep.subr.mxu0 0.0
    %3303 = vmatpush1.msra.mxu0 0.0
    %3304 = vmatprep.subr.mxu0 0.0
    %3305 = vmatpush1.msra.mxu0 0.0
    %3306 = vmatprep.subr.mxu0 0.0
    %3307 = vmatpush1.msra.mxu0 0.0
    %3308 = vmatprep.subr.mxu0 0.0
    %3309 = vmatpush1.msra.mxu0 0.0
    %3310 = vmatprep.subr.mxu0 0.0
    %3311 = vmatpush1.msra.mxu0 0.0
    %3312 = vmatprep.subr.mxu0 0.0
    %3313 = vmatpush1.msra.mxu0 0.0
    %3314 = vmatprep.subr.mxu0 0.0
    %3315 = vmatpush1.msra.mxu0 0.0
    %3316 = vmatprep.subr.mxu0 0.0
    %3317 = vmatpush1.msra.mxu0 0.0
    %3318 = vmatprep.subr.mxu0 0.0
    %3319 = vmatpush1.msra.mxu0 0.0
    %3320 = vmatprep.subr.mxu0 0.0
    %3321 = vmatpush1.msra.mxu0 0.0
    %3322 = vmatprep.subr.mxu0 0.0
    %3323 = vmatpush1.msra.mxu0 0.0
    %3324 = vmatprep.subr.mxu0 0.0
    %3325 = vmatpush1.msra.mxu0 0.0
    %3326 = vmatprep.subr.mxu0 0.0
    %3327 = vmatpush1.msra.mxu0 0.0
    %3328 = vmatprep.mubr.f32.mxu0 0.0
    %3329 = vmatmul.mubr.f32.gmra.mrb[0].mxu0 %v3007
    %v3330 = vpop.f32.mrb[0].mxu0
    %v3331 = vadd.f32 0.0, %v3330
    %v3332 = vpop.f32.mrb[0].mxu0
    %v3333 = vadd.f32 0.0, %v3332
    %3334 = vdwg.mxu0
    %3335 = vmatprep.subr.mxu0 %v2986
    %3336 = vmatpush1.msra.mxu0 %v2985
    %3337 = vmatprep.subr.mxu0 %v3037
    %3338 = vmatpush1.msra.mxu0 %v3034
    %3339 = vmatprep.subr.mxu0 0.0
    %3340 = vmatpush1.msra.mxu0 0.0
    %3341 = vmatprep.subr.mxu0 0.0
    %3342 = vmatpush1.msra.mxu0 0.0
    %3343 = vmatprep.subr.mxu0 0.0
    %3344 = vmatpush1.msra.mxu0 0.0
    %3345 = vmatprep.subr.mxu0 0.0
    %3346 = vmatpush1.msra.mxu0 0.0
    %3347 = vmatprep.subr.mxu0 0.0
    %3348 = vmatpush1.msra.mxu0 0.0
    %3349 = vmatprep.subr.mxu0 0.0
    %3350 = vmatpush1.msra.mxu0 0.0
    %3351 = vmatprep.subr.mxu0 0.0
    %3352 = vmatpush1.msra.mxu0 0.0
    %3353 = vmatprep.subr.mxu0 0.0
    %3354 = vmatpush1.msra.mxu0 0.0
    %3355 = vmatprep.subr.mxu0 0.0
    %3356 = vmatpush1.msra.mxu0 0.0
    %3357 = vmatprep.subr.mxu0 0.0
    %3358 = vmatpush1.msra.mxu0 0.0
    %3359 = vmatprep.subr.mxu0 0.0
    %3360 = vmatpush1.msra.mxu0 0.0
    %3361 = vmatprep.subr.mxu0 0.0
    %3362 = vmatpush1.msra.mxu0 0.0
    %3363 = vmatprep.subr.mxu0 0.0
    %3364 = vmatpush1.msra.mxu0 0.0
    %3365 = vmatprep.subr.mxu0 0.0
    %3366 = vmatpush1.msra.mxu0 0.0
    %3367 = vmatprep.subr.mxu0 0.0
    %3368 = vmatpush1.msra.mxu0 0.0
    %3369 = vmatprep.subr.mxu0 0.0
    %3370 = vmatpush1.msra.mxu0 0.0
    %3371 = vmatprep.subr.mxu0 0.0
    %3372 = vmatpush1.msra.mxu0 0.0
    %3373 = vmatprep.subr.mxu0 0.0
    %3374 = vmatpush1.msra.mxu0 0.0
    %3375 = vmatprep.subr.mxu0 0.0
    %3376 = vmatpush1.msra.mxu0 0.0
    %3377 = vmatprep.subr.mxu0 0.0
    %3378 = vmatpush1.msra.mxu0 0.0
    %3379 = vmatprep.subr.mxu0 0.0
    %3380 = vmatpush1.msra.mxu0 0.0
    %3381 = vmatprep.subr.mxu0 0.0
    %3382 = vmatpush1.msra.mxu0 0.0
    %3383 = vmatprep.subr.mxu0 0.0
    %3384 = vmatpush1.msra.mxu0 0.0
    %3385 = vmatprep.subr.mxu0 0.0
    %3386 = vmatpush1.msra.mxu0 0.0
    %3387 = vmatprep.subr.mxu0 0.0
    %3388 = vmatpush1.msra.mxu0 0.0
    %3389 = vmatprep.subr.mxu0 0.0
    %3390 = vmatpush1.msra.mxu0 0.0
    %3391 = vmatprep.subr.mxu0 0.0
    %3392 = vmatpush1.msra.mxu0 0.0
    %3393 = vmatprep.subr.mxu0 0.0
    %3394 = vmatpush1.msra.mxu0 0.0
    %3395 = vmatprep.subr.mxu0 0.0
    %3396 = vmatpush1.msra.mxu0 0.0
    %3397 = vmatprep.subr.mxu0 0.0
    %3398 = vmatpush1.msra.mxu0 0.0
    %3399 = vmatprep.mubr.f32.mxu0 0.0
    %3400 = vmatmul.mubr.f32.gmra.mrb[0].mxu0 %v3007
    %v3401 = vpop.f32.mrb[0].mxu0
    %v3402 = vadd.f32 0.0, %v3401
    %v3403 = vpop.f32.mrb[0].mxu0
    %v3404 = vadd.f32 0.0, %v3403
    %3405 = vdwg.mxu0
    %3406 = vmatprep.subr.mxu0 %v2988
    %3407 = vmatpush1.msra.mxu0 %v2987
    %3408 = vmatprep.subr.mxu0 %v3043
    %3409 = vmatpush1.msra.mxu0 %v3040
    %3410 = vmatprep.subr.mxu0 0.0
    %3411 = vmatpush1.msra.mxu0 0.0
    %3412 = vmatprep.subr.mxu0 0.0
    %3413 = vmatpush1.msra.mxu0 0.0
    %3414 = vmatprep.subr.mxu0 0.0
    %3415 = vmatpush1.msra.mxu0 0.0
    %3416 = vmatprep.subr.mxu0 0.0
    %3417 = vmatpush1.msra.mxu0 0.0
    %3418 = vmatprep.subr.mxu0 0.0
    %3419 = vmatpush1.msra.mxu0 0.0
    %3420 = vmatprep.subr.mxu0 0.0
    %3421 = vmatpush1.msra.mxu0 0.0
    %3422 = vmatprep.subr.mxu0 0.0
    %3423 = vmatpush1.msra.mxu0 0.0
    %3424 = vmatprep.subr.mxu0 0.0
    %3425 = vmatpush1.msra.mxu0 0.0
    %3426 = vmatprep.subr.mxu0 0.0
    %3427 = vmatpush1.msra.mxu0 0.0
    %3428 = vmatprep.subr.mxu0 0.0
    %3429 = vmatpush1.msra.mxu0 0.0
    %3430 = vmatprep.subr.mxu0 0.0
    %3431 = vmatpush1.msra.mxu0 0.0
    %3432 = vmatprep.subr.mxu0 0.0
    %3433 = vmatpush1.msra.mxu0 0.0
    %3434 = vmatprep.subr.mxu0 0.0
    %3435 = vmatpush1.msra.mxu0 0.0
    %3436 = vmatprep.subr.mxu0 0.0
    %3437 = vmatpush1.msra.mxu0 0.0
    %3438 = vmatprep.subr.mxu0 0.0
    %3439 = vmatpush1.msra.mxu0 0.0
    %3440 = vmatprep.subr.mxu0 0.0
    %3441 = vmatpush1.msra.mxu0 0.0
    %3442 = vmatprep.subr.mxu0 0.0
    %3443 = vmatpush1.msra.mxu0 0.0
    %3444 = vmatprep.subr.mxu0 0.0
    %3445 = vmatpush1.msra.mxu0 0.0
    %3446 = vmatprep.subr.mxu0 0.0
    %3447 = vmatpush1.msra.mxu0 0.0
    %3448 = vmatprep.subr.mxu0 0.0
    %3449 = vmatpush1.msra.mxu0 0.0
    %3450 = vmatprep.subr.mxu0 0.0
    %3451 = vmatpush1.msra.mxu0 0.0
    %3452 = vmatprep.subr.mxu0 0.0
    %3453 = vmatpush1.msra.mxu0 0.0
    %3454 = vmatprep.subr.mxu0 0.0
    %3455 = vmatpush1.msra.mxu0 0.0
    %3456 = vmatprep.subr.mxu0 0.0
    %3457 = vmatpush1.msra.mxu0 0.0
    %3458 = vmatprep.subr.mxu0 0.0
    %3459 = vmatpush1.msra.mxu0 0.0
    %3460 = vmatprep.subr.mxu0 0.0
    %3461 = vmatpush1.msra.mxu0 0.0
    %3462 = vmatprep.subr.mxu0 0.0
    %3463 = vmatpush1.msra.mxu0 0.0
    %3464 = vmatprep.subr.mxu0 0.0
    %3465 = vmatpush1.msra.mxu0 0.0
    %3466 = vmatprep.subr.mxu0 0.0
    %3467 = vmatpush1.msra.mxu0 0.0
    %3468 = vmatprep.subr.mxu0 0.0
    %3469 = vmatpush1.msra.mxu0 0.0
    %3470 = vmatprep.mubr.f32.mxu0 0.0
    %3471 = vmatmul.mubr.f32.gmra.mrb[0].mxu0 %v3007
    %v3472 = vpop.f32.mrb[0].mxu0
    %v3473 = vadd.f32 0.0, %v3472
    %v3474 = vpop.f32.mrb[0].mxu0
    %v3475 = vadd.f32 0.0, %v3474
    %3476 = vdwg.mxu0
    %3477 = vmatprep.subr.mxu0 %v2990
    %3478 = vmatpush1.msra.mxu0 %v2989
    %3479 = vmatprep.subr.mxu0 %v3049
    %3480 = vmatpush1.msra.mxu0 %v3046
    %3481 = vmatprep.subr.mxu0 0.0
    %3482 = vmatpush1.msra.mxu0 0.0
    %3483 = vmatprep.subr.mxu0 0.0
    %3484 = vmatpush1.msra.mxu0 0.0
    %3485 = vmatprep.subr.mxu0 0.0
    %3486 = vmatpush1.msra.mxu0 0.0
    %3487 = vmatprep.subr.mxu0 0.0
    %3488 = vmatpush1.msra.mxu0 0.0
    %3489 = vmatprep.subr.mxu0 0.0
    %3490 = vmatpush1.msra.mxu0 0.0
    %3491 = vmatprep.subr.mxu0 0.0
    %3492 = vmatpush1.msra.mxu0 0.0
    %3493 = vmatprep.subr.mxu0 0.0
    %3494 = vmatpush1.msra.mxu0 0.0
    %3495 = vmatprep.subr.mxu0 0.0
    %3496 = vmatpush1.msra.mxu0 0.0
    %3497 = vmatprep.subr.mxu0 0.0
    %3498 = vmatpush1.msra.mxu0 0.0
    %3499 = vmatprep.subr.mxu0 0.0
    %3500 = vmatpush1.msra.mxu0 0.0
    %3501 = vmatprep.subr.mxu0 0.0
    %3502 = vmatpush1.msra.mxu0 0.0
    %3503 = vmatprep.subr.mxu0 0.0
    %3504 = vmatpush1.msra.mxu0 0.0
    %3505 = vmatprep.subr.mxu0 0.0
    %3506 = vmatpush1.msra.mxu0 0.0
    %3507 = vmatprep.subr.mxu0 0.0
    %3508 = vmatpush1.msra.mxu0 0.0
    %3509 = vmatprep.subr.mxu0 0.0
    %3510 = vmatpush1.msra.mxu0 0.0
    %3511 = vmatprep.subr.mxu0 0.0
    %3512 = vmatpush1.msra.mxu0 0.0
    %3513 = vmatprep.subr.mxu0 0.0
    %3514 = vmatpush1.msra.mxu0 0.0
    %3515 = vmatprep.subr.mxu0 0.0
    %3516 = vmatpush1.msra.mxu0 0.0
    %3517 = vmatprep.subr.mxu0 0.0
    %3518 = vmatpush1.msra.mxu0 0.0
    %3519 = vmatprep.subr.mxu0 0.0
    %3520 = vmatpush1.msra.mxu0 0.0
    %3521 = vmatprep.subr.mxu0 0.0
    %3522 = vmatpush1.msra.mxu0 0.0
    %3523 = vmatprep.subr.mxu0 0.0
    %3524 = vmatpush1.msra.mxu0 0.0
    %3525 = vmatprep.subr.mxu0 0.0
    %3526 = vmatpush1.msra.mxu0 0.0
    %3527 = vmatprep.subr.mxu0 0.0
    %3528 = vmatpush1.msra.mxu0 0.0
    %3529 = vmatprep.subr.mxu0 0.0
    %3530 = vmatpush1.msra.mxu0 0.0
    %3531 = vmatprep.subr.mxu0 0.0
    %3532 = vmatpush1.msra.mxu0 0.0
    %3533 = vmatprep.subr.mxu0 0.0
    %3534 = vmatpush1.msra.mxu0 0.0
    %3535 = vmatprep.subr.mxu0 0.0
    %3536 = vmatpush1.msra.mxu0 0.0
    %3537 = vmatprep.subr.mxu0 0.0
    %3538 = vmatpush1.msra.mxu0 0.0
    %3539 = vmatprep.subr.mxu0 0.0
    %3540 = vmatpush1.msra.mxu0 0.0
    %3541 = vmatprep.mubr.f32.mxu0 0.0
    %3542 = vmatmul.mubr.f32.gmra.mrb[0].mxu0 %v3007
    %v3543 = vpop.f32.mrb[0].mxu0
    %v3544 = vadd.f32 0.0, %v3543
    %v3545 = vpop.f32.mrb[0].mxu0
    %v3546 = vadd.f32 0.0, %v3545
    %3547 = vdwg.mxu0
    %v3548 = vld [vmem:[#allocation3] sm:$0xff]
    %v3549 = vld [vmem:[#allocation3 + $0x8] sm:$0xff]
    %v3550 = vld [vmem:[#allocation3 + $0x10] sm:$0xff]
    %v3551 = vld [vmem:[#allocation3 + $0x18] sm:$0xff]
    %v3552 = vld [vmem:[#allocation3 + $0x20] sm:$0xff]
    %v3553 = vld [vmem:[#allocation3 + $0x28] sm:$0xff]
    %v3554 = vld [vmem:[#allocation3 + $0x30] sm:$0xff]
    %v3555 = vld [vmem:[#allocation3 + $0x38] sm:$0xff]
    %v3556 = vld [vmem:[#allocation3 + $0x40] sm:$0xff]
    %v3557 = vld [vmem:[#allocation3 + $0x48] sm:$0xff]
    %v3558 = vld [vmem:[#allocation3 + $0x50] sm:$0xff]
    %v3559 = vld [vmem:[#allocation3 + $0x58] sm:$0xff]
    %v3560 = vld [vmem:[#allocation3 + $0x60] sm:$0xff]
    %v3561 = vld [vmem:[#allocation3 + $0x68] sm:$0xff]
    %v3562 = vadd.f32 %v3548, %v3118
    %v3563 = vadd.f32 %v3549, %v3120
    %v3564 = vadd.f32 %v3550, %v3189
    %v3565 = vadd.f32 %v3551, %v3191
    %v3566 = vadd.f32 %v3552, %v3260
    %v3567 = vadd.f32 %v3553, %v3262
    %v3568 = vadd.f32 %v3554, %v3331
    %v3569 = vadd.f32 %v3555, %v3333
    %v3570 = vadd.f32 %v3556, %v3402
    %v3571 = vadd.f32 %v3557, %v3404
    %v3572 = vadd.f32 %v3558, %v3473
    %v3573 = vadd.f32 %v3559, %v3475
    %v3574 = vadd.f32 %v3560, %v3544
    %v3575 = vadd.f32 %v3561, %v3546
    %3576 = vst [vmem:[#allocation3] sm:$0xff] %v3562
    %3577 = vst [vmem:[#allocation3 + $0x8] sm:$0xff] %v3563
    %3578 = vst [vmem:[#allocation3 + $0x10] sm:$0xff] %v3564
    %3579 = vst [vmem:[#allocation3 + $0x18] sm:$0xff] %v3565
    %3580 = vst [vmem:[#allocation3 + $0x20] sm:$0xff] %v3566
    %3581 = vst [vmem:[#allocation3 + $0x28] sm:$0xff] %v3567
    %3582 = vst [vmem:[#allocation3 + $0x30] sm:$0xff] %v3568
    %3583 = vst [vmem:[#allocation3 + $0x38] sm:$0xff] %v3569
    %3584 = vst [vmem:[#allocation3 + $0x40] sm:$0xff] %v3570
    %3585 = vst [vmem:[#allocation3 + $0x48] sm:$0xff] %v3571
    %3586 = vst [vmem:[#allocation3 + $0x50] sm:$0xff] %v3572
    %3587 = vst [vmem:[#allocation3 + $0x58] sm:$0xff] %v3573
    %3588 = vst [vmem:[#allocation3 + $0x60] sm:$0xff] %v3574
    %3589 = vst [vmem:[#allocation3 + $0x68] sm:$0xff] %v3575
    %v3590 = vld [vmem:[#allocation2 + $0x10] sm:$0xff]
    %v3591 = vld [vmem:[#allocation2 + $0x18] sm:$0xff]
    %v3592 = vld [vmem:[#allocation2 + $0x20] sm:$0xff]
    %v3593 = vld [vmem:[#allocation2 + $0x28] sm:$0xff]
    %v3594 = vld [vmem:[#allocation2 + $0x30] sm:$0xff]
    %v3595 = vld [vmem:[#allocation2 + $0x38] sm:$0xff]
    %v3596 = vld [vmem:[#allocation2 + $0x40] sm:$0xff]
    %v3597 = vld [vmem:[#allocation2 + $0x48] sm:$0xff]
    %v3598 = vld [vmem:[#allocation2 + $0x50] sm:$0xff]
    %v3599 = vld [vmem:[#allocation2 + $0x58] sm:$0xff]
    %v3600 = vld [vmem:[#allocation2 + $0x60] sm:$0xff]
    %v3601 = vld [vmem:[#allocation2 + $0x68] sm:$0xff]
    %v3602 = vld [vmem:[#allocation2 + $0x70] sm:$0xff]
    %v3603 = vld [vmem:[#allocation2 + $0x78] sm:$0xff]
    %v3604 = vld [vmem:[#allocation2 + $0x90] sm:$0xf]
    %v3605 = vld [vmem:[#allocation2 + $0x98] sm:$0xf]
    %v3606 = vld [vmem:[#allocation2 + $0xa0] sm:$0xf]
    %v3607 = vld [vmem:[#allocation2 + $0xa8] sm:$0xf]
    %v3608 = vld [vmem:[#allocation2 + $0xb0] sm:$0xf]
    %v3609 = vld [vmem:[#allocation2 + $0xb8] sm:$0xf]
    %v3610 = vld [vmem:[#allocation2 + $0xc0] sm:$0xf]
    %v3611 = vld [vmem:[#allocation2 + $0xc8] sm:$0xf]
    %v3612 = vld [vmem:[#allocation2 + $0xd0] sm:$0xf]
    %v3613 = vld [vmem:[#allocation2 + $0xd8] sm:$0xf]
    %v3614 = vld [vmem:[#allocation2 + $0xe0] sm:$0xf]
    %v3615 = vld [vmem:[#allocation2 + $0xe8] sm:$0xf]
    %v3616 = vld [vmem:[#allocation2 + $0xf0] sm:$0xf]
    %v3617 = vld [vmem:[#allocation2 + $0xf8] sm:$0xf]
    %v3618 = vld [vmem:[%s1500] sm:$0xff]
    %v3620 = vsel %vm300, %v3618, 0
    %v3623 = vsel %vm304, %v3604, 0
    %v3626 = vsel %vm304, %v3605, 0
    %v3629 = vsel %vm304, %v3606, 0
    %v3632 = vsel %vm304, %v3607, 0
    %v3635 = vsel %vm304, %v3608, 0
    %v3638 = vsel %vm304, %v3609, 0
    %v3641 = vsel %vm304, %v3610, 0
    %v3644 = vsel %vm304, %v3611, 0
    %v3647 = vsel %vm304, %v3612, 0
    %v3650 = vsel %vm304, %v3613, 0
    %v3653 = vsel %vm304, %v3614, 0
    %v3656 = vsel %vm304, %v3615, 0
    %v3659 = vsel %vm304, %v3616, 0
    %v3662 = vsel %vm304, %v3617, 0
    %3664 = vmatprep.subr.mxu0 %v3591
    %3665 = vmatpush1.msra.mxu0 %v3590
    %3666 = vmatprep.subr.mxu0 %v3626
    %3667 = vmatpush1.msra.mxu0 %v3623
    %3668 = vmatprep.subr.mxu0 0.0
    %3669 = vmatpush1.msra.mxu0 0.0
    %3670 = vmatprep.subr.mxu0 0.0
    %3671 = vmatpush1.msra.mxu0 0.0
    %3672 = vmatprep.subr.mxu0 0.0
    %3673 = vmatpush1.msra.mxu0 0.0
    %3674 = vmatprep.subr.mxu0 0.0
    %3675 = vmatpush1.msra.mxu0 0.0
    %3676 = vmatprep.subr.mxu0 0.0
    %3677 = vmatpush1.msra.mxu0 0.0
    %3678 = vmatprep.subr.mxu0 0.0
    %3679 = vmatpush1.msra.mxu0 0.0
    %3680 = vmatprep.subr.mxu0 0.0
    %3681 = vmatpush1.msra.mxu0 0.0
    %3682 = vmatprep.subr.mxu0 0.0
    %3683 = vmatpush1.msra.mxu0 0.0
    %3684 = vmatprep.subr.mxu0 0.0
    %3685 = vmatpush1.msra.mxu0 0.0
    %3686 = vmatprep.subr.mxu0 0.0
    %3687 = vmatpush1.msra.mxu0 0.0
    %3688 = vmatprep.subr.mxu0 0.0
    %3689 = vmatpush1.msra.mxu0 0.0
    %3690 = vmatprep.subr.mxu0 0.0
    %3691 = vmatpush1.msra.mxu0 0.0
    %3692 = vmatprep.subr.mxu0 0.0
    %3693 = vmatpush1.msra.mxu0 0.0
    %3694 = vmatprep.subr.mxu0 0.0
    %3695 = vmatpush1.msra.mxu0 0.0
    %3696 = vmatprep.subr.mxu0 0.0
    %3697 = vmatpush1.msra.mxu0 0.0
    %3698 = vmatprep.subr.mxu0 0.0
    %3699 = vmatpush1.msra.mxu0 0.0
    %3700 = vmatprep.subr.mxu0 0.0
    %3701 = vmatpush1.msra.mxu0 0.0
    %3702 = vmatprep.subr.mxu0 0.0
    %3703 = vmatpush1.msra.mxu0 0.0
    %3704 = vmatprep.subr.mxu0 0.0
    %3705 = vmatpush1.msra.mxu0 0.0
    %3706 = vmatprep.subr.mxu0 0.0
    %3707 = vmatpush1.msra.mxu0 0.0
    %3708 = vmatprep.subr.mxu0 0.0
    %3709 = vmatpush1.msra.mxu0 0.0
    %3710 = vmatprep.subr.mxu0 0.0
    %3711 = vmatpush1.msra.mxu0 0.0
    %3712 = vmatprep.subr.mxu0 0.0
    %3713 = vmatpush1.msra.mxu0 0.0
    %3714 = vmatprep.subr.mxu0 0.0
    %3715 = vmatpush1.msra.mxu0 0.0
    %3716 = vmatprep.subr.mxu0 0.0
    %3717 = vmatpush1.msra.mxu0 0.0
    %3718 = vmatprep.subr.mxu0 0.0
    %3719 = vmatpush1.msra.mxu0 0.0
    %3720 = vmatprep.subr.mxu0 0.0
    %3721 = vmatpush1.msra.mxu0 0.0
    %3722 = vmatprep.subr.mxu0 0.0
    %3723 = vmatpush1.msra.mxu0 0.0
    %3724 = vmatprep.subr.mxu0 0.0
    %3725 = vmatpush1.msra.mxu0 0.0
    %3726 = vmatprep.subr.mxu0 0.0
    %3727 = vmatpush1.msra.mxu0 0.0
    %3728 = vmatprep.mubr.f32.mxu0 0.0
    %3729 = vmatmul.mubr.f32.gmra.mrb[0].mxu0 %v3620
    %v3730 = vpop.f32.mrb[0].mxu0
    %v3731 = vadd.f32 0.0, %v3730
    %v3732 = vpop.f32.mrb[0].mxu0
    %v3733 = vadd.f32 0.0, %v3732
    %3734 = vdwg.mxu0
    %3735 = vmatprep.subr.mxu0 %v3593
    %3736 = vmatpush1.msra.mxu0 %v3592
    %3737 = vmatprep.subr.mxu0 %v3632
    %3738 = vmatpush1.msra.mxu0 %v3629
    %3739 = vmatprep.subr.mxu0 0.0
    %3740 = vmatpush1.msra.mxu0 0.0
    %3741 = vmatprep.subr.mxu0 0.0
    %3742 = vmatpush1.msra.mxu0 0.0
    %3743 = vmatprep.subr.mxu0 0.0
    %3744 = vmatpush1.msra.mxu0 0.0
    %3745 = vmatprep.subr.mxu0 0.0
    %3746 = vmatpush1.msra.mxu0 0.0
    %3747 = vmatprep.subr.mxu0 0.0
    %3748 = vmatpush1.msra.mxu0 0.0
    %3749 = vmatprep.subr.mxu0 0.0
    %3750 = vmatpush1.msra.mxu0 0.0
    %3751 = vmatprep.subr.mxu0 0.0
    %3752 = vmatpush1.msra.mxu0 0.0
    %3753 = vmatprep.subr.mxu0 0.0
    %3754 = vmatpush1.msra.mxu0 0.0
    %3755 = vmatprep.subr.mxu0 0.0
    %3756 = vmatpush1.msra.mxu0 0.0
    %3757 = vmatprep.subr.mxu0 0.0
    %3758 = vmatpush1.msra.mxu0 0.0
    %3759 = vmatprep.subr.mxu0 0.0
    %3760 = vmatpush1.msra.mxu0 0.0
    %3761 = vmatprep.subr.mxu0 0.0
    %3762 = vmatpush1.msra.mxu0 0.0
    %3763 = vmatprep.subr.mxu0 0.0
    %3764 = vmatpush1.msra.mxu0 0.0
    %3765 = vmatprep.subr.mxu0 0.0
    %3766 = vmatpush1.msra.mxu0 0.0
    %3767 = vmatprep.subr.mxu0 0.0
    %3768 = vmatpush1.msra.mxu0 0.0
    %3769 = vmatprep.subr.mxu0 0.0
    %3770 = vmatpush1.msra.mxu0 0.0
    %3771 = vmatprep.subr.mxu0 0.0
    %3772 = vmatpush1.msra.mxu0 0.0
    %3773 = vmatprep.subr.mxu0 0.0
    %3774 = vmatpush1.msra.mxu0 0.0
    %3775 = vmatprep.subr.mxu0 0.0
    %3776 = vmatpush1.msra.mxu0 0.0
    %3777 = vmatprep.subr.mxu0 0.0
    %3778 = vmatpush1.msra.mxu0 0.0
    %3779 = vmatprep.subr.mxu0 0.0
    %3780 = vmatpush1.msra.mxu0 0.0
    %3781 = vmatprep.subr.mxu0 0.0
    %3782 = vmatpush1.msra.mxu0 0.0
    %3783 = vmatprep.subr.mxu0 0.0
    %3784 = vmatpush1.msra.mxu0 0.0
    %3785 = vmatprep.subr.mxu0 0.0
    %3786 = vmatpush1.msra.mxu0 0.0
    %3787 = vmatprep.subr.mxu0 0.0
    %3788 = vmatpush1.msra.mxu0 0.0
    %3789 = vmatprep.subr.mxu0 0.0
    %3790 = vmatpush1.msra.mxu0 0.0
    %3791 = vmatprep.subr.mxu0 0.0
    %3792 = vmatpush1.msra.mxu0 0.0
    %3793 = vmatprep.subr.mxu0 0.0
    %3794 = vmatpush1.msra.mxu0 0.0
    %3795 = vmatprep.subr.mxu0 0.0
    %3796 = vmatpush1.msra.mxu0 0.0
    %3797 = vmatprep.subr.mxu0 0.0
    %3798 = vmatpush1.msra.mxu0 0.0
    %3799 = vmatprep.mubr.f32.mxu0 0.0
    %3800 = vmatmul.mubr.f32.gmra.mrb[0].mxu0 %v3620
    %v3801 = vpop.f32.mrb[0].mxu0
    %v3802 = vadd.f32 0.0, %v3801
    %v3803 = vpop.f32.mrb[0].mxu0
    %v3804 = vadd.f32 0.0, %v3803
    %3805 = vdwg.mxu0
    %3806 = vmatprep.subr.mxu0 %v3595
    %3807 = vmatpush1.msra.mxu0 %v3594
    %3808 = vmatprep.subr.mxu0 %v3638
    %3809 = vmatpush1.msra.mxu0 %v3635
    %3810 = vmatprep.subr.mxu0 0.0
    %3811 = vmatpush1.msra.mxu0 0.0
    %3812 = vmatprep.subr.mxu0 0.0
    %3813 = vmatpush1.msra.mxu0 0.0
    %3814 = vmatprep.subr.mxu0 0.0
    %3815 = vmatpush1.msra.mxu0 0.0
    %3816 = vmatprep.subr.mxu0 0.0
    %3817 = vmatpush1.msra.mxu0 0.0
    %3818 = vmatprep.subr.mxu0 0.0
    %3819 = vmatpush1.msra.mxu0 0.0
    %3820 = vmatprep.subr.mxu0 0.0
    %3821 = vmatpush1.msra.mxu0 0.0
    %3822 = vmatprep.subr.mxu0 0.0
    %3823 = vmatpush1.msra.mxu0 0.0
    %3824 = vmatprep.subr.mxu0 0.0
    %3825 = vmatpush1.msra.mxu0 0.0
    %3826 = vmatprep.subr.mxu0 0.0
    %3827 = vmatpush1.msra.mxu0 0.0
    %3828 = vmatprep.subr.mxu0 0.0
    %3829 = vmatpush1.msra.mxu0 0.0
    %3830 = vmatprep.subr.mxu0 0.0
    %3831 = vmatpush1.msra.mxu0 0.0
    %3832 = vmatprep.subr.mxu0 0.0
    %3833 = vmatpush1.msra.mxu0 0.0
    %3834 = vmatprep.subr.mxu0 0.0
    %3835 = vmatpush1.msra.mxu0 0.0
    %3836 = vmatprep.subr.mxu0 0.0
    %3837 = vmatpush1.msra.mxu0 0.0
    %3838 = vmatprep.subr.mxu0 0.0
    %3839 = vmatpush1.msra.mxu0 0.0
    %3840 = vmatprep.subr.mxu0 0.0
    %3841 = vmatpush1.msra.mxu0 0.0
    %3842 = vmatprep.subr.mxu0 0.0
    %3843 = vmatpush1.msra.mxu0 0.0
    %3844 = vmatprep.subr.mxu0 0.0
    %3845 = vmatpush1.msra.mxu0 0.0
    %3846 = vmatprep.subr.mxu0 0.0
    %3847 = vmatpush1.msra.mxu0 0.0
    %3848 = vmatprep.subr.mxu0 0.0
    %3849 = vmatpush1.msra.mxu0 0.0
    %3850 = vmatprep.subr.mxu0 0.0
    %3851 = vmatpush1.msra.mxu0 0.0
    %3852 = vmatprep.subr.mxu0 0.0
    %3853 = vmatpush1.msra.mxu0 0.0
    %3854 = vmatprep.subr.mxu0 0.0
    %3855 = vmatpush1.msra.mxu0 0.0
    %3856 = vmatprep.subr.mxu0 0.0
    %3857 = vmatpush1.msra.mxu0 0.0
    %3858 = vmatprep.subr.mxu0 0.0
    %3859 = vmatpush1.msra.mxu0 0.0
    %3860 = vmatprep.subr.mxu0 0.0
    %3861 = vmatpush1.msra.mxu0 0.0
    %3862 = vmatprep.subr.mxu0 0.0
    %3863 = vmatpush1.msra.mxu0 0.0
    %3864 = vmatprep.subr.mxu0 0.0
    %3865 = vmatpush1.msra.mxu0 0.0
    %3866 = vmatprep.subr.mxu0 0.0
    %3867 = vmatpush1.msra.mxu0 0.0
    %3868 = vmatprep.subr.mxu0 0.0
    %3869 = vmatpush1.msra.mxu0 0.0
    %3870 = vmatprep.mubr.f32.mxu0 0.0
    %3871 = vmatmul.mubr.f32.gmra.mrb[0].mxu0 %v3620
    %v3872 = vpop.f32.mrb[0].mxu0
    %v3873 = vadd.f32 0.0, %v3872
    %v3874 = vpop.f32.mrb[0].mxu0
    %v3875 = vadd.f32 0.0, %v3874
    %3876 = vdwg.mxu0
    %3877 = vmatprep.subr.mxu0 %v3597
    %3878 = vmatpush1.msra.mxu0 %v3596
    %3879 = vmatprep.subr.mxu0 %v3644
    %3880 = vmatpush1.msra.mxu0 %v3641
    %3881 = vmatprep.subr.mxu0 0.0
    %3882 = vmatpush1.msra.mxu0 0.0
    %3883 = vmatprep.subr.mxu0 0.0
    %3884 = vmatpush1.msra.mxu0 0.0
    %3885 = vmatprep.subr.mxu0 0.0
    %3886 = vmatpush1.msra.mxu0 0.0
    %3887 = vmatprep.subr.mxu0 0.0
    %3888 = vmatpush1.msra.mxu0 0.0
    %3889 = vmatprep.subr.mxu0 0.0
    %3890 = vmatpush1.msra.mxu0 0.0
    %3891 = vmatprep.subr.mxu0 0.0
    %3892 = vmatpush1.msra.mxu0 0.0
    %3893 = vmatprep.subr.mxu0 0.0
    %3894 = vmatpush1.msra.mxu0 0.0
    %3895 = vmatprep.subr.mxu0 0.0
    %3896 = vmatpush1.msra.mxu0 0.0
    %3897 = vmatprep.subr.mxu0 0.0
    %3898 = vmatpush1.msra.mxu0 0.0
    %3899 = vmatprep.subr.mxu0 0.0
    %3900 = vmatpush1.msra.mxu0 0.0
    %3901 = vmatprep.subr.mxu0 0.0
    %3902 = vmatpush1.msra.mxu0 0.0
    %3903 = vmatprep.subr.mxu0 0.0
    %3904 = vmatpush1.msra.mxu0 0.0
    %3905 = vmatprep.subr.mxu0 0.0
    %3906 = vmatpush1.msra.mxu0 0.0
    %3907 = vmatprep.subr.mxu0 0.0
    %3908 = vmatpush1.msra.mxu0 0.0
    %3909 = vmatprep.subr.mxu0 0.0
    %3910 = vmatpush1.msra.mxu0 0.0
    %3911 = vmatprep.subr.mxu0 0.0
    %3912 = vmatpush1.msra.mxu0 0.0
    %3913 = vmatprep.subr.mxu0 0.0
    %3914 = vmatpush1.msra.mxu0 0.0
    %3915 = vmatprep.subr.mxu0 0.0
    %3916 = vmatpush1.msra.mxu0 0.0
    %3917 = vmatprep.subr.mxu0 0.0
    %3918 = vmatpush1.msra.mxu0 0.0
    %3919 = vmatprep.subr.mxu0 0.0
    %3920 = vmatpush1.msra.mxu0 0.0
    %3921 = vmatprep.subr.mxu0 0.0
    %3922 = vmatpush1.msra.mxu0 0.0
    %3923 = vmatprep.subr.mxu0 0.0
    %3924 = vmatpush1.msra.mxu0 0.0
    %3925 = vmatprep.subr.mxu0 0.0
    %3926 = vmatpush1.msra.mxu0 0.0
    %3927 = vmatprep.subr.mxu0 0.0
    %3928 = vmatpush1.msra.mxu0 0.0
    %3929 = vmatprep.subr.mxu0 0.0
    %3930 = vmatpush1.msra.mxu0 0.0
    %3931 = vmatprep.subr.mxu0 0.0
    %3932 = vmatpush1.msra.mxu0 0.0
    %3933 = vmatprep.subr.mxu0 0.0
    %3934 = vmatpush1.msra.mxu0 0.0
    %3935 = vmatprep.subr.mxu0 0.0
    %3936 = vmatpush1.msra.mxu0 0.0
    %3937 = vmatprep.subr.mxu0 0.0
    %3938 = vmatpush1.msra.mxu0 0.0
    %3939 = vmatprep.subr.mxu0 0.0
    %3940 = vmatpush1.msra.mxu0 0.0
    %3941 = vmatprep.mubr.f32.mxu0 0.0
    %3942 = vmatmul.mubr.f32.gmra.mrb[0].mxu0 %v3620
    %v3943 = vpop.f32.mrb[0].mxu0
    %v3944 = vadd.f32 0.0, %v3943
    %v3945 = vpop.f32.mrb[0].mxu0
    %v3946 = vadd.f32 0.0, %v3945
    %3947 = vdwg.mxu0
    %3948 = vmatprep.subr.mxu0 %v3599
    %3949 = vmatpush1.msra.mxu0 %v3598
    %3950 = vmatprep.subr.mxu0 %v3650
    %3951 = vmatpush1.msra.mxu0 %v3647
    %3952 = vmatprep.subr.mxu0 0.0
    %3953 = vmatpush1.msra.mxu0 0.0
    %3954 = vmatprep.subr.mxu0 0.0
    %3955 = vmatpush1.msra.mxu0 0.0
    %3956 = vmatprep.subr.mxu0 0.0
    %3957 = vmatpush1.msra.mxu0 0.0
    %3958 = vmatprep.subr.mxu0 0.0
    %3959 = vmatpush1.msra.mxu0 0.0
    %3960 = vmatprep.subr.mxu0 0.0
    %3961 = vmatpush1.msra.mxu0 0.0
    %3962 = vmatprep.subr.mxu0 0.0
    %3963 = vmatpush1.msra.mxu0 0.0
    %3964 = vmatprep.subr.mxu0 0.0
    %3965 = vmatpush1.msra.mxu0 0.0
    %3966 = vmatprep.subr.mxu0 0.0
    %3967 = vmatpush1.msra.mxu0 0.0
    %3968 = vmatprep.subr.mxu0 0.0
    %3969 = vmatpush1.msra.mxu0 0.0
    %3970 = vmatprep.subr.mxu0 0.0
    %3971 = vmatpush1.msra.mxu0 0.0
    %3972 = vmatprep.subr.mxu0 0.0
    %3973 = vmatpush1.msra.mxu0 0.0
    %3974 = vmatprep.subr.mxu0 0.0
    %3975 = vmatpush1.msra.mxu0 0.0
    %3976 = vmatprep.subr.mxu0 0.0
    %3977 = vmatpush1.msra.mxu0 0.0
    %3978 = vmatprep.subr.mxu0 0.0
    %3979 = vmatpush1.msra.mxu0 0.0
    %3980 = vmatprep.subr.mxu0 0.0
    %3981 = vmatpush1.msra.mxu0 0.0
    %3982 = vmatprep.subr.mxu0 0.0
    %3983 = vmatpush1.msra.mxu0 0.0
    %3984 = vmatprep.subr.mxu0 0.0
    %3985 = vmatpush1.msra.mxu0 0.0
    %3986 = vmatprep.subr.mxu0 0.0
    %3987 = vmatpush1.msra.mxu0 0.0
    %3988 = vmatprep.subr.mxu0 0.0
    %3989 = vmatpush1.msra.mxu0 0.0
    %3990 = vmatprep.subr.mxu0 0.0
    %3991 = vmatpush1.msra.mxu0 0.0
    %3992 = vmatprep.subr.mxu0 0.0
    %3993 = vmatpush1.msra.mxu0 0.0
    %3994 = vmatprep.subr.mxu0 0.0
    %3995 = vmatpush1.msra.mxu0 0.0
    %3996 = vmatprep.subr.mxu0 0.0
    %3997 = vmatpush1.msra.mxu0 0.0
    %3998 = vmatprep.subr.mxu0 0.0
    %3999 = vmatpush1.msra.mxu0 0.0
    %4000 = vmatprep.subr.mxu0 0.0
    %4001 = vmatpush1.msra.mxu0 0.0
    %4002 = vmatprep.subr.mxu0 0.0
    %4003 = vmatpush1.msra.mxu0 0.0
    %4004 = vmatprep.subr.mxu0 0.0
    %4005 = vmatpush1.msra.mxu0 0.0
    %4006 = vmatprep.subr.mxu0 0.0
    %4007 = vmatpush1.msra.mxu0 0.0
    %4008 = vmatprep.subr.mxu0 0.0
    %4009 = vmatpush1.msra.mxu0 0.0
    %4010 = vmatprep.subr.mxu0 0.0
    %4011 = vmatpush1.msra.mxu0 0.0
    %4012 = vmatprep.mubr.f32.mxu0 0.0
    %4013 = vmatmul.mubr.f32.gmra.mrb[0].mxu0 %v3620
    %v4014 = vpop.f32.mrb[0].mxu0
    %v4015 = vadd.f32 0.0, %v4014
    %v4016 = vpop.f32.mrb[0].mxu0
    %v4017 = vadd.f32 0.0, %v4016
    %4018 = vdwg.mxu0
    %4019 = vmatprep.subr.mxu0 %v3601
    %4020 = vmatpush1.msra.mxu0 %v3600
    %4021 = vmatprep.subr.mxu0 %v3656
    %4022 = vmatpush1.msra.mxu0 %v3653
    %4023 = vmatprep.subr.mxu0 0.0
    %4024 = vmatpush1.msra.mxu0 0.0
    %4025 = vmatprep.subr.mxu0 0.0
    %4026 = vmatpush1.msra.mxu0 0.0
    %4027 = vmatprep.subr.mxu0 0.0
    %4028 = vmatpush1.msra.mxu0 0.0
    %4029 = vmatprep.subr.mxu0 0.0
    %4030 = vmatpush1.msra.mxu0 0.0
    %4031 = vmatprep.subr.mxu0 0.0
    %4032 = vmatpush1.msra.mxu0 0.0
    %4033 = vmatprep.subr.mxu0 0.0
    %4034 = vmatpush1.msra.mxu0 0.0
    %4035 = vmatprep.subr.mxu0 0.0
    %4036 = vmatpush1.msra.mxu0 0.0
    %4037 = vmatprep.subr.mxu0 0.0
    %4038 = vmatpush1.msra.mxu0 0.0
    %4039 = vmatprep.subr.mxu0 0.0
    %4040 = vmatpush1.msra.mxu0 0.0
    %4041 = vmatprep.subr.mxu0 0.0
    %4042 = vmatpush1.msra.mxu0 0.0
    %4043 = vmatprep.subr.mxu0 0.0
    %4044 = vmatpush1.msra.mxu0 0.0
    %4045 = vmatprep.subr.mxu0 0.0
    %4046 = vmatpush1.msra.mxu0 0.0
    %4047 = vmatprep.subr.mxu0 0.0
    %4048 = vmatpush1.msra.mxu0 0.0
    %4049 = vmatprep.subr.mxu0 0.0
    %4050 = vmatpush1.msra.mxu0 0.0
    %4051 = vmatprep.subr.mxu0 0.0
    %4052 = vmatpush1.msra.mxu0 0.0
    %4053 = vmatprep.subr.mxu0 0.0
    %4054 = vmatpush1.msra.mxu0 0.0
    %4055 = vmatprep.subr.mxu0 0.0
    %4056 = vmatpush1.msra.mxu0 0.0
    %4057 = vmatprep.subr.mxu0 0.0
    %4058 = vmatpush1.msra.mxu0 0.0
    %4059 = vmatprep.subr.mxu0 0.0
    %4060 = vmatpush1.msra.mxu0 0.0
    %4061 = vmatprep.subr.mxu0 0.0
    %4062 = vmatpush1.msra.mxu0 0.0
    %4063 = vmatprep.subr.mxu0 0.0
    %4064 = vmatpush1.msra.mxu0 0.0
    %4065 = vmatprep.subr.mxu0 0.0
    %4066 = vmatpush1.msra.mxu0 0.0
    %4067 = vmatprep.subr.mxu0 0.0
    %4068 = vmatpush1.msra.mxu0 0.0
    %4069 = vmatprep.subr.mxu0 0.0
    %4070 = vmatpush1.msra.mxu0 0.0
    %4071 = vmatprep.subr.mxu0 0.0
    %4072 = vmatpush1.msra.mxu0 0.0
    %4073 = vmatprep.subr.mxu0 0.0
    %4074 = vmatpush1.msra.mxu0 0.0
    %4075 = vmatprep.subr.mxu0 0.0
    %4076 = vmatpush1.msra.mxu0 0.0
    %4077 = vmatprep.subr.mxu0 0.0
    %4078 = vmatpush1.msra.mxu0 0.0
    %4079 = vmatprep.subr.mxu0 0.0
    %4080 = vmatpush1.msra.mxu0 0.0
    %4081 = vmatprep.subr.mxu0 0.0
    %4082 = vmatpush1.msra.mxu0 0.0
    %4083 = vmatprep.mubr.f32.mxu0 0.0
    %4084 = vmatmul.mubr.f32.gmra.mrb[0].mxu0 %v3620
    %v4085 = vpop.f32.mrb[0].mxu0
    %v4086 = vadd.f32 0.0, %v4085
    %v4087 = vpop.f32.mrb[0].mxu0
    %v4088 = vadd.f32 0.0, %v4087
    %4089 = vdwg.mxu0
    %4090 = vmatprep.subr.mxu0 %v3603
    %4091 = vmatpush1.msra.mxu0 %v3602
    %4092 = vmatprep.subr.mxu0 %v3662
    %4093 = vmatpush1.msra.mxu0 %v3659
    %4094 = vmatprep.subr.mxu0 0.0
    %4095 = vmatpush1.msra.mxu0 0.0
    %4096 = vmatprep.subr.mxu0 0.0
    %4097 = vmatpush1.msra.mxu0 0.0
    %4098 = vmatprep.subr.mxu0 0.0
    %4099 = vmatpush1.msra.mxu0 0.0
    %4100 = vmatprep.subr.mxu0 0.0
    %4101 = vmatpush1.msra.mxu0 0.0
    %4102 = vmatprep.subr.mxu0 0.0
    %4103 = vmatpush1.msra.mxu0 0.0
    %4104 = vmatprep.subr.mxu0 0.0
    %4105 = vmatpush1.msra.mxu0 0.0
    %4106 = vmatprep.subr.mxu0 0.0
    %4107 = vmatpush1.msra.mxu0 0.0
    %4108 = vmatprep.subr.mxu0 0.0
    %4109 = vmatpush1.msra.mxu0 0.0
    %4110 = vmatprep.subr.mxu0 0.0
    %4111 = vmatpush1.msra.mxu0 0.0
    %4112 = vmatprep.subr.mxu0 0.0
    %4113 = vmatpush1.msra.mxu0 0.0
    %4114 = vmatprep.subr.mxu0 0.0
    %4115 = vmatpush1.msra.mxu0 0.0
    %4116 = vmatprep.subr.mxu0 0.0
    %4117 = vmatpush1.msra.mxu0 0.0
    %4118 = vmatprep.subr.mxu0 0.0
    %4119 = vmatpush1.msra.mxu0 0.0
    %4120 = vmatprep.subr.mxu0 0.0
    %4121 = vmatpush1.msra.mxu0 0.0
    %4122 = vmatprep.subr.mxu0 0.0
    %4123 = vmatpush1.msra.mxu0 0.0
    %4124 = vmatprep.subr.mxu0 0.0
    %4125 = vmatpush1.msra.mxu0 0.0
    %4126 = vmatprep.subr.mxu0 0.0
    %4127 = vmatpush1.msra.mxu0 0.0
    %4128 = vmatprep.subr.mxu0 0.0
    %4129 = vmatpush1.msra.mxu0 0.0
    %4130 = vmatprep.subr.mxu0 0.0
    %4131 = vmatpush1.msra.mxu0 0.0
    %4132 = vmatprep.subr.mxu0 0.0
    %4133 = vmatpush1.msra.mxu0 0.0
    %4134 = vmatprep.subr.mxu0 0.0
    %4135 = vmatpush1.msra.mxu0 0.0
    %4136 = vmatprep.subr.mxu0 0.0
    %4137 = vmatpush1.msra.mxu0 0.0
    %4138 = vmatprep.subr.mxu0 0.0
    %4139 = vmatpush1.msra.mxu0 0.0
    %4140 = vmatprep.subr.mxu0 0.0
    %4141 = vmatpush1.msra.mxu0 0.0
    %4142 = vmatprep.subr.mxu0 0.0
    %4143 = vmatpush1.msra.mxu0 0.0
    %4144 = vmatprep.subr.mxu0 0.0
    %4145 = vmatpush1.msra.mxu0 0.0
    %4146 = vmatprep.subr.mxu0 0.0
    %4147 = vmatpush1.msra.mxu0 0.0
    %4148 = vmatprep.subr.mxu0 0.0
    %4149 = vmatpush1.msra.mxu0 0.0
    %4150 = vmatprep.subr.mxu0 0.0
    %4151 = vmatpush1.msra.mxu0 0.0
    %4152 = vmatprep.subr.mxu0 0.0
    %4153 = vmatpush1.msra.mxu0 0.0
    %4154 = vmatprep.mubr.f32.mxu0 0.0
    %4155 = vmatmul.mubr.f32.gmra.mrb[0].mxu0 %v3620
    %v4156 = vpop.f32.mrb[0].mxu0
    %v4157 = vadd.f32 0.0, %v4156
    %v4158 = vpop.f32.mrb[0].mxu0
    %v4159 = vadd.f32 0.0, %v4158
    %4160 = vdwg.mxu0
    %v4161 = vld [vmem:[#allocation3] sm:$0xff]
    %v4162 = vld [vmem:[#allocation3 + $0x8] sm:$0xff]
    %v4163 = vld [vmem:[#allocation3 + $0x10] sm:$0xff]
    %v4164 = vld [vmem:[#allocation3 + $0x18] sm:$0xff]
    %v4165 = vld [vmem:[#allocation3 + $0x20] sm:$0xff]
    %v4166 = vld [vmem:[#allocation3 + $0x28] sm:$0xff]
    %v4167 = vld [vmem:[#allocation3 + $0x30] sm:$0xff]
    %v4168 = vld [vmem:[#allocation3 + $0x38] sm:$0xff]
    %v4169 = vld [vmem:[#allocation3 + $0x40] sm:$0xff]
    %v4170 = vld [vmem:[#allocation3 + $0x48] sm:$0xff]
    %v4171 = vld [vmem:[#allocation3 + $0x50] sm:$0xff]
    %v4172 = vld [vmem:[#allocation3 + $0x58] sm:$0xff]
    %v4173 = vld [vmem:[#allocation3 + $0x60] sm:$0xff]
    %v4174 = vld [vmem:[#allocation3 + $0x68] sm:$0xff]
    %v4175 = vadd.f32 %v4161, %v3731
    %v4176 = vadd.f32 %v4162, %v3733
    %v4177 = vadd.f32 %v4163, %v3802
    %v4178 = vadd.f32 %v4164, %v3804
    %v4179 = vadd.f32 %v4165, %v3873
    %v4180 = vadd.f32 %v4166, %v3875
    %v4181 = vadd.f32 %v4167, %v3944
    %v4182 = vadd.f32 %v4168, %v3946
    %v4183 = vadd.f32 %v4169, %v4015
    %v4184 = vadd.f32 %v4170, %v4017
    %v4185 = vadd.f32 %v4171, %v4086
    %v4186 = vadd.f32 %v4172, %v4088
    %v4187 = vadd.f32 %v4173, %v4157
    %v4188 = vadd.f32 %v4174, %v4159
    %4189 = vst [vmem:[#allocation3] sm:$0xff] %v4175
    %4190 = vst [vmem:[#allocation3 + $0x8] sm:$0xff] %v4176
    %4191 = vst [vmem:[#allocation3 + $0x10] sm:$0xff] %v4177
    %4192 = vst [vmem:[#allocation3 + $0x18] sm:$0xff] %v4178
    %4193 = vst [vmem:[#allocation3 + $0x20] sm:$0xff] %v4179
    %4194 = vst [vmem:[#allocation3 + $0x28] sm:$0xff] %v4180
    %4195 = vst [vmem:[#allocation3 + $0x30] sm:$0xff] %v4181
    %4196 = vst [vmem:[#allocation3 + $0x38] sm:$0xff] %v4182
    %4197 = vst [vmem:[#allocation3 + $0x40] sm:$0xff] %v4183
    %4198 = vst [vmem:[#allocation3 + $0x48] sm:$0xff] %v4184
    %4199 = vst [vmem:[#allocation3 + $0x50] sm:$0xff] %v4185
    %4200 = vst [vmem:[#allocation3 + $0x58] sm:$0xff] %v4186
    %4201 = vst [vmem:[#allocation3 + $0x60] sm:$0xff] %v4187
    %4202 = vst [vmem:[#allocation3 + $0x68] sm:$0xff] %v4188
    %v4203 = vld [vmem:[#allocation3] sm:$0xff]
    %v4204 = vld [vmem:[#allocation3 + $0x8] sm:$0xff]
    %v4205 = vld [vmem:[#allocation3 + $0x10] sm:$0xff]
    %v4206 = vld [vmem:[#allocation3 + $0x18] sm:$0xff]
    %v4207 = vld [vmem:[#allocation3 + $0x20] sm:$0xff]
    %v4208 = vld [vmem:[#allocation3 + $0x28] sm:$0xff]
    %v4209 = vld [vmem:[#allocation3 + $0x30] sm:$0xff]
    %v4210 = vld [vmem:[#allocation3 + $0x38] sm:$0xff]
    %v4211 = vld [vmem:[#allocation3 + $0x40] sm:$0xff]
    %v4212 = vld [vmem:[#allocation3 + $0x48] sm:$0xff]
    %v4213 = vld [vmem:[#allocation3 + $0x50] sm:$0xff]
    %v4214 = vld [vmem:[#allocation3 + $0x58] sm:$0xff]
    %v4215 = vld [vmem:[#allocation3 + $0x60] sm:$0xff]
    %v4216 = vld [vmem:[#allocation3 + $0x68] sm:$0xff]
    %v4217 = vld [vmem:[%s2] sm:$0xff]
    %4219 = vset.pattern.permute.xlu0 0
    %4220 = vperm.xlu0 %4219, %v4217
    %v4221 = vpop.permute.xlu0 %4220
    %v4223 = vmul.f32 %v4203, %v4221
    %v4224 = vmul.f32 %v4204, %v4221
    %v4225 = vmul.f32 %v4205, %v4221
    %v4226 = vmul.f32 %v4206, %v4221
    %v4227 = vmul.f32 %v4207, %v4221
    %v4228 = vmul.f32 %v4208, %v4221
    %v4229 = vmul.f32 %v4209, %v4221
    %v4230 = vmul.f32 %v4210, %v4221
    %v4231 = vmul.f32 %v4211, %v4221
    %v4232 = vmul.f32 %v4212, %v4221
    %v4233 = vmul.f32 %v4213, %v4221
    %v4234 = vmul.f32 %v4214, %v4221
    %v4235 = vmul.f32 %v4215, %v4221
    %v4236 = vmul.f32 %v4216, %v4221
    %v4237 = vld [vmem:[%s3] sm:$0xff]
    %4239 = vset.pattern.permute.xlu0 0
    %4240 = vperm.xlu0 %4239, %v4237
    %v4241 = vpop.permute.xlu0 %4240
    %v4243 = vadd.f32 %v4223, %v4241
    %v4244 = vadd.f32 %v4224, %v4241
    %v4245 = vadd.f32 %v4225, %v4241
    %v4246 = vadd.f32 %v4226, %v4241
    %v4247 = vadd.f32 %v4227, %v4241
    %v4248 = vadd.f32 %v4228, %v4241
    %v4249 = vadd.f32 %v4229, %v4241
    %v4250 = vadd.f32 %v4230, %v4241
    %v4251 = vadd.f32 %v4231, %v4241
    %v4252 = vadd.f32 %v4232, %v4241
    %v4253 = vadd.f32 %v4233, %v4241
    %v4254 = vadd.f32 %v4234, %v4241
    %v4255 = vadd.f32 %v4235, %v4241
    %v4256 = vadd.f32 %v4236, %v4241
    %v4257 = vmax.f32 %v4243, 0.0
    %v4258 = vmax.f32 %v4244, 0.0
    %v4259 = vmax.f32 %v4245, 0.0
    %v4260 = vmax.f32 %v4246, 0.0
    %v4261 = vmax.f32 %v4247, 0.0
    %v4262 = vmax.f32 %v4248, 0.0
    %v4263 = vmax.f32 %v4249, 0.0
    %v4264 = vmax.f32 %v4250, 0.0
    %v4265 = vmax.f32 %v4251, 0.0
    %v4266 = vmax.f32 %v4252, 0.0
    %v4267 = vmax.f32 %v4253, 0.0
    %v4268 = vmax.f32 %v4254, 0.0
    %v4269 = vmax.f32 %v4255, 0.0
    %v4270 = vmax.f32 %v4256, 0.0
    %s4271 = scalar_lea.vmem [#allocation9], 112
    %4272 = vst [vmem:[%s4271] sm:$0xff] %v4257
    %4273 = vst [vmem:[%s4271 + $0x8] sm:$0xff] %v4258
    %4274 = vst [vmem:[%s4271 + $0x10] sm:$0xff] %v4259
    %4275 = vst [vmem:[%s4271 + $0x18] sm:$0xff] %v4260
    %4276 = vst [vmem:[%s4271 + $0x20] sm:$0xff] %v4261
    %4277 = vst [vmem:[%s4271 + $0x28] sm:$0xff] %v4262
    %4278 = vst [vmem:[%s4271 + $0x30] sm:$0xff] %v4263
    %4279 = vst [vmem:[%s4271 + $0x38] sm:$0xff] %v4264
    %4280 = vst [vmem:[%s4271 + $0x40] sm:$0xff] %v4265
    %4281 = vst [vmem:[%s4271 + $0x48] sm:$0xff] %v4266
    %4282 = vst [vmem:[%s4271 + $0x50] sm:$0xff] %v4267
    %4283 = vst [vmem:[%s4271 + $0x58] sm:$0xff] %v4268
    %4284 = vst [vmem:[%s4271 + $0x60] sm:$0xff] %v4269
    %4285 = vst [vmem:[%s4271 + $0x68] sm:$0xff] %v4270
    // Predicated region
    $region26: #{tpu_custom_call.1} parent=1 // pred_check
      _
    $region27: #{tpu_custom_call.1} parent=1 // pred_check_branch
      %4287 = sbr.rel (0) target = $region29
    $region28: #{tpu_custom_call.1} parent=1 // pred_region
      %s4289 = ssub.s32 3584, 3584
      %4290 = vsyncadd [#allocation6], %s4289
      %s4291 = sshll.u32 [#allocation9], 4
      %s4292 = int_to_ptr.vmem [resolvable:$true] %s4291
      %4297 = dma.vmem_to_hbm [thread:$0]  %s4292, 3584, %s4, [#allocation6], 1792, 1792, 112
    $region29: #{tpu_custom_call.1} parent=1 // pred_fallthru
      _
    // Predicated region
    $region30: #{tpu_custom_call.1} parent=1 // pred_check
      _
    $region31: #{tpu_custom_call.1} parent=1 // pred_check_branch
      %4299 = sbr.rel (0) target = $region33
    $region32: #{tpu_custom_call.1} parent=1 // pred_region
      %4300 = dma.done [#allocation6], 3584
    $region33: #{tpu_custom_call.1} parent=1 // pred_fallthru
      _
    %4301 = vsyncpa [#allocation5], 1
    %4302 = vsyncpa [#allocation8], 1
    %4303 = vsyncpa [#allocation6], 1

</llo_original>
